<compile_context>
chip_gen: v7x
topology: tpu7x:2x2x1
jax: 0.10.0
libtpu: 0.0.40
codegen_flags: <defaults>
</compile_context>

<pallas_src>
import functools

import jax
import jax.numpy as jnp
import numpy as np
from jax.experimental import pallas as pl
from jax.experimental.pallas import tpu as pltpu

BN_EPS = 1e-5
VGG11_CFG = [64, 'M', 128, 'M', 256, 256, 'M', 512, 512, 'M', 512, 512, 'M']
VMEM_LIMIT_BYTES = 40 * 1024 * 1024  # worst case need is ~25 MiB; v7x has 64 MiB/TC


# ----------------------------------------------------------------------------
# Fused VGG stage: [conv3x3 + folded BN + ReLU] x {1,2}  ->  maxpool 2x2/2.
# The WHOLE batch is one grid step, so each stage's weights are fetched from
# HBM exactly once (and not duplicated per megacore TC).
# ----------------------------------------------------------------------------
def vgg_stage(x, convs, H, W):
    """x: (N, H*W, Cin0) f32, activations flattened row-major over (h, w),
    channels on the 128-lane axis.

    convs: list of (w, scale, bias, is3x3):
      is3x3=True : w (9, Cin, Cout) bf16  -> 3x3 conv, pad=1, stride=1
      is3x3=False: w (K, Cout)      bf16  -> plain matmul (im2col'd first layer)
      scale/bias: (1, Cout) f32, eval-mode BatchNorm folded with the conv bias.

    Applies conv+BN+ReLU for every entry, then a fused 2x2 maxpool.
    Returns (N, (H//2)*(W//2), Cout_last) f32.
    """
    N, P, Cin0 = x.shape
    assert P == H * W and H % 2 == 0 and W % 2 == 0
    Ho, Wo = H // 2, W // 2
    Po = Ho * Wo
    nconv = len(convs)
    is3 = [c[3] for c in convs]
    couts = [c[0].shape[-1] for c in convs]
    cins3 = [c[0].shape[1] if c[3] else 0 for c in convs]
    Cout = couts[-1]
    # Sublane-aligned image origin inside the pad buffers (>= W so the dy=0
    # taps stay in-bounds); for W in {32,16,8} all tap loads are 8-aligned.
    OFF = ((max(W, 8) + 7) // 8) * 8
    PADH = OFF + P + W  # rows touched by tap loads: [OFF - W, OFF + W + P)

    def kernel(*refs):
        x_ref = refs[0]
        o_ref = refs[1 + 3 * nconv]
        scratch = refs[2 + 3 * nconv:]
        pads = scratch[:-1]
        ys_ref = scratch[-1]

        # column index (w) of every flattened position; used to pre-zero the
        # out-of-image columns when writing the left/right shifted copies.
        col = jax.lax.broadcasted_iota(jnp.int32, (P, 1), 0) % W
        keep_l = col != (W - 1)  # stored row j feeds LEFT taps of outputs w=(j+1)%W
        keep_r = col != 0        # stored row j feeds RIGHT taps of outputs w=(j-1)%W

        # Zero every pad buffer's halo once; the image region is completely
        # rewritten for every image, so the zeros stay valid across the batch.
        pi = 0
        for ci in range(nconv):
            if is3[ci]:
                pads[pi][...] = jnp.zeros((3, PADH, cins3[ci]), jnp.float32)
                pi += 1

        for n in range(N):
            cur = x_ref[n]                       # (P, Cin) f32, whole image
            pi = 0
            for ci in range(nconv):
                w_ref = refs[1 + 3 * ci]
                s_ref = refs[2 + 3 * ci]
                b_ref = refs[3 + 3 * ci]
                if is3[ci]:
                    cout = couts[ci]
                    pr = pads[pi]
                    pi += 1
                    # Segments 0/1/2 hold the input pre-shifted for the
                    # dx = 0/1/2 filter taps (left/centre/right), with the
                    # image-border columns already zeroed, so the nine tap
                    # loads below are plain (aligned for W>=8) slices.
                    pr[1, pl.ds(OFF, P), :] = cur
                    pr[0, pl.ds(OFF + 1, P), :] = jnp.where(keep_l, cur, 0.0)
                    pr[2, pl.ds(OFF - 1, P), :] = jnp.where(keep_r, cur, 0.0)
                    acc = jnp.zeros((P, cout), jnp.float32)
                    for dy in range(3):
                        base = OFF + (dy - 1) * W
                        for dx in range(3):
                            lhs = pr[dx, pl.ds(base, P), :]
                            acc = acc + jnp.dot(
                                lhs.astype(jnp.bfloat16), w_ref[dy * 3 + dx],
                                preferred_element_type=jnp.float32)
                else:
                    acc = jnp.dot(cur.astype(jnp.bfloat16), w_ref[...],
                                  preferred_element_type=jnp.float32)
                # folded eval-mode BatchNorm + ReLU, in f32
                cur = jnp.maximum(acc * s_ref[...] + b_ref[...], 0.0)

            # Fused 2x2/2 maxpool: one whole-tile vertical pair-max, then just
            # two stride-2 gathers per pooled row (was four).
            ys_ref[...] = cur
            vm = jnp.maximum(ys_ref[pl.ds(0, P - W), :],
                             ys_ref[pl.ds(W, P - W), :])
            ys_ref[pl.ds(0, P - W), :] = vm
            for ho in range(Ho):
                r = 2 * ho * W
                e = ys_ref[pl.ds(r, Wo, stride=2), :]
                f = ys_ref[pl.ds(r + 1, Wo, stride=2), :]
                o_ref[n, pl.ds(ho * Wo, Wo), :] = jnp.maximum(e, f)

    in_specs = [pl.BlockSpec((N, P, Cin0), lambda i: (0, 0, 0))]
    inputs = [x]
    for (w, s, b, flag3) in convs:
        if flag3:
            in_specs.append(pl.BlockSpec(w.shape, lambda i: (0, 0, 0)))
        else:
            in_specs.append(pl.BlockSpec(w.shape, lambda i: (0, 0)))
        in_specs.append(pl.BlockSpec(s.shape, lambda i: (0, 0)))
        in_specs.append(pl.BlockSpec(b.shape, lambda i: (0, 0)))
        inputs += [w, s, b]

    scratch_shapes = [pltpu.VMEM((3, PADH, cins3[ci]), jnp.float32)
                      for ci in range(nconv) if is3[ci]]
    scratch_shapes.append(pltpu.VMEM((P, Cout), jnp.float32))

    return pl.pallas_call(
        kernel,
        out_shape=jax.ShapeDtypeStruct((N, Po, Cout), jnp.float32),
        grid_spec=pltpu.PrefetchScalarGridSpec(
            num_scalar_prefetch=0,
            grid=(1,),
            in_specs=in_specs,
            out_specs=pl.BlockSpec((N, Po, Cout), lambda i: (0, 0, 0)),
            scratch_shapes=scratch_shapes,
        ),
        compiler_params=pltpu.CompilerParams(
            dimension_semantics=("arbitrary",),
            vmem_limit_bytes=VMEM_LIMIT_BYTES),
    )(*inputs)


# ----------------------------------------------------------------------------
# Fused classifier: FC1(512->4096)+ReLU -> FC2(4096->4096)+ReLU -> FC3(->NO).
# One pallas_call; grid (nj, nk) over FC2 output-column / K blocks.  nj is a
# "parallel" axis so v7x splits the dominant FC2/FC3 weight stream across the
# two TensorCores (only the small FC1 weight is duplicated).  Returns per-j
# partial FC3 products; the caller sums over j and adds the FC3 bias.
# ----------------------------------------------------------------------------
def _classifier_kernel(x_ref, w1_ref, b1_ref, w2_ref, b2_ref, w3_ref, o_ref,
                       h1_ref, acc_ref, *, nk, tk):
    k = pl.program_id(1)

    @pl.when(k == 0)
    def _():
        h1 = jnp.dot(x_ref[...].astype(jnp.bfloat16), w1_ref[...],
                     preferred_element_type=jnp.float32)
        h1 = jnp.maximum(h1 + b1_ref[...], 0.0).astype(jnp.bfloat16)
        for kk in range(nk):
            h1_ref[kk] = h1[:, kk * tk:(kk + 1) * tk]
        acc_ref[...] = jnp.zeros_like(acc_ref)

    acc_ref[...] += jnp.dot(h1_ref[k], w2_ref[...],
                            preferred_element_type=jnp.float32)

    @pl.when(k == nk - 1)
    def _():
        h2 = jnp.maximum(acc_ref[...] + b2_ref[...], 0.0).astype(jnp.bfloat16)
        o_ref[0] = jnp.dot(h2, w3_ref[...], preferred_element_type=jnp.float32)


def fused_classifier(x, w1, b1, w2, b2, w3, tk=2048, tn=2048):
    # x: (M, 512) f32; w1: (512, 4096) bf16; b1: (1, 4096) f32;
    # w2: (4096, 4096) bf16; b2: (1, 4096) f32; w3: (4096, NO) bf16 (NO padded).
    M, K1 = x.shape
    K2, N2 = w2.shape
    NO = w3.shape[1]
    tk = min(tk, K2)
    tn = min(tn, N2)
    assert K2 % tk == 0 and N2 % tn == 0 and w3.shape[0] == N2
    nk, nj = K2 // tk, N2 // tn
    kern = functools.partial(_classifier_kernel, nk=nk, tk=tk)
    return pl.pallas_call(
        kern,
        out_shape=jax.ShapeDtypeStruct((nj, M, NO), jnp.float32),
        grid_spec=pltpu.PrefetchScalarGridSpec(
            num_scalar_prefetch=0,
            grid=(nj, nk),
            in_specs=[
                pl.BlockSpec((M, K1), lambda j, k: (0, 0)),
                pl.BlockSpec((K1, K2), lambda j, k: (0, 0)),
                pl.BlockSpec((1, K2), lambda j, k: (0, 0)),
                pl.BlockSpec((tk, tn), lambda j, k: (k, j)),
                pl.BlockSpec((1, tn), lambda j, k: (0, j)),
                pl.BlockSpec((tn, NO), lambda j, k: (j, 0)),
            ],
            out_specs=pl.BlockSpec((1, M, NO), lambda j, k: (j, 0, 0)),
            scratch_shapes=[pltpu.VMEM((nk, M, tk), jnp.bfloat16),
                            pltpu.VMEM((M, tn), jnp.float32)],
        ),
        compiler_params=pltpu.CompilerParams(
            dimension_semantics=("parallel", "arbitrary"),
            vmem_limit_bytes=VMEM_LIMIT_BYTES),
    )(x, w1, b1, w2, b2, w3)


# ----------------------------------------------------------------------------
# Parameter construction (deterministic, synthetic), kernel-side packing,
# forward pass, and a matched-precision XLA reference.
# ----------------------------------------------------------------------------
def init_params(key, cfg, in_ch, image_size, classes):
    feat_layers = []
    c, hw = in_ch, image_size
    for v in cfg:
        if v == 'M':
            hw //= 2
            feat_layers.append(('pool',))
            continue
        key, k1, k2, k3, k4, k5 = jax.random.split(key, 6)
        fan_in = 9 * c
        w = jax.random.normal(k1, (3, 3, c, v), jnp.float32) * (2.0 / fan_in) ** 0.5
        conv_b = 0.01 * jax.random.normal(k2, (v,), jnp.float32)
        gamma = 1.0 + 0.1 * jax.random.normal(k3, (v,), jnp.float32)
        beta = 0.1 * jax.random.normal(k4, (v,), jnp.float32)
        run_mean = 0.01 * jax.random.normal(k5, (v,), jnp.float32)
        run_var = jnp.ones((v,), jnp.float32)
        # eval-mode BatchNorm folded (conv bias included):
        scale = gamma / jnp.sqrt(run_var + BN_EPS)
        bias = beta + scale * (conv_b - run_mean)
        feat_layers.append(('conv', w, scale, bias))
        c = v
    flattened = c * hw * hw  # == 512 for image_size=32

    def lin_init(key, fin, fout):
        k1, k2 = jax.random.split(key)
        w = jax.random.normal(k1, (fin, fout), jnp.float32) * (2.0 / fin) ** 0.5
        b = 0.01 * jax.random.normal(k2, (fout,), jnp.float32)
        return w, b

    key, ka, kb, kc = jax.random.split(key, 4)
    cls_params = [lin_init(ka, flattened, 4096),
                  lin_init(kb, 4096, 4096),
                  lin_init(kc, 4096, classes)]
    return feat_layers, cls_params


def prepare_kernel_params(feat_layers, cls_params, image_size):
    """Group convs into pool-terminated stages; reshape / pad / cast weights."""
    stages, cur = [], []
    hw = image_size
    first = True
    for layer in feat_layers:
        if layer[0] == 'conv':
            _, w, s, b = layer
            cin, cout = w.shape[2], w.shape[3]
            s2 = s.reshape(1, cout).astype(jnp.float32)
            b2 = b.reshape(1, cout).astype(jnp.float32)
            if first:
                # layer 1 (Cin=3) consumed as an im2col matmul; K padded 27->32.
                kpad = ((9 * cin + 7) // 8) * 8
                wk = jnp.pad(w.reshape(9 * cin, cout),
                             ((0, kpad - 9 * cin), (0, 0))).astype(jnp.bfloat16)
                cur.append((wk, s2, b2, False))
                first = False
            else:
                wk = w.reshape(9, cin, cout).astype(jnp.bfloat16)
                cur.append((wk, s2, b2, True))
        else:
            stages.append(dict(H=hw, W=hw, convs=cur))
            cur = []
            hw //= 2
    assert not cur, "VGG cfg must end with a pool"

    (w1, b1), (w2, b2), (w3, b3) = cls_params
    classes = w3.shape[1]
    ncls = ((classes + 127) // 128) * 128  # lane-pad the classifier output
    cls_k = dict(
        w1=w1.astype(jnp.bfloat16),
        b1=b1.reshape(1, -1).astype(jnp.float32),
        w2=w2.astype(jnp.bfloat16),
        b2=b2.reshape(1, -1).astype(jnp.float32),
        w3=jnp.pad(w3, ((0, 0), (0, ncls - classes))).astype(jnp.bfloat16),
        b3=jnp.pad(b3, (0, ncls - classes)).astype(jnp.float32),
        classes=classes)
    return stages, cls_k


def im2col3x3(x, k_pad):
    # x: (N, H, W, C) -> (N, H*W, k_pad), patch channel order (dy, dx, c); this
    # matches w.reshape(9*Cin, Cout).  Only used for the tiny Cin=3 first layer.
    N, H, W, C = x.shape
    xp = jnp.pad(x, ((0, 0), (1, 1), (1, 1), (0, 0)))
    cols = [xp[:, dy:dy + H, dx:dx + W, :] for dy in range(3) for dx in range(3)]
    out = jnp.concatenate(cols, axis=-1).reshape(N, H * W, 9 * C)
    if k_pad > 9 * C:
        out = jnp.pad(out, ((0, 0), (0, 0), (0, k_pad - 9 * C)))
    return out


def cnn_forward(x_nchw, stages, cls_k):
    x = jnp.transpose(x_nchw, (0, 2, 3, 1)).astype(jnp.float32)  # NCHW -> NHWC
    n = x.shape[0]
    kpad = stages[0]['convs'][0][0].shape[0]
    x = im2col3x3(x, kpad)               # (N, H*W, 32) for the first-stage conv
    for st in stages:
        x = vgg_stage(x, st['convs'], st['H'], st['W'])
    # final spatial is 1x1 (32 -> 5 pools), so this equals torch's NCHW flatten
    x = x.reshape(n, -1)
    parts = fused_classifier(x, cls_k['w1'], cls_k['b1'],
                             cls_k['w2'], cls_k['b2'], cls_k['w3'])
    # TODO(synk): nn.Dropout() in train mode not implemented; eval mode => identity.
    logits = parts.sum(axis=0) + cls_k['b3'][None, :]
    return logits[:, :cls_k['classes']]


def cnn_reference(x_nchw, feat_layers, cls_params):
    # Pure-JAX (XLA) reference with the same bf16-quantized weights/activation
    # inputs and f32 accumulation, so the comparison measures kernel
    # correctness (not bf16 quantization of the model itself).
    hp = jax.lax.Precision.HIGHEST

    def q(a):
        return a.astype(jnp.bfloat16).astype(jnp.float32)

    x = jnp.transpose(x_nchw, (0, 2, 3, 1))
    for layer in feat_layers:
        if layer[0] == 'conv':
            _, w, s, b = layer
            y = jax.lax.conv_general_dilated(
                q(x), q(w), (1, 1), 'SAME',
                dimension_numbers=('NHWC', 'HWIO', 'NHWC'), precision=hp)
            x = jnp.maximum(y * s + b, 0.0)
        else:
            x = jax.lax.reduce_window(x, -jnp.inf, jax.lax.max,
                                      (1, 2, 2, 1), (1, 2, 2, 1), 'VALID')
    n = x.shape[0]
    x = jnp.transpose(x, (0, 3, 1, 2)).reshape(n, -1)
    for i, (w, b) in enumerate(cls_params):
        x = jnp.dot(q(x), q(w), precision=hp) + b
        if i < 2:
            x = jnp.maximum(x, 0.0)
    return x


if __name__ == "__main__":
    BATCH, IN_CH, IMAGE_SIZE, CLASSES = 2, 3, 32, 10

    key = jax.random.PRNGKey(0)
    key, kx = jax.random.split(key)
    x = jax.random.normal(kx, (BATCH, IN_CH, IMAGE_SIZE, IMAGE_SIZE), jnp.float32)

    feat_layers, cls_params = init_params(key, VGG11_CFG, IN_CH, IMAGE_SIZE, CLASSES)
    stages, cls_k = prepare_kernel_params(feat_layers, cls_params, IMAGE_SIZE)

    out = cnn_forward(x, stages, cls_k)
    out = jax.block_until_ready(out)
    assert out.shape == (BATCH, CLASSES), out.shape

    ref = jax.block_until_ready(cnn_reference(x, feat_layers, cls_params))
    rel_err = float(jnp.max(jnp.abs(out - ref)) / (jnp.max(jnp.abs(ref)) + 1e-6))
    assert np.isfinite(np.asarray(out)).all()
    assert rel_err < 2e-2, f"relative error too large: {rel_err}"

    print("KERNEL_OK")
</pallas_src>

<mosaic_0001>
module attributes {stable_mosaic.version = 11 : i64} {
  func.func @kernel(%arg0: i32, %arg1: memref<2x1024x32xf32, #tpu.memory_space<vmem>>, %arg2: memref<32x64xbf16, #tpu.memory_space<vmem>>, %arg3: memref<1x64xf32, #tpu.memory_space<vmem>>, %arg4: memref<1x64xf32, #tpu.memory_space<vmem>>, %arg5: memref<2x256x64xf32, #tpu.memory_space<vmem>>, %arg6: memref<1024x64xf32, #tpu.memory_space<vmem>>) attributes {dimension_semantics = [#tpu.dimension_semantics<arbitrary>], iteration_bounds = array<i64: 1>, scalar_prefetch = 0 : i64, scratch_operands = 1 : i64, tpu.core_type = #tpu.core_type<tc>, window_params = [{pipeline_mode = #tpu.pipeline_mode<synchronous>, transform_indices = @transform_0, window_bounds = array<i64: 2, 1024, 32>}, {pipeline_mode = #tpu.pipeline_mode<synchronous>, transform_indices = @transform_1, window_bounds = array<i64: 32, 64>}, {pipeline_mode = #tpu.pipeline_mode<synchronous>, transform_indices = @transform_2, window_bounds = array<i64: 1, 64>}, {pipeline_mode = #tpu.pipeline_mode<synchronous>, transform_indices = @transform_3, window_bounds = array<i64: 1, 64>}, {pipeline_mode = #tpu.pipeline_mode<synchronous>, transform_indices = @transform_4, window_bounds = array<i64: 2, 256, 64>}]} {
    %c0 = arith.constant 0 : index
    %c0_0 = arith.constant 0 : index
    %c0_1 = arith.constant 0 : index
    %0 = vector.load %arg1[%c0, %c0_0, %c0_1] : memref<2x1024x32xf32, #tpu.memory_space<vmem>>, vector<1x1024x32xf32>
    %1 = vector.shape_cast %0 : vector<1x1024x32xf32> to vector<1024x32xf32>
    %2 = arith.truncf %1 : vector<1024x32xf32> to vector<1024x32xbf16>
    %c0_2 = arith.constant 0 : index
    %c0_3 = arith.constant 0 : index
    %3 = vector.load %arg2[%c0_2, %c0_3] : memref<32x64xbf16, #tpu.memory_space<vmem>>, vector<32x64xbf16>
    %cst = arith.constant dense<0.000000e+00> : vector<1024x64xf32>
    %4 = tpu.matmul %2, %3, %cst {dimension_numbers = #tpu.dot_dimension_numbers<[1], [0], [0], [1], [0, 0, 1, 1], [], []>} : vector<1024x32xbf16>, vector<32x64xbf16>, vector<1024x64xf32> -> vector<1024x64xf32>
    %c0_4 = arith.constant 0 : index
    %c0_5 = arith.constant 0 : index
    %5 = vector.load %arg3[%c0_4, %c0_5] : memref<1x64xf32, #tpu.memory_space<vmem>>, vector<1x64xf32>
    %6 = vector.broadcast %5 : vector<1x64xf32> to vector<1024x64xf32>
    %7 = arith.mulf %4, %6 : vector<1024x64xf32>
    %c0_6 = arith.constant 0 : index
    %c0_7 = arith.constant 0 : index
    %8 = vector.load %arg4[%c0_6, %c0_7] : memref<1x64xf32, #tpu.memory_space<vmem>>, vector<1x64xf32>
    %9 = vector.broadcast %8 : vector<1x64xf32> to vector<1024x64xf32>
    %10 = arith.addf %7, %9 : vector<1024x64xf32>
    %cst_8 = arith.constant 0.000000e+00 : f32
    %11 = vector.broadcast %cst_8 : f32 to vector<1024x64xf32>
    %12 = arith.maximumf %10, %11 : vector<1024x64xf32>
    %c0_9 = arith.constant 0 : index
    %c0_10 = arith.constant 0 : index
    %13 = vector.load %arg6[%c0_9, %c0_10] : memref<1024x64xf32, #tpu.memory_space<vmem>>, vector<1024x64xf32>
    tpu.vector_store %arg6[%c0_9, %c0_10], %12 {strides = array<i32>} : memref<1024x64xf32, #tpu.memory_space<vmem>>, vector<1024x64xf32>,
    %c0_11 = arith.constant 0 : index
    %c0_12 = arith.constant 0 : index
    %14 = vector.load %arg6[%c0_11, %c0_12] : memref<1024x64xf32, #tpu.memory_space<vmem>>, vector<992x64xf32>
    %c32 = arith.constant 32 : index
    %c0_13 = arith.constant 0 : index
    %15 = vector.load %arg6[%c32, %c0_13] : memref<1024x64xf32, #tpu.memory_space<vmem>>, vector<992x64xf32>
    %16 = arith.maximumf %14, %15 : vector<992x64xf32>
    %c0_14 = arith.constant 0 : index
    %c0_15 = arith.constant 0 : index
    %17 = vector.load %arg6[%c0_14, %c0_15] : memref<1024x64xf32, #tpu.memory_space<vmem>>, vector<992x64xf32>
    tpu.vector_store %arg6[%c0_14, %c0_15], %16 {strides = array<i32>} : memref<1024x64xf32, #tpu.memory_space<vmem>>, vector<992x64xf32>,
    %c0_16 = arith.constant 0 : index
    %c0_17 = arith.constant 0 : index
    %18 = tpu.strided_load %arg6[%c0_16, %c0_17] {strides = array<i32: 2, 1>} : memref<1024x64xf32, #tpu.memory_space<vmem>>, vector<16x64xf32>
    %c1 = arith.constant 1 : index
    %c0_18 = arith.constant 0 : index
    %19 = tpu.strided_load %arg6[%c1, %c0_18] {strides = array<i32: 2, 1>} : memref<1024x64xf32, #tpu.memory_space<vmem>>, vector<16x64xf32>
    %20 = arith.maximumf %18, %19 : vector<16x64xf32>
    %c0_19 = arith.constant 0 : index
    %c0_20 = arith.constant 0 : index
    %c0_21 = arith.constant 0 : index
    %21 = vector.load %arg5[%c0_19, %c0_20, %c0_21] : memref<2x256x64xf32, #tpu.memory_space<vmem>>, vector<1x16x64xf32>
    %22 = vector.shape_cast %21 : vector<1x16x64xf32> to vector<16x64xf32>
    %23 = vector.shape_cast %20 : vector<16x64xf32> to vector<1x16x64xf32>
    tpu.vector_store %arg5[%c0_19, %c0_20, %c0_21], %23 {strides = array<i32>} : memref<2x256x64xf32, #tpu.memory_space<vmem>>, vector<1x16x64xf32>,
    %c64 = arith.constant 64 : index
    %c0_22 = arith.constant 0 : index
    %24 = tpu.strided_load %arg6[%c64, %c0_22] {strides = array<i32: 2, 1>} : memref<1024x64xf32, #tpu.memory_space<vmem>>, vector<16x64xf32>
    %c65 = arith.constant 65 : index
    %c0_23 = arith.constant 0 : index
    %25 = tpu.strided_load %arg6[%c65, %c0_23] {strides = array<i32: 2, 1>} : memref<1024x64xf32, #tpu.memory_space<vmem>>, vector<16x64xf32>
    %26 = arith.maximumf %24, %25 : vector<16x64xf32>
    %c0_24 = arith.constant 0 : index
    %c16 = arith.constant 16 : index
    %c0_25 = arith.constant 0 : index
    %27 = vector.load %arg5[%c0_24, %c16, %c0_25] : memref<2x256x64xf32, #tpu.memory_space<vmem>>, vector<1x16x64xf32>
    %28 = vector.shape_cast %27 : vector<1x16x64xf32> to vector<16x64xf32>
    %29 = vector.shape_cast %26 : vector<16x64xf32> to vector<1x16x64xf32>
    tpu.vector_store %arg5[%c0_24, %c16, %c0_25], %29 {strides = array<i32>} : memref<2x256x64xf32, #tpu.memory_space<vmem>>, vector<1x16x64xf32>,
    %c128 = arith.constant 128 : index
    %c0_26 = arith.constant 0 : index
    %30 = tpu.strided_load %arg6[%c128, %c0_26] {strides = array<i32: 2, 1>} : memref<1024x64xf32, #tpu.memory_space<vmem>>, vector<16x64xf32>
    %c129 = arith.constant 129 : index
    %c0_27 = arith.constant 0 : index
    %31 = tpu.strided_load %arg6[%c129, %c0_27] {strides = array<i32: 2, 1>} : memref<1024x64xf32, #tpu.memory_space<vmem>>, vector<16x64xf32>
    %32 = arith.maximumf %30, %31 : vector<16x64xf32>
    %c0_28 = arith.constant 0 : index
    %c32_29 = arith.constant 32 : index
    %c0_30 = arith.constant 0 : index
    %33 = vector.load %arg5[%c0_28, %c32_29, %c0_30] : memref<2x256x64xf32, #tpu.memory_space<vmem>>, vector<1x16x64xf32>
    %34 = vector.shape_cast %33 : vector<1x16x64xf32> to vector<16x64xf32>
    %35 = vector.shape_cast %32 : vector<16x64xf32> to vector<1x16x64xf32>
    tpu.vector_store %arg5[%c0_28, %c32_29, %c0_30], %35 {strides = array<i32>} : memref<2x256x64xf32, #tpu.memory_space<vmem>>, vector<1x16x64xf32>,
    %c192 = arith.constant 192 : index
    %c0_31 = arith.constant 0 : index
    %36 = tpu.strided_load %arg6[%c192, %c0_31] {strides = array<i32: 2, 1>} : memref<1024x64xf32, #tpu.memory_space<vmem>>, vector<16x64xf32>
    %c193 = arith.constant 193 : index
    %c0_32 = arith.constant 0 : index
    %37 = tpu.strided_load %arg6[%c193, %c0_32] {strides = array<i32: 2, 1>} : memref<1024x64xf32, #tpu.memory_space<vmem>>, vector<16x64xf32>
    %38 = arith.maximumf %36, %37 : vector<16x64xf32>
    %c0_33 = arith.constant 0 : index
    %c48 = arith.constant 48 : index
    %c0_34 = arith.constant 0 : index
    %39 = vector.load %arg5[%c0_33, %c48, %c0_34] : memref<2x256x64xf32, #tpu.memory_space<vmem>>, vector<1x16x64xf32>
    %40 = vector.shape_cast %39 : vector<1x16x64xf32> to vector<16x64xf32>
    %41 = vector.shape_cast %38 : vector<16x64xf32> to vector<1x16x64xf32>
    tpu.vector_store %arg5[%c0_33, %c48, %c0_34], %41 {strides = array<i32>} : memref<2x256x64xf32, #tpu.memory_space<vmem>>, vector<1x16x64xf32>,
    %c256 = arith.constant 256 : index
    %c0_35 = arith.constant 0 : index
    %42 = tpu.strided_load %arg6[%c256, %c0_35] {strides = array<i32: 2, 1>} : memref<1024x64xf32, #tpu.memory_space<vmem>>, vector<16x64xf32>
    %c257 = arith.constant 257 : index
    %c0_36 = arith.constant 0 : index
    %43 = tpu.strided_load %arg6[%c257, %c0_36] {strides = array<i32: 2, 1>} : memref<1024x64xf32, #tpu.memory_space<vmem>>, vector<16x64xf32>
    %44 = arith.maximumf %42, %43 : vector<16x64xf32>
    %c0_37 = arith.constant 0 : index
    %c64_38 = arith.constant 64 : index
    %c0_39 = arith.constant 0 : index
    %45 = vector.load %arg5[%c0_37, %c64_38, %c0_39] : memref<2x256x64xf32, #tpu.memory_space<vmem>>, vector<1x16x64xf32>
    %46 = vector.shape_cast %45 : vector<1x16x64xf32> to vector<16x64xf32>
    %47 = vector.shape_cast %44 : vector<16x64xf32> to vector<1x16x64xf32>
    tpu.vector_store %arg5[%c0_37, %c64_38, %c0_39], %47 {strides = array<i32>} : memref<2x256x64xf32, #tpu.memory_space<vmem>>, vector<1x16x64xf32>,
    %c320 = arith.constant 320 : index
    %c0_40 = arith.constant 0 : index
    %48 = tpu.strided_load %arg6[%c320, %c0_40] {strides = array<i32: 2, 1>} : memref<1024x64xf32, #tpu.memory_space<vmem>>, vector<16x64xf32>
    %c321 = arith.constant 321 : index
    %c0_41 = arith.constant 0 : index
    %49 = tpu.strided_load %arg6[%c321, %c0_41] {strides = array<i32: 2, 1>} : memref<1024x64xf32, #tpu.memory_space<vmem>>, vector<16x64xf32>
    %50 = arith.maximumf %48, %49 : vector<16x64xf32>
    %c0_42 = arith.constant 0 : index
    %c80 = arith.constant 80 : index
    %c0_43 = arith.constant 0 : index
    %51 = vector.load %arg5[%c0_42, %c80, %c0_43] : memref<2x256x64xf32, #tpu.memory_space<vmem>>, vector<1x16x64xf32>
    %52 = vector.shape_cast %51 : vector<1x16x64xf32> to vector<16x64xf32>
    %53 = vector.shape_cast %50 : vector<16x64xf32> to vector<1x16x64xf32>
    tpu.vector_store %arg5[%c0_42, %c80, %c0_43], %53 {strides = array<i32>} : memref<2x256x64xf32, #tpu.memory_space<vmem>>, vector<1x16x64xf32>,
    %c384 = arith.constant 384 : index
    %c0_44 = arith.constant 0 : index
    %54 = tpu.strided_load %arg6[%c384, %c0_44] {strides = array<i32: 2, 1>} : memref<1024x64xf32, #tpu.memory_space<vmem>>, vector<16x64xf32>
    %c385 = arith.constant 385 : index
    %c0_45 = arith.constant 0 : index
    %55 = tpu.strided_load %arg6[%c385, %c0_45] {strides = array<i32: 2, 1>} : memref<1024x64xf32, #tpu.memory_space<vmem>>, vector<16x64xf32>
    %56 = arith.maximumf %54, %55 : vector<16x64xf32>
    %c0_46 = arith.constant 0 : index
    %c96 = arith.constant 96 : index
    %c0_47 = arith.constant 0 : index
    %57 = vector.load %arg5[%c0_46, %c96, %c0_47] : memref<2x256x64xf32, #tpu.memory_space<vmem>>, vector<1x16x64xf32>
    %58 = vector.shape_cast %57 : vector<1x16x64xf32> to vector<16x64xf32>
    %59 = vector.shape_cast %56 : vector<16x64xf32> to vector<1x16x64xf32>
    tpu.vector_store %arg5[%c0_46, %c96, %c0_47], %59 {strides = array<i32>} : memref<2x256x64xf32, #tpu.memory_space<vmem>>, vector<1x16x64xf32>,
    %c448 = arith.constant 448 : index
    %c0_48 = arith.constant 0 : index
    %60 = tpu.strided_load %arg6[%c448, %c0_48] {strides = array<i32: 2, 1>} : memref<1024x64xf32, #tpu.memory_space<vmem>>, vector<16x64xf32>
    %c449 = arith.constant 449 : index
    %c0_49 = arith.constant 0 : index
    %61 = tpu.strided_load %arg6[%c449, %c0_49] {strides = array<i32: 2, 1>} : memref<1024x64xf32, #tpu.memory_space<vmem>>, vector<16x64xf32>
    %62 = arith.maximumf %60, %61 : vector<16x64xf32>
    %c0_50 = arith.constant 0 : index
    %c112 = arith.constant 112 : index
    %c0_51 = arith.constant 0 : index
    %63 = vector.load %arg5[%c0_50, %c112, %c0_51] : memref<2x256x64xf32, #tpu.memory_space<vmem>>, vector<1x16x64xf32>
    %64 = vector.shape_cast %63 : vector<1x16x64xf32> to vector<16x64xf32>
    %65 = vector.shape_cast %62 : vector<16x64xf32> to vector<1x16x64xf32>
    tpu.vector_store %arg5[%c0_50, %c112, %c0_51], %65 {strides = array<i32>} : memref<2x256x64xf32, #tpu.memory_space<vmem>>, vector<1x16x64xf32>,
    %c512 = arith.constant 512 : index
    %c0_52 = arith.constant 0 : index
    %66 = tpu.strided_load %arg6[%c512, %c0_52] {strides = array<i32: 2, 1>} : memref<1024x64xf32, #tpu.memory_space<vmem>>, vector<16x64xf32>
    %c513 = arith.constant 513 : index
    %c0_53 = arith.constant 0 : index
    %67 = tpu.strided_load %arg6[%c513, %c0_53] {strides = array<i32: 2, 1>} : memref<1024x64xf32, #tpu.memory_space<vmem>>, vector<16x64xf32>
    %68 = arith.maximumf %66, %67 : vector<16x64xf32>
    %c0_54 = arith.constant 0 : index
    %c128_55 = arith.constant 128 : index
    %c0_56 = arith.constant 0 : index
    %69 = vector.load %arg5[%c0_54, %c128_55, %c0_56] : memref<2x256x64xf32, #tpu.memory_space<vmem>>, vector<1x16x64xf32>
    %70 = vector.shape_cast %69 : vector<1x16x64xf32> to vector<16x64xf32>
    %71 = vector.shape_cast %68 : vector<16x64xf32> to vector<1x16x64xf32>
    tpu.vector_store %arg5[%c0_54, %c128_55, %c0_56], %71 {strides = array<i32>} : memref<2x256x64xf32, #tpu.memory_space<vmem>>, vector<1x16x64xf32>,
    %c576 = arith.constant 576 : index
    %c0_57 = arith.constant 0 : index
    %72 = tpu.strided_load %arg6[%c576, %c0_57] {strides = array<i32: 2, 1>} : memref<1024x64xf32, #tpu.memory_space<vmem>>, vector<16x64xf32>
    %c577 = arith.constant 577 : index
    %c0_58 = arith.constant 0 : index
    %73 = tpu.strided_load %arg6[%c577, %c0_58] {strides = array<i32: 2, 1>} : memref<1024x64xf32, #tpu.memory_space<vmem>>, vector<16x64xf32>
    %74 = arith.maximumf %72, %73 : vector<16x64xf32>
    %c0_59 = arith.constant 0 : index
    %c144 = arith.constant 144 : index
    %c0_60 = arith.constant 0 : index
    %75 = vector.load %arg5[%c0_59, %c144, %c0_60] : memref<2x256x64xf32, #tpu.memory_space<vmem>>, vector<1x16x64xf32>
    %76 = vector.shape_cast %75 : vector<1x16x64xf32> to vector<16x64xf32>
    %77 = vector.shape_cast %74 : vector<16x64xf32> to vector<1x16x64xf32>
    tpu.vector_store %arg5[%c0_59, %c144, %c0_60], %77 {strides = array<i32>} : memref<2x256x64xf32, #tpu.memory_space<vmem>>, vector<1x16x64xf32>,
    %c640 = arith.constant 640 : index
    %c0_61 = arith.constant 0 : index
    %78 = tpu.strided_load %arg6[%c640, %c0_61] {strides = array<i32: 2, 1>} : memref<1024x64xf32, #tpu.memory_space<vmem>>, vector<16x64xf32>
    %c641 = arith.constant 641 : index
    %c0_62 = arith.constant 0 : index
    %79 = tpu.strided_load %arg6[%c641, %c0_62] {strides = array<i32: 2, 1>} : memref<1024x64xf32, #tpu.memory_space<vmem>>, vector<16x64xf32>
    %80 = arith.maximumf %78, %79 : vector<16x64xf32>
    %c0_63 = arith.constant 0 : index
    %c160 = arith.constant 160 : index
    %c0_64 = arith.constant 0 : index
    %81 = vector.load %arg5[%c0_63, %c160, %c0_64] : memref<2x256x64xf32, #tpu.memory_space<vmem>>, vector<1x16x64xf32>
    %82 = vector.shape_cast %81 : vector<1x16x64xf32> to vector<16x64xf32>
    %83 = vector.shape_cast %80 : vector<16x64xf32> to vector<1x16x64xf32>
    tpu.vector_store %arg5[%c0_63, %c160, %c0_64], %83 {strides = array<i32>} : memref<2x256x64xf32, #tpu.memory_space<vmem>>, vector<1x16x64xf32>,
    %c704 = arith.constant 704 : index
    %c0_65 = arith.constant 0 : index
    %84 = tpu.strided_load %arg6[%c704, %c0_65] {strides = array<i32: 2, 1>} : memref<1024x64xf32, #tpu.memory_space<vmem>>, vector<16x64xf32>
    %c705 = arith.constant 705 : index
    %c0_66 = arith.constant 0 : index
    %85 = tpu.strided_load %arg6[%c705, %c0_66] {strides = array<i32: 2, 1>} : memref<1024x64xf32, #tpu.memory_space<vmem>>, vector<16x64xf32>
    %86 = arith.maximumf %84, %85 : vector<16x64xf32>
    %c0_67 = arith.constant 0 : index
    %c176 = arith.constant 176 : index
    %c0_68 = arith.constant 0 : index
    %87 = vector.load %arg5[%c0_67, %c176, %c0_68] : memref<2x256x64xf32, #tpu.memory_space<vmem>>, vector<1x16x64xf32>
    %88 = vector.shape_cast %87 : vector<1x16x64xf32> to vector<16x64xf32>
    %89 = vector.shape_cast %86 : vector<16x64xf32> to vector<1x16x64xf32>
    tpu.vector_store %arg5[%c0_67, %c176, %c0_68], %89 {strides = array<i32>} : memref<2x256x64xf32, #tpu.memory_space<vmem>>, vector<1x16x64xf32>,
    %c768 = arith.constant 768 : index
    %c0_69 = arith.constant 0 : index
    %90 = tpu.strided_load %arg6[%c768, %c0_69] {strides = array<i32: 2, 1>} : memref<1024x64xf32, #tpu.memory_space<vmem>>, vector<16x64xf32>
    %c769 = arith.constant 769 : index
    %c0_70 = arith.constant 0 : index
    %91 = tpu.strided_load %arg6[%c769, %c0_70] {strides = array<i32: 2, 1>} : memref<1024x64xf32, #tpu.memory_space<vmem>>, vector<16x64xf32>
    %92 = arith.maximumf %90, %91 : vector<16x64xf32>
    %c0_71 = arith.constant 0 : index
    %c192_72 = arith.constant 192 : index
    %c0_73 = arith.constant 0 : index
    %93 = vector.load %arg5[%c0_71, %c192_72, %c0_73] : memref<2x256x64xf32, #tpu.memory_space<vmem>>, vector<1x16x64xf32>
    %94 = vector.shape_cast %93 : vector<1x16x64xf32> to vector<16x64xf32>
    %95 = vector.shape_cast %92 : vector<16x64xf32> to vector<1x16x64xf32>
    tpu.vector_store %arg5[%c0_71, %c192_72, %c0_73], %95 {strides = array<i32>} : memref<2x256x64xf32, #tpu.memory_space<vmem>>, vector<1x16x64xf32>,
    %c832 = arith.constant 832 : index
    %c0_74 = arith.constant 0 : index
    %96 = tpu.strided_load %arg6[%c832, %c0_74] {strides = array<i32: 2, 1>} : memref<1024x64xf32, #tpu.memory_space<vmem>>, vector<16x64xf32>
    %c833 = arith.constant 833 : index
    %c0_75 = arith.constant 0 : index
    %97 = tpu.strided_load %arg6[%c833, %c0_75] {strides = array<i32: 2, 1>} : memref<1024x64xf32, #tpu.memory_space<vmem>>, vector<16x64xf32>
    %98 = arith.maximumf %96, %97 : vector<16x64xf32>
    %c0_76 = arith.constant 0 : index
    %c208 = arith.constant 208 : index
    %c0_77 = arith.constant 0 : index
    %99 = vector.load %arg5[%c0_76, %c208, %c0_77] : memref<2x256x64xf32, #tpu.memory_space<vmem>>, vector<1x16x64xf32>
    %100 = vector.shape_cast %99 : vector<1x16x64xf32> to vector<16x64xf32>
    %101 = vector.shape_cast %98 : vector<16x64xf32> to vector<1x16x64xf32>
    tpu.vector_store %arg5[%c0_76, %c208, %c0_77], %101 {strides = array<i32>} : memref<2x256x64xf32, #tpu.memory_space<vmem>>, vector<1x16x64xf32>,
    %c896 = arith.constant 896 : index
    %c0_78 = arith.constant 0 : index
    %102 = tpu.strided_load %arg6[%c896, %c0_78] {strides = array<i32: 2, 1>} : memref<1024x64xf32, #tpu.memory_space<vmem>>, vector<16x64xf32>
    %c897 = arith.constant 897 : index
    %c0_79 = arith.constant 0 : index
    %103 = tpu.strided_load %arg6[%c897, %c0_79] {strides = array<i32: 2, 1>} : memref<1024x64xf32, #tpu.memory_space<vmem>>, vector<16x64xf32>
    %104 = arith.maximumf %102, %103 : vector<16x64xf32>
    %c0_80 = arith.constant 0 : index
    %c224 = arith.constant 224 : index
    %c0_81 = arith.constant 0 : index
    %105 = vector.load %arg5[%c0_80, %c224, %c0_81] : memref<2x256x64xf32, #tpu.memory_space<vmem>>, vector<1x16x64xf32>
    %106 = vector.shape_cast %105 : vector<1x16x64xf32> to vector<16x64xf32>
    %107 = vector.shape_cast %104 : vector<16x64xf32> to vector<1x16x64xf32>
    tpu.vector_store %arg5[%c0_80, %c224, %c0_81], %107 {strides = array<i32>} : memref<2x256x64xf32, #tpu.memory_space<vmem>>, vector<1x16x64xf32>,
    %c960 = arith.constant 960 : index
    %c0_82 = arith.constant 0 : index
    %108 = tpu.strided_load %arg6[%c960, %c0_82] {strides = array<i32: 2, 1>} : memref<1024x64xf32, #tpu.memory_space<vmem>>, vector<16x64xf32>
    %c961 = arith.constant 961 : index
    %c0_83 = arith.constant 0 : index
    %109 = tpu.strided_load %arg6[%c961, %c0_83] {strides = array<i32: 2, 1>} : memref<1024x64xf32, #tpu.memory_space<vmem>>, vector<16x64xf32>
    %110 = arith.maximumf %108, %109 : vector<16x64xf32>
    %c0_84 = arith.constant 0 : index
    %c240 = arith.constant 240 : index
    %c0_85 = arith.constant 0 : index
    %111 = vector.load %arg5[%c0_84, %c240, %c0_85] : memref<2x256x64xf32, #tpu.memory_space<vmem>>, vector<1x16x64xf32>
    %112 = vector.shape_cast %111 : vector<1x16x64xf32> to vector<16x64xf32>
    %113 = vector.shape_cast %110 : vector<16x64xf32> to vector<1x16x64xf32>
    tpu.vector_store %arg5[%c0_84, %c240, %c0_85], %113 {strides = array<i32>} : memref<2x256x64xf32, #tpu.memory_space<vmem>>, vector<1x16x64xf32>,
    %c1_86 = arith.constant 1 : index
    %c0_87 = arith.constant 0 : index
    %c0_88 = arith.constant 0 : index
    %114 = vector.load %arg1[%c1_86, %c0_87, %c0_88] : memref<2x1024x32xf32, #tpu.memory_space<vmem>>, vector<1x1024x32xf32>
    %115 = vector.shape_cast %114 : vector<1x1024x32xf32> to vector<1024x32xf32>
    %116 = arith.truncf %115 : vector<1024x32xf32> to vector<1024x32xbf16>
    %c0_89 = arith.constant 0 : index
    %c0_90 = arith.constant 0 : index
    %117 = vector.load %arg2[%c0_89, %c0_90] : memref<32x64xbf16, #tpu.memory_space<vmem>>, vector<32x64xbf16>
    %cst_91 = arith.constant dense<0.000000e+00> : vector<1024x64xf32>
    %118 = tpu.matmul %116, %117, %cst_91 {dimension_numbers = #tpu.dot_dimension_numbers<[1], [0], [0], [1], [0, 0, 1, 1], [], []>} : vector<1024x32xbf16>, vector<32x64xbf16>, vector<1024x64xf32> -> vector<1024x64xf32>
    %c0_92 = arith.constant 0 : index
    %c0_93 = arith.constant 0 : index
    %119 = vector.load %arg3[%c0_92, %c0_93] : memref<1x64xf32, #tpu.memory_space<vmem>>, vector<1x64xf32>
    %120 = vector.broadcast %119 : vector<1x64xf32> to vector<1024x64xf32>
    %121 = arith.mulf %118, %120 : vector<1024x64xf32>
    %c0_94 = arith.constant 0 : index
    %c0_95 = arith.constant 0 : index
    %122 = vector.load %arg4[%c0_94, %c0_95] : memref<1x64xf32, #tpu.memory_space<vmem>>, vector<1x64xf32>
    %123 = vector.broadcast %122 : vector<1x64xf32> to vector<1024x64xf32>
    %124 = arith.addf %121, %123 : vector<1024x64xf32>
    %cst_96 = arith.constant 0.000000e+00 : f32
    %125 = vector.broadcast %cst_96 : f32 to vector<1024x64xf32>
    %126 = arith.maximumf %124, %125 : vector<1024x64xf32>
    %c0_97 = arith.constant 0 : index
    %c0_98 = arith.constant 0 : index
    %127 = vector.load %arg6[%c0_97, %c0_98] : memref<1024x64xf32, #tpu.memory_space<vmem>>, vector<1024x64xf32>
    tpu.vector_store %arg6[%c0_97, %c0_98], %126 {strides = array<i32>} : memref<1024x64xf32, #tpu.memory_space<vmem>>, vector<1024x64xf32>,
    %c0_99 = arith.constant 0 : index
    %c0_100 = arith.constant 0 : index
    %128 = vector.load %arg6[%c0_99, %c0_100] : memref<1024x64xf32, #tpu.memory_space<vmem>>, vector<992x64xf32>
    %c32_101 = arith.constant 32 : index
    %c0_102 = arith.constant 0 : index
    %129 = vector.load %arg6[%c32_101, %c0_102] : memref<1024x64xf32, #tpu.memory_space<vmem>>, vector<992x64xf32>
    %130 = arith.maximumf %128, %129 : vector<992x64xf32>
    %c0_103 = arith.constant 0 : index
    %c0_104 = arith.constant 0 : index
    %131 = vector.load %arg6[%c0_103, %c0_104] : memref<1024x64xf32, #tpu.memory_space<vmem>>, vector<992x64xf32>
    tpu.vector_store %arg6[%c0_103, %c0_104], %130 {strides = array<i32>} : memref<1024x64xf32, #tpu.memory_space<vmem>>, vector<992x64xf32>,
    %c0_105 = arith.constant 0 : index
    %c0_106 = arith.constant 0 : index
    %132 = tpu.strided_load %arg6[%c0_105, %c0_106] {strides = array<i32: 2, 1>} : memref<1024x64xf32, #tpu.memory_space<vmem>>, vector<16x64xf32>
    %c1_107 = arith.constant 1 : index
    %c0_108 = arith.constant 0 : index
    %133 = tpu.strided_load %arg6[%c1_107, %c0_108] {strides = array<i32: 2, 1>} : memref<1024x64xf32, #tpu.memory_space<vmem>>, vector<16x64xf32>
    %134 = arith.maximumf %132, %133 : vector<16x64xf32>
    %c1_109 = arith.constant 1 : index
    %c0_110 = arith.constant 0 : index
    %c0_111 = arith.constant 0 : index
    %135 = vector.load %arg5[%c1_109, %c0_110, %c0_111] : memref<2x256x64xf32, #tpu.memory_space<vmem>>, vector<1x16x64xf32>
    %136 = vector.shape_cast %135 : vector<1x16x64xf32> to vector<16x64xf32>
    %137 = vector.shape_cast %134 : vector<16x64xf32> to vector<1x16x64xf32>
    tpu.vector_store %arg5[%c1_109, %c0_110, %c0_111], %137 {strides = array<i32>} : memref<2x256x64xf32, #tpu.memory_space<vmem>>, vector<1x16x64xf32>,
    %c64_112 = arith.constant 64 : index
    %c0_113 = arith.constant 0 : index
    %138 = tpu.strided_load %arg6[%c64_112, %c0_113] {strides = array<i32: 2, 1>} : memref<1024x64xf32, #tpu.memory_space<vmem>>, vector<16x64xf32>
    %c65_114 = arith.constant 65 : index
    %c0_115 = arith.constant 0 : index
    %139 = tpu.strided_load %arg6[%c65_114, %c0_115] {strides = array<i32: 2, 1>} : memref<1024x64xf32, #tpu.memory_space<vmem>>, vector<16x64xf32>
    %140 = arith.maximumf %138, %139 : vector<16x64xf32>
    %c1_116 = arith.constant 1 : index
    %c16_117 = arith.constant 16 : index
    %c0_118 = arith.constant 0 : index
    %141 = vector.load %arg5[%c1_116, %c16_117, %c0_118] : memref<2x256x64xf32, #tpu.memory_space<vmem>>, vector<1x16x64xf32>
    %142 = vector.shape_cast %141 : vector<1x16x64xf32> to vector<16x64xf32>
    %143 = vector.shape_cast %140 : vector<16x64xf32> to vector<1x16x64xf32>
    tpu.vector_store %arg5[%c1_116, %c16_117, %c0_118], %143 {strides = array<i32>} : memref<2x256x64xf32, #tpu.memory_space<vmem>>, vector<1x16x64xf32>,
    %c128_119 = arith.constant 128 : index
    %c0_120 = arith.constant 0 : index
    %144 = tpu.strided_load %arg6[%c128_119, %c0_120] {strides = array<i32: 2, 1>} : memref<1024x64xf32, #tpu.memory_space<vmem>>, vector<16x64xf32>
    %c129_121 = arith.constant 129 : index
    %c0_122 = arith.constant 0 : index
    %145 = tpu.strided_load %arg6[%c129_121, %c0_122] {strides = array<i32: 2, 1>} : memref<1024x64xf32, #tpu.memory_space<vmem>>, vector<16x64xf32>
    %146 = arith.maximumf %144, %145 : vector<16x64xf32>
    %c1_123 = arith.constant 1 : index
    %c32_124 = arith.constant 32 : index
    %c0_125 = arith.constant 0 : index
    %147 = vector.load %arg5[%c1_123, %c32_124, %c0_125] : memref<2x256x64xf32, #tpu.memory_space<vmem>>, vector<1x16x64xf32>
    %148 = vector.shape_cast %147 : vector<1x16x64xf32> to vector<16x64xf32>
    %149 = vector.shape_cast %146 : vector<16x64xf32> to vector<1x16x64xf32>
    tpu.vector_store %arg5[%c1_123, %c32_124, %c0_125], %149 {strides = array<i32>} : memref<2x256x64xf32, #tpu.memory_space<vmem>>, vector<1x16x64xf32>,
    %c192_126 = arith.constant 192 : index
    %c0_127 = arith.constant 0 : index
    %150 = tpu.strided_load %arg6[%c192_126, %c0_127] {strides = array<i32: 2, 1>} : memref<1024x64xf32, #tpu.memory_space<vmem>>, vector<16x64xf32>
    %c193_128 = arith.constant 193 : index
    %c0_129 = arith.constant 0 : index
    %151 = tpu.strided_load %arg6[%c193_128, %c0_129] {strides = array<i32: 2, 1>} : memref<1024x64xf32, #tpu.memory_space<vmem>>, vector<16x64xf32>
    %152 = arith.maximumf %150, %151 : vector<16x64xf32>
    %c1_130 = arith.constant 1 : index
    %c48_131 = arith.constant 48 : index
    %c0_132 = arith.constant 0 : index
    %153 = vector.load %arg5[%c1_130, %c48_131, %c0_132] : memref<2x256x64xf32, #tpu.memory_space<vmem>>, vector<1x16x64xf32>
    %154 = vector.shape_cast %153 : vector<1x16x64xf32> to vector<16x64xf32>
    %155 = vector.shape_cast %152 : vector<16x64xf32> to vector<1x16x64xf32>
    tpu.vector_store %arg5[%c1_130, %c48_131, %c0_132], %155 {strides = array<i32>} : memref<2x256x64xf32, #tpu.memory_space<vmem>>, vector<1x16x64xf32>,
    %c256_133 = arith.constant 256 : index
    %c0_134 = arith.constant 0 : index
    %156 = tpu.strided_load %arg6[%c256_133, %c0_134] {strides = array<i32: 2, 1>} : memref<1024x64xf32, #tpu.memory_space<vmem>>, vector<16x64xf32>
    %c257_135 = arith.constant 257 : index
    %c0_136 = arith.constant 0 : index
    %157 = tpu.strided_load %arg6[%c257_135, %c0_136] {strides = array<i32: 2, 1>} : memref<1024x64xf32, #tpu.memory_space<vmem>>, vector<16x64xf32>
    %158 = arith.maximumf %156, %157 : vector<16x64xf32>
    %c1_137 = arith.constant 1 : index
    %c64_138 = arith.constant 64 : index
    %c0_139 = arith.constant 0 : index
    %159 = vector.load %arg5[%c1_137, %c64_138, %c0_139] : memref<2x256x64xf32, #tpu.memory_space<vmem>>, vector<1x16x64xf32>
    %160 = vector.shape_cast %159 : vector<1x16x64xf32> to vector<16x64xf32>
    %161 = vector.shape_cast %158 : vector<16x64xf32> to vector<1x16x64xf32>
    tpu.vector_store %arg5[%c1_137, %c64_138, %c0_139], %161 {strides = array<i32>} : memref<2x256x64xf32, #tpu.memory_space<vmem>>, vector<1x16x64xf32>,
    %c320_140 = arith.constant 320 : index
    %c0_141 = arith.constant 0 : index
    %162 = tpu.strided_load %arg6[%c320_140, %c0_141] {strides = array<i32: 2, 1>} : memref<1024x64xf32, #tpu.memory_space<vmem>>, vector<16x64xf32>
    %c321_142 = arith.constant 321 : index
    %c0_143 = arith.constant 0 : index
    %163 = tpu.strided_load %arg6[%c321_142, %c0_143] {strides = array<i32: 2, 1>} : memref<1024x64xf32, #tpu.memory_space<vmem>>, vector<16x64xf32>
    %164 = arith.maximumf %162, %163 : vector<16x64xf32>
    %c1_144 = arith.constant 1 : index
    %c80_145 = arith.constant 80 : index
    %c0_146 = arith.constant 0 : index
    %165 = vector.load %arg5[%c1_144, %c80_145, %c0_146] : memref<2x256x64xf32, #tpu.memory_space<vmem>>, vector<1x16x64xf32>
    %166 = vector.shape_cast %165 : vector<1x16x64xf32> to vector<16x64xf32>
    %167 = vector.shape_cast %164 : vector<16x64xf32> to vector<1x16x64xf32>
    tpu.vector_store %arg5[%c1_144, %c80_145, %c0_146], %167 {strides = array<i32>} : memref<2x256x64xf32, #tpu.memory_space<vmem>>, vector<1x16x64xf32>,
    %c384_147 = arith.constant 384 : index
    %c0_148 = arith.constant 0 : index
    %168 = tpu.strided_load %arg6[%c384_147, %c0_148] {strides = array<i32: 2, 1>} : memref<1024x64xf32, #tpu.memory_space<vmem>>, vector<16x64xf32>
    %c385_149 = arith.constant 385 : index
    %c0_150 = arith.constant 0 : index
    %169 = tpu.strided_load %arg6[%c385_149, %c0_150] {strides = array<i32: 2, 1>} : memref<1024x64xf32, #tpu.memory_space<vmem>>, vector<16x64xf32>
    %170 = arith.maximumf %168, %169 : vector<16x64xf32>
    %c1_151 = arith.constant 1 : index
    %c96_152 = arith.constant 96 : index
    %c0_153 = arith.constant 0 : index
    %171 = vector.load %arg5[%c1_151, %c96_152, %c0_153] : memref<2x256x64xf32, #tpu.memory_space<vmem>>, vector<1x16x64xf32>
    %172 = vector.shape_cast %171 : vector<1x16x64xf32> to vector<16x64xf32>
    %173 = vector.shape_cast %170 : vector<16x64xf32> to vector<1x16x64xf32>
    tpu.vector_store %arg5[%c1_151, %c96_152, %c0_153], %173 {strides = array<i32>} : memref<2x256x64xf32, #tpu.memory_space<vmem>>, vector<1x16x64xf32>,
    %c448_154 = arith.constant 448 : index
    %c0_155 = arith.constant 0 : index
    %174 = tpu.strided_load %arg6[%c448_154, %c0_155] {strides = array<i32: 2, 1>} : memref<1024x64xf32, #tpu.memory_space<vmem>>, vector<16x64xf32>
    %c449_156 = arith.constant 449 : index
    %c0_157 = arith.constant 0 : index
    %175 = tpu.strided_load %arg6[%c449_156, %c0_157] {strides = array<i32: 2, 1>} : memref<1024x64xf32, #tpu.memory_space<vmem>>, vector<16x64xf32>
    %176 = arith.maximumf %174, %175 : vector<16x64xf32>
    %c1_158 = arith.constant 1 : index
    %c112_159 = arith.constant 112 : index
    %c0_160 = arith.constant 0 : index
    %177 = vector.load %arg5[%c1_158, %c112_159, %c0_160] : memref<2x256x64xf32, #tpu.memory_space<vmem>>, vector<1x16x64xf32>
    %178 = vector.shape_cast %177 : vector<1x16x64xf32> to vector<16x64xf32>
    %179 = vector.shape_cast %176 : vector<16x64xf32> to vector<1x16x64xf32>
    tpu.vector_store %arg5[%c1_158, %c112_159, %c0_160], %179 {strides = array<i32>} : memref<2x256x64xf32, #tpu.memory_space<vmem>>, vector<1x16x64xf32>,
    %c512_161 = arith.constant 512 : index
    %c0_162 = arith.constant 0 : index
    %180 = tpu.strided_load %arg6[%c512_161, %c0_162] {strides = array<i32: 2, 1>} : memref<1024x64xf32, #tpu.memory_space<vmem>>, vector<16x64xf32>
    %c513_163 = arith.constant 513 : index
    %c0_164 = arith.constant 0 : index
    %181 = tpu.strided_load %arg6[%c513_163, %c0_164] {strides = array<i32: 2, 1>} : memref<1024x64xf32, #tpu.memory_space<vmem>>, vector<16x64xf32>
    %182 = arith.maximumf %180, %181 : vector<16x64xf32>
    %c1_165 = arith.constant 1 : index
    %c128_166 = arith.constant 128 : index
    %c0_167 = arith.constant 0 : index
    %183 = vector.load %arg5[%c1_165, %c128_166, %c0_167] : memref<2x256x64xf32, #tpu.memory_space<vmem>>, vector<1x16x64xf32>
    %184 = vector.shape_cast %183 : vector<1x16x64xf32> to vector<16x64xf32>
    %185 = vector.shape_cast %182 : vector<16x64xf32> to vector<1x16x64xf32>
    tpu.vector_store %arg5[%c1_165, %c128_166, %c0_167], %185 {strides = array<i32>} : memref<2x256x64xf32, #tpu.memory_space<vmem>>, vector<1x16x64xf32>,
    %c576_168 = arith.constant 576 : index
    %c0_169 = arith.constant 0 : index
    %186 = tpu.strided_load %arg6[%c576_168, %c0_169] {strides = array<i32: 2, 1>} : memref<1024x64xf32, #tpu.memory_space<vmem>>, vector<16x64xf32>
    %c577_170 = arith.constant 577 : index
    %c0_171 = arith.constant 0 : index
    %187 = tpu.strided_load %arg6[%c577_170, %c0_171] {strides = array<i32: 2, 1>} : memref<1024x64xf32, #tpu.memory_space<vmem>>, vector<16x64xf32>
    %188 = arith.maximumf %186, %187 : vector<16x64xf32>
    %c1_172 = arith.constant 1 : index
    %c144_173 = arith.constant 144 : index
    %c0_174 = arith.constant 0 : index
    %189 = vector.load %arg5[%c1_172, %c144_173, %c0_174] : memref<2x256x64xf32, #tpu.memory_space<vmem>>, vector<1x16x64xf32>
    %190 = vector.shape_cast %189 : vector<1x16x64xf32> to vector<16x64xf32>
    %191 = vector.shape_cast %188 : vector<16x64xf32> to vector<1x16x64xf32>
    tpu.vector_store %arg5[%c1_172, %c144_173, %c0_174], %191 {strides = array<i32>} : memref<2x256x64xf32, #tpu.memory_space<vmem>>, vector<1x16x64xf32>,
    %c640_175 = arith.constant 640 : index
    %c0_176 = arith.constant 0 : index
    %192 = tpu.strided_load %arg6[%c640_175, %c0_176] {strides = array<i32: 2, 1>} : memref<1024x64xf32, #tpu.memory_space<vmem>>, vector<16x64xf32>
    %c641_177 = arith.constant 641 : index
    %c0_178 = arith.constant 0 : index
    %193 = tpu.strided_load %arg6[%c641_177, %c0_178] {strides = array<i32: 2, 1>} : memref<1024x64xf32, #tpu.memory_space<vmem>>, vector<16x64xf32>
    %194 = arith.maximumf %192, %193 : vector<16x64xf32>
    %c1_179 = arith.constant 1 : index
    %c160_180 = arith.constant 160 : index
    %c0_181 = arith.constant 0 : index
    %195 = vector.load %arg5[%c1_179, %c160_180, %c0_181] : memref<2x256x64xf32, #tpu.memory_space<vmem>>, vector<1x16x64xf32>
    %196 = vector.shape_cast %195 : vector<1x16x64xf32> to vector<16x64xf32>
    %197 = vector.shape_cast %194 : vector<16x64xf32> to vector<1x16x64xf32>
    tpu.vector_store %arg5[%c1_179, %c160_180, %c0_181], %197 {strides = array<i32>} : memref<2x256x64xf32, #tpu.memory_space<vmem>>, vector<1x16x64xf32>,
    %c704_182 = arith.constant 704 : index
    %c0_183 = arith.constant 0 : index
    %198 = tpu.strided_load %arg6[%c704_182, %c0_183] {strides = array<i32: 2, 1>} : memref<1024x64xf32, #tpu.memory_space<vmem>>, vector<16x64xf32>
    %c705_184 = arith.constant 705 : index
    %c0_185 = arith.constant 0 : index
    %199 = tpu.strided_load %arg6[%c705_184, %c0_185] {strides = array<i32: 2, 1>} : memref<1024x64xf32, #tpu.memory_space<vmem>>, vector<16x64xf32>
    %200 = arith.maximumf %198, %199 : vector<16x64xf32>
    %c1_186 = arith.constant 1 : index
    %c176_187 = arith.constant 176 : index
    %c0_188 = arith.constant 0 : index
    %201 = vector.load %arg5[%c1_186, %c176_187, %c0_188] : memref<2x256x64xf32, #tpu.memory_space<vmem>>, vector<1x16x64xf32>
    %202 = vector.shape_cast %201 : vector<1x16x64xf32> to vector<16x64xf32>
    %203 = vector.shape_cast %200 : vector<16x64xf32> to vector<1x16x64xf32>
    tpu.vector_store %arg5[%c1_186, %c176_187, %c0_188], %203 {strides = array<i32>} : memref<2x256x64xf32, #tpu.memory_space<vmem>>, vector<1x16x64xf32>,
    %c768_189 = arith.constant 768 : index
    %c0_190 = arith.constant 0 : index
    %204 = tpu.strided_load %arg6[%c768_189, %c0_190] {strides = array<i32: 2, 1>} : memref<1024x64xf32, #tpu.memory_space<vmem>>, vector<16x64xf32>
    %c769_191 = arith.constant 769 : index
    %c0_192 = arith.constant 0 : index
    %205 = tpu.strided_load %arg6[%c769_191, %c0_192] {strides = array<i32: 2, 1>} : memref<1024x64xf32, #tpu.memory_space<vmem>>, vector<16x64xf32>
    %206 = arith.maximumf %204, %205 : vector<16x64xf32>
    %c1_193 = arith.constant 1 : index
    %c192_194 = arith.constant 192 : index
    %c0_195 = arith.constant 0 : index
    %207 = vector.load %arg5[%c1_193, %c192_194, %c0_195] : memref<2x256x64xf32, #tpu.memory_space<vmem>>, vector<1x16x64xf32>
    %208 = vector.shape_cast %207 : vector<1x16x64xf32> to vector<16x64xf32>
    %209 = vector.shape_cast %206 : vector<16x64xf32> to vector<1x16x64xf32>
    tpu.vector_store %arg5[%c1_193, %c192_194, %c0_195], %209 {strides = array<i32>} : memref<2x256x64xf32, #tpu.memory_space<vmem>>, vector<1x16x64xf32>,
    %c832_196 = arith.constant 832 : index
    %c0_197 = arith.constant 0 : index
    %210 = tpu.strided_load %arg6[%c832_196, %c0_197] {strides = array<i32: 2, 1>} : memref<1024x64xf32, #tpu.memory_space<vmem>>, vector<16x64xf32>
    %c833_198 = arith.constant 833 : index
    %c0_199 = arith.constant 0 : index
    %211 = tpu.strided_load %arg6[%c833_198, %c0_199] {strides = array<i32: 2, 1>} : memref<1024x64xf32, #tpu.memory_space<vmem>>, vector<16x64xf32>
    %212 = arith.maximumf %210, %211 : vector<16x64xf32>
    %c1_200 = arith.constant 1 : index
    %c208_201 = arith.constant 208 : index
    %c0_202 = arith.constant 0 : index
    %213 = vector.load %arg5[%c1_200, %c208_201, %c0_202] : memref<2x256x64xf32, #tpu.memory_space<vmem>>, vector<1x16x64xf32>
    %214 = vector.shape_cast %213 : vector<1x16x64xf32> to vector<16x64xf32>
    %215 = vector.shape_cast %212 : vector<16x64xf32> to vector<1x16x64xf32>
    tpu.vector_store %arg5[%c1_200, %c208_201, %c0_202], %215 {strides = array<i32>} : memref<2x256x64xf32, #tpu.memory_space<vmem>>, vector<1x16x64xf32>,
    %c896_203 = arith.constant 896 : index
    %c0_204 = arith.constant 0 : index
    %216 = tpu.strided_load %arg6[%c896_203, %c0_204] {strides = array<i32: 2, 1>} : memref<1024x64xf32, #tpu.memory_space<vmem>>, vector<16x64xf32>
    %c897_205 = arith.constant 897 : index
    %c0_206 = arith.constant 0 : index
    %217 = tpu.strided_load %arg6[%c897_205, %c0_206] {strides = array<i32: 2, 1>} : memref<1024x64xf32, #tpu.memory_space<vmem>>, vector<16x64xf32>
    %218 = arith.maximumf %216, %217 : vector<16x64xf32>
    %c1_207 = arith.constant 1 : index
    %c224_208 = arith.constant 224 : index
    %c0_209 = arith.constant 0 : index
    %219 = vector.load %arg5[%c1_207, %c224_208, %c0_209] : memref<2x256x64xf32, #tpu.memory_space<vmem>>, vector<1x16x64xf32>
    %220 = vector.shape_cast %219 : vector<1x16x64xf32> to vector<16x64xf32>
    %221 = vector.shape_cast %218 : vector<16x64xf32> to vector<1x16x64xf32>
    tpu.vector_store %arg5[%c1_207, %c224_208, %c0_209], %221 {strides = array<i32>} : memref<2x256x64xf32, #tpu.memory_space<vmem>>, vector<1x16x64xf32>,
    %c960_210 = arith.constant 960 : index
    %c0_211 = arith.constant 0 : index
    %222 = tpu.strided_load %arg6[%c960_210, %c0_211] {strides = array<i32: 2, 1>} : memref<1024x64xf32, #tpu.memory_space<vmem>>, vector<16x64xf32>
    %c961_212 = arith.constant 961 : index
    %c0_213 = arith.constant 0 : index
    %223 = tpu.strided_load %arg6[%c961_212, %c0_213] {strides = array<i32: 2, 1>} : memref<1024x64xf32, #tpu.memory_space<vmem>>, vector<16x64xf32>
    %224 = arith.maximumf %222, %223 : vector<16x64xf32>
    %c1_214 = arith.constant 1 : index
    %c240_215 = arith.constant 240 : index
    %c0_216 = arith.constant 0 : index
    %225 = vector.load %arg5[%c1_214, %c240_215, %c0_216] : memref<2x256x64xf32, #tpu.memory_space<vmem>>, vector<1x16x64xf32>
    %226 = vector.shape_cast %225 : vector<1x16x64xf32> to vector<16x64xf32>
    %227 = vector.shape_cast %224 : vector<16x64xf32> to vector<1x16x64xf32>
    tpu.vector_store %arg5[%c1_214, %c240_215, %c0_216], %227 {strides = array<i32>} : memref<2x256x64xf32, #tpu.memory_space<vmem>>, vector<1x16x64xf32>,
    return
  }
  func.func @transform_0(%arg0: i32) -> (i32, i32, i32) {
    %c0_i32 = arith.constant 0 : i32
    %c0_i32_0 = arith.constant 0 : i32
    %c0_i32_1 = arith.constant 0 : i32
    %c0_i32_2 = arith.constant 0 : i32
    return %c0_i32, %c0_i32_0, %c0_i32_1 : i32, i32, i32
  }
  func.func @transform_1(%arg0: i32) -> (i32, i32) {
    %c0_i32 = arith.constant 0 : i32
    %c0_i32_0 = arith.constant 0 : i32
    %c0_i32_1 = arith.constant 0 : i32
    return %c0_i32, %c0_i32_0 : i32, i32
  }
  func.func @transform_2(%arg0: i32) -> (i32, i32) {
    %c0_i32 = arith.constant 0 : i32
    %c0_i32_0 = arith.constant 0 : i32
    %c0_i32_1 = arith.constant 0 : i32
    return %c0_i32, %c0_i32_0 : i32, i32
  }
  func.func @transform_3(%arg0: i32) -> (i32, i32) {
    %c0_i32 = arith.constant 0 : i32
    %c0_i32_0 = arith.constant 0 : i32
    %c0_i32_1 = arith.constant 0 : i32
    return %c0_i32, %c0_i32_0 : i32, i32
  }
  func.func @transform_4(%arg0: i32) -> (i32, i32, i32) {
    %c0_i32 = arith.constant 0 : i32
    %c0_i32_0 = arith.constant 0 : i32
    %c0_i32_1 = arith.constant 0 : i32
    %c0_i32_2 = arith.constant 0 : i32
    return %c0_i32, %c0_i32_0, %c0_i32_1 : i32, i32, i32
  }
}

</mosaic_0001>

<llo_original>
// kernel: tpu_custom_call.1
$region0: #{tpu_custom_call.1}
  #allocation0 [shape = 'u32[]', space=smem, size = 0x4, offset = 0x4, fixed_abs, tag = 'smem constant byte address 0x4 - core index']
  #allocation1 [shape = 'u32[144,128]{1,0:T(1,128)}', space=vmem, size = 0x12000, scoped, tag = 'internal scratch']
  #allocation2 [shape = 'f32[1024,64]{1,0:T(8,128)}', space=vmem, size = 0x80000, scoped, tag = 'scratch operand']
  %s0 = inlined_call_operand.vmem [shape: f32[2,1024,32], index: 0, kind: input, shape index: {}]
  %s1 = inlined_call_operand.vmem [shape: bf16[32,64], index: 1, kind: input, shape index: {}]
  %s2 = inlined_call_operand.vmem [shape: f32[1,64], index: 2, kind: input, shape index: {}]
  %s3 = inlined_call_operand.vmem [shape: f32[1,64], index: 3, kind: input, shape index: {}]
  %s4 = inlined_call_operand.vmem [shape: f32[2,256,64], index: 4, kind: output, shape index: {}]
  %s5 = sld [smem:[#allocation0]]
  $region26: #{tpu_custom_call.1} parent=0
    _
  %s7 = ssub.s32 1, %s5
  %s8 = scalar_select 0, %s7, %s5
  // Predicated region
  $region2: #{tpu_custom_call.1} parent=0 // pred_check
    _
  $region3: #{tpu_custom_call.1} parent=0 // pred_check_branch
    %10 = sbr.rel (0) target = $region5
  $region4: #{tpu_custom_call.1} parent=0 // pred_region
    _
  $region5: #{tpu_custom_call.1} parent=0 // pred_fallthru
    _
  // Predicated region
  $region6: #{tpu_custom_call.1} parent=0 // pred_check
    _
  $region7: #{tpu_custom_call.1} parent=0 // pred_check_branch
    %12 = sbr.rel (0) target = $region9
  $region8: #{tpu_custom_call.1} parent=0 // pred_region
    _
  $region9: #{tpu_custom_call.1} parent=0 // pred_fallthru
    _
  // Predicated region
  $region10: #{tpu_custom_call.1} parent=0 // pred_check
    _
  $region11: #{tpu_custom_call.1} parent=0 // pred_check_branch
    %14 = sbr.rel (0) target = $region13
  $region12: #{tpu_custom_call.1} parent=0 // pred_region
    _
  $region13: #{tpu_custom_call.1} parent=0 // pred_fallthru
    _
  // Predicated region
  $region14: #{tpu_custom_call.1} parent=0 // pred_check
    _
  $region15: #{tpu_custom_call.1} parent=0 // pred_check_branch
    %16 = sbr.rel (0) target = $region17
  $region16: #{tpu_custom_call.1} parent=0 // pred_region
    _
  $region17: #{tpu_custom_call.1} parent=0 // pred_fallthru
    _
  %v18 = vld [vmem:[%s0] sm:$0xff]
  %v19 = vld [vmem:[%s0 + $0x8] sm:$0xff]
  %v20 = vld [vmem:[%s0 + $0x10] sm:$0xff]
  %v21 = vld [vmem:[%s0 + $0x18] sm:$0xff]
  %v22 = vld [vmem:[%s0 + $0x20] sm:$0xff]
  %v23 = vld [vmem:[%s0 + $0x28] sm:$0xff]
  %v24 = vld [vmem:[%s0 + $0x30] sm:$0xff]
  %v25 = vld [vmem:[%s0 + $0x38] sm:$0xff]
  %v26 = vld [vmem:[%s0 + $0x40] sm:$0xff]
  %v27 = vld [vmem:[%s0 + $0x48] sm:$0xff]
  %v28 = vld [vmem:[%s0 + $0x50] sm:$0xff]
  %v29 = vld [vmem:[%s0 + $0x58] sm:$0xff]
  %v30 = vld [vmem:[%s0 + $0x60] sm:$0xff]
  %v31 = vld [vmem:[%s0 + $0x68] sm:$0xff]
  %v32 = vld [vmem:[%s0 + $0x70] sm:$0xff]
  %v33 = vld [vmem:[%s0 + $0x78] sm:$0xff]
  %v34 = vld [vmem:[%s0 + $0x80] sm:$0xff]
  %v35 = vld [vmem:[%s0 + $0x88] sm:$0xff]
  %v36 = vld [vmem:[%s0 + $0x90] sm:$0xff]
  %v37 = vld [vmem:[%s0 + $0x98] sm:$0xff]
  %v38 = vld [vmem:[%s0 + $0xa0] sm:$0xff]
  %v39 = vld [vmem:[%s0 + $0xa8] sm:$0xff]
  %v40 = vld [vmem:[%s0 + $0xb0] sm:$0xff]
  %v41 = vld [vmem:[%s0 + $0xb8] sm:$0xff]
  %v42 = vld [vmem:[%s0 + $0xc0] sm:$0xff]
  %v43 = vld [vmem:[%s0 + $0xc8] sm:$0xff]
  %v44 = vld [vmem:[%s0 + $0xd0] sm:$0xff]
  %v45 = vld [vmem:[%s0 + $0xd8] sm:$0xff]
  %v46 = vld [vmem:[%s0 + $0xe0] sm:$0xff]
  %v47 = vld [vmem:[%s0 + $0xe8] sm:$0xff]
  %v48 = vld [vmem:[%s0 + $0xf0] sm:$0xff]
  %v49 = vld [vmem:[%s0 + $0xf8] sm:$0xff]
  %v50 = vld [vmem:[%s0 + $0x100] sm:$0xff]
  %v51 = vld [vmem:[%s0 + $0x108] sm:$0xff]
  %v52 = vld [vmem:[%s0 + $0x110] sm:$0xff]
  %v53 = vld [vmem:[%s0 + $0x118] sm:$0xff]
  %v54 = vld [vmem:[%s0 + $0x120] sm:$0xff]
  %v55 = vld [vmem:[%s0 + $0x128] sm:$0xff]
  %v56 = vld [vmem:[%s0 + $0x130] sm:$0xff]
  %v57 = vld [vmem:[%s0 + $0x138] sm:$0xff]
  %v58 = vld [vmem:[%s0 + $0x140] sm:$0xff]
  %v59 = vld [vmem:[%s0 + $0x148] sm:$0xff]
  %v60 = vld [vmem:[%s0 + $0x150] sm:$0xff]
  %v61 = vld [vmem:[%s0 + $0x158] sm:$0xff]
  %v62 = vld [vmem:[%s0 + $0x160] sm:$0xff]
  %v63 = vld [vmem:[%s0 + $0x168] sm:$0xff]
  %v64 = vld [vmem:[%s0 + $0x170] sm:$0xff]
  %v65 = vld [vmem:[%s0 + $0x178] sm:$0xff]
  %v66 = vld [vmem:[%s0 + $0x180] sm:$0xff]
  %v67 = vld [vmem:[%s0 + $0x188] sm:$0xff]
  %v68 = vld [vmem:[%s0 + $0x190] sm:$0xff]
  %v69 = vld [vmem:[%s0 + $0x198] sm:$0xff]
  %v70 = vld [vmem:[%s0 + $0x1a0] sm:$0xff]
  %v71 = vld [vmem:[%s0 + $0x1a8] sm:$0xff]
  %v72 = vld [vmem:[%s0 + $0x1b0] sm:$0xff]
  %v73 = vld [vmem:[%s0 + $0x1b8] sm:$0xff]
  %v74 = vld [vmem:[%s0 + $0x1c0] sm:$0xff]
  %v75 = vld [vmem:[%s0 + $0x1c8] sm:$0xff]
  %v76 = vld [vmem:[%s0 + $0x1d0] sm:$0xff]
  %v77 = vld [vmem:[%s0 + $0x1d8] sm:$0xff]
  %v78 = vld [vmem:[%s0 + $0x1e0] sm:$0xff]
  %v79 = vld [vmem:[%s0 + $0x1e8] sm:$0xff]
  %v80 = vld [vmem:[%s0 + $0x1f0] sm:$0xff]
  %v81 = vld [vmem:[%s0 + $0x1f8] sm:$0xff]
  %v82 = vld [vmem:[%s0 + $0x200] sm:$0xff]
  %v83 = vld [vmem:[%s0 + $0x208] sm:$0xff]
  %v84 = vld [vmem:[%s0 + $0x210] sm:$0xff]
  %v85 = vld [vmem:[%s0 + $0x218] sm:$0xff]
  %v86 = vld [vmem:[%s0 + $0x220] sm:$0xff]
  %v87 = vld [vmem:[%s0 + $0x228] sm:$0xff]
  %v88 = vld [vmem:[%s0 + $0x230] sm:$0xff]
  %v89 = vld [vmem:[%s0 + $0x238] sm:$0xff]
  %v90 = vld [vmem:[%s0 + $0x240] sm:$0xff]
  %v91 = vld [vmem:[%s0 + $0x248] sm:$0xff]
  %v92 = vld [vmem:[%s0 + $0x250] sm:$0xff]
  %v93 = vld [vmem:[%s0 + $0x258] sm:$0xff]
  %v94 = vld [vmem:[%s0 + $0x260] sm:$0xff]
  %v95 = vld [vmem:[%s0 + $0x268] sm:$0xff]
  %v96 = vld [vmem:[%s0 + $0x270] sm:$0xff]
  %v97 = vld [vmem:[%s0 + $0x278] sm:$0xff]
  %v98 = vld [vmem:[%s0 + $0x280] sm:$0xff]
  %v99 = vld [vmem:[%s0 + $0x288] sm:$0xff]
  %v100 = vld [vmem:[%s0 + $0x290] sm:$0xff]
  %v101 = vld [vmem:[%s0 + $0x298] sm:$0xff]
  %v102 = vld [vmem:[%s0 + $0x2a0] sm:$0xff]
  %v103 = vld [vmem:[%s0 + $0x2a8] sm:$0xff]
  %v104 = vld [vmem:[%s0 + $0x2b0] sm:$0xff]
  %v105 = vld [vmem:[%s0 + $0x2b8] sm:$0xff]
  %v106 = vld [vmem:[%s0 + $0x2c0] sm:$0xff]
  %v107 = vld [vmem:[%s0 + $0x2c8] sm:$0xff]
  %v108 = vld [vmem:[%s0 + $0x2d0] sm:$0xff]
  %v109 = vld [vmem:[%s0 + $0x2d8] sm:$0xff]
  %v110 = vld [vmem:[%s0 + $0x2e0] sm:$0xff]
  %v111 = vld [vmem:[%s0 + $0x2e8] sm:$0xff]
  %v112 = vld [vmem:[%s0 + $0x2f0] sm:$0xff]
  %v113 = vld [vmem:[%s0 + $0x2f8] sm:$0xff]
  %v114 = vld [vmem:[%s0 + $0x300] sm:$0xff]
  %v115 = vld [vmem:[%s0 + $0x308] sm:$0xff]
  %v116 = vld [vmem:[%s0 + $0x310] sm:$0xff]
  %v117 = vld [vmem:[%s0 + $0x318] sm:$0xff]
  %v118 = vld [vmem:[%s0 + $0x320] sm:$0xff]
  %v119 = vld [vmem:[%s0 + $0x328] sm:$0xff]
  %v120 = vld [vmem:[%s0 + $0x330] sm:$0xff]
  %v121 = vld [vmem:[%s0 + $0x338] sm:$0xff]
  %v122 = vld [vmem:[%s0 + $0x340] sm:$0xff]
  %v123 = vld [vmem:[%s0 + $0x348] sm:$0xff]
  %v124 = vld [vmem:[%s0 + $0x350] sm:$0xff]
  %v125 = vld [vmem:[%s0 + $0x358] sm:$0xff]
  %v126 = vld [vmem:[%s0 + $0x360] sm:$0xff]
  %v127 = vld [vmem:[%s0 + $0x368] sm:$0xff]
  %v128 = vld [vmem:[%s0 + $0x370] sm:$0xff]
  %v129 = vld [vmem:[%s0 + $0x378] sm:$0xff]
  %v130 = vld [vmem:[%s0 + $0x380] sm:$0xff]
  %v131 = vld [vmem:[%s0 + $0x388] sm:$0xff]
  %v132 = vld [vmem:[%s0 + $0x390] sm:$0xff]
  %v133 = vld [vmem:[%s0 + $0x398] sm:$0xff]
  %v134 = vld [vmem:[%s0 + $0x3a0] sm:$0xff]
  %v135 = vld [vmem:[%s0 + $0x3a8] sm:$0xff]
  %v136 = vld [vmem:[%s0 + $0x3b0] sm:$0xff]
  %v137 = vld [vmem:[%s0 + $0x3b8] sm:$0xff]
  %v138 = vld [vmem:[%s0 + $0x3c0] sm:$0xff]
  %v139 = vld [vmem:[%s0 + $0x3c8] sm:$0xff]
  %v140 = vld [vmem:[%s0 + $0x3d0] sm:$0xff]
  %v141 = vld [vmem:[%s0 + $0x3d8] sm:$0xff]
  %v142 = vld [vmem:[%s0 + $0x3e0] sm:$0xff]
  %v143 = vld [vmem:[%s0 + $0x3e8] sm:$0xff]
  %v144 = vld [vmem:[%s0 + $0x3f0] sm:$0xff]
  %v145 = vld [vmem:[%s0 + $0x3f8] sm:$0xff]
  %v146 = vpack.c.bf16 %v19, %v18
  %v147 = vpack.c.bf16 %v21, %v20
  %v148 = vpack.c.bf16 %v23, %v22
  %v149 = vpack.c.bf16 %v25, %v24
  %v150 = vpack.c.bf16 %v27, %v26
  %v151 = vpack.c.bf16 %v29, %v28
  %v152 = vpack.c.bf16 %v31, %v30
  %v153 = vpack.c.bf16 %v33, %v32
  %v154 = vpack.c.bf16 %v35, %v34
  %v155 = vpack.c.bf16 %v37, %v36
  %v156 = vpack.c.bf16 %v39, %v38
  %v157 = vpack.c.bf16 %v41, %v40
  %v158 = vpack.c.bf16 %v43, %v42
  %v159 = vpack.c.bf16 %v45, %v44
  %v160 = vpack.c.bf16 %v47, %v46
  %v161 = vpack.c.bf16 %v49, %v48
  %v162 = vpack.c.bf16 %v51, %v50
  %v163 = vpack.c.bf16 %v53, %v52
  %v164 = vpack.c.bf16 %v55, %v54
  %v165 = vpack.c.bf16 %v57, %v56
  %v166 = vpack.c.bf16 %v59, %v58
  %v167 = vpack.c.bf16 %v61, %v60
  %v168 = vpack.c.bf16 %v63, %v62
  %v169 = vpack.c.bf16 %v65, %v64
  %v170 = vpack.c.bf16 %v67, %v66
  %v171 = vpack.c.bf16 %v69, %v68
  %v172 = vpack.c.bf16 %v71, %v70
  %v173 = vpack.c.bf16 %v73, %v72
  %v174 = vpack.c.bf16 %v75, %v74
  %v175 = vpack.c.bf16 %v77, %v76
  %v176 = vpack.c.bf16 %v79, %v78
  %v177 = vpack.c.bf16 %v81, %v80
  %v178 = vpack.c.bf16 %v83, %v82
  %v179 = vpack.c.bf16 %v85, %v84
  %v180 = vpack.c.bf16 %v87, %v86
  %v181 = vpack.c.bf16 %v89, %v88
  %v182 = vpack.c.bf16 %v91, %v90
  %v183 = vpack.c.bf16 %v93, %v92
  %v184 = vpack.c.bf16 %v95, %v94
  %v185 = vpack.c.bf16 %v97, %v96
  %v186 = vpack.c.bf16 %v99, %v98
  %v187 = vpack.c.bf16 %v101, %v100
  %v188 = vpack.c.bf16 %v103, %v102
  %v189 = vpack.c.bf16 %v105, %v104
  %v190 = vpack.c.bf16 %v107, %v106
  %v191 = vpack.c.bf16 %v109, %v108
  %v192 = vpack.c.bf16 %v111, %v110
  %v193 = vpack.c.bf16 %v113, %v112
  %v194 = vpack.c.bf16 %v115, %v114
  %v195 = vpack.c.bf16 %v117, %v116
  %v196 = vpack.c.bf16 %v119, %v118
  %v197 = vpack.c.bf16 %v121, %v120
  %v198 = vpack.c.bf16 %v123, %v122
  %v199 = vpack.c.bf16 %v125, %v124
  %v200 = vpack.c.bf16 %v127, %v126
  %v201 = vpack.c.bf16 %v129, %v128
  %v202 = vpack.c.bf16 %v131, %v130
  %v203 = vpack.c.bf16 %v133, %v132
  %v204 = vpack.c.bf16 %v135, %v134
  %v205 = vpack.c.bf16 %v137, %v136
  %v206 = vpack.c.bf16 %v139, %v138
  %v207 = vpack.c.bf16 %v141, %v140
  %v208 = vpack.c.bf16 %v143, %v142
  %v209 = vpack.c.bf16 %v145, %v144
  %v210 = vld [vmem:[%s1] sm:$0xf]
  %v211 = vld [vmem:[%s1 + $0x4] sm:$0xf]
  %v212 = vld [vmem:[%s1 + $0x8] sm:$0xf]
  %v213 = vld [vmem:[%s1 + $0xc] sm:$0xf]
  %v218 = vunpack.c.l.b16 %v210
  %v219 = vunpack.c.l.b16 %v211
  %v220 = vunpack.c.l.b16 %v212
  %v221 = vunpack.c.l.b16 %v213
  %v222 = vpack.c.b16 %v219, %v218
  %v223 = vpack.c.b16 %v221, %v220
  %vm226 = vcmask 261120
  %v228 = vsel %vm226, %v146, 0
  %v231 = vsel %vm226, %v147, 0
  %v234 = vsel %vm226, %v148, 0
  %v237 = vsel %vm226, %v149, 0
  %v240 = vsel %vm226, %v150, 0
  %v243 = vsel %vm226, %v151, 0
  %v246 = vsel %vm226, %v152, 0
  %v249 = vsel %vm226, %v153, 0
  %v252 = vsel %vm226, %v154, 0
  %v255 = vsel %vm226, %v155, 0
  %v258 = vsel %vm226, %v156, 0
  %v261 = vsel %vm226, %v157, 0
  %v264 = vsel %vm226, %v158, 0
  %v267 = vsel %vm226, %v159, 0
  %v270 = vsel %vm226, %v160, 0
  %v273 = vsel %vm226, %v161, 0
  %v276 = vsel %vm226, %v162, 0
  %v279 = vsel %vm226, %v163, 0
  %v282 = vsel %vm226, %v164, 0
  %v285 = vsel %vm226, %v165, 0
  %v288 = vsel %vm226, %v166, 0
  %v291 = vsel %vm226, %v167, 0
  %v294 = vsel %vm226, %v168, 0
  %v297 = vsel %vm226, %v169, 0
  %v300 = vsel %vm226, %v170, 0
  %v303 = vsel %vm226, %v171, 0
  %v306 = vsel %vm226, %v172, 0
  %v309 = vsel %vm226, %v173, 0
  %v312 = vsel %vm226, %v174, 0
  %v315 = vsel %vm226, %v175, 0
  %v318 = vsel %vm226, %v176, 0
  %v321 = vsel %vm226, %v177, 0
  %v324 = vsel %vm226, %v178, 0
  %v327 = vsel %vm226, %v179, 0
  %v330 = vsel %vm226, %v180, 0
  %v333 = vsel %vm226, %v181, 0
  %v336 = vsel %vm226, %v182, 0
  %v339 = vsel %vm226, %v183, 0
  %v342 = vsel %vm226, %v184, 0
  %v345 = vsel %vm226, %v185, 0
  %v348 = vsel %vm226, %v186, 0
  %v351 = vsel %vm226, %v187, 0
  %v354 = vsel %vm226, %v188, 0
  %v357 = vsel %vm226, %v189, 0
  %v360 = vsel %vm226, %v190, 0
  %v363 = vsel %vm226, %v191, 0
  %v366 = vsel %vm226, %v192, 0
  %v369 = vsel %vm226, %v193, 0
  %v372 = vsel %vm226, %v194, 0
  %v375 = vsel %vm226, %v195, 0
  %v378 = vsel %vm226, %v196, 0
  %v381 = vsel %vm226, %v197, 0
  %v384 = vsel %vm226, %v198, 0
  %v387 = vsel %vm226, %v199, 0
  %v390 = vsel %vm226, %v200, 0
  %v393 = vsel %vm226, %v201, 0
  %v396 = vsel %vm226, %v202, 0
  %v399 = vsel %vm226, %v203, 0
  %v402 = vsel %vm226, %v204, 0
  %v405 = vsel %vm226, %v205, 0
  %v408 = vsel %vm226, %v206, 0
  %v411 = vsel %vm226, %v207, 0
  %v414 = vsel %vm226, %v208, 0
  %v417 = vsel %vm226, %v209, 0
  %419 = vmatprep.subr.bf16.mxu0 0
  %420 = vmatpush1.bf16.msra.mxu0 %v222
  %421 = vmatprep.subr.bf16.mxu0 0
  %422 = vmatpush1.bf16.msra.mxu0 %v223
  %423 = vmatprep.subr.bf16.mxu0 0
  %424 = vmatpush1.bf16.msra.mxu0 0
  %425 = vmatprep.subr.bf16.mxu0 0
  %426 = vmatpush1.bf16.msra.mxu0 0
  %427 = vmatprep.subr.bf16.mxu0 0
  %428 = vmatpush1.bf16.msra.mxu0 0
  %429 = vmatprep.subr.bf16.mxu0 0
  %430 = vmatpush1.bf16.msra.mxu0 0
  %431 = vmatprep.subr.bf16.mxu0 0
  %432 = vmatpush1.bf16.msra.mxu0 0
  %433 = vmatprep.subr.bf16.mxu0 0
  %434 = vmatpush1.bf16.msra.mxu0 0
  %435 = vmatprep.subr.bf16.mxu0 0
  %436 = vmatpush1.bf16.msra.mxu0 0
  %437 = vmatprep.subr.bf16.mxu0 0
  %438 = vmatpush1.bf16.msra.mxu0 0
  %439 = vmatprep.subr.bf16.mxu0 0
  %440 = vmatpush1.bf16.msra.mxu0 0
  %441 = vmatprep.subr.bf16.mxu0 0
  %442 = vmatpush1.bf16.msra.mxu0 0
  %443 = vmatprep.subr.bf16.mxu0 0
  %444 = vmatpush1.bf16.msra.mxu0 0
  %445 = vmatprep.subr.bf16.mxu0 0
  %446 = vmatpush1.bf16.msra.mxu0 0
  %447 = vmatprep.subr.bf16.mxu0 0
  %448 = vmatpush1.bf16.msra.mxu0 0
  %449 = vmatprep.subr.bf16.mxu0 0
  %450 = vmatpush1.bf16.msra.mxu0 0
  %451 = vmatprep.mubr.bf16.mxu0 0
  %452 = vmatmul.mubr.bf16.gmra.mrb[0].mxu0 %v228
  %v453 = vpop.f32.mrb[0].mxu0
  %v454 = vadd.f32 0.0, %v453
  %v455 = vpop.f32.mrb[0].mxu0
  %v456 = vpop.f32.mrb[0].mxu0
  %v457 = vadd.f32 0.0, %v456
  %v458 = vpop.f32.mrb[0].mxu0
  %459 = vmatprep.mubr.bf16.mxu0 0
  %460 = vmatmul.mubr.bf16.gmra.mrb[0].mxu0 %v231
  %v461 = vpop.f32.mrb[0].mxu0
  %v462 = vadd.f32 0.0, %v461
  %v463 = vpop.f32.mrb[0].mxu0
  %v464 = vpop.f32.mrb[0].mxu0
  %v465 = vadd.f32 0.0, %v464
  %v466 = vpop.f32.mrb[0].mxu0
  %467 = vmatprep.mubr.bf16.mxu0 0
  %468 = vmatmul.mubr.bf16.gmra.mrb[0].mxu0 %v234
  %v469 = vpop.f32.mrb[0].mxu0
  %v470 = vadd.f32 0.0, %v469
  %v471 = vpop.f32.mrb[0].mxu0
  %v472 = vpop.f32.mrb[0].mxu0
  %v473 = vadd.f32 0.0, %v472
  %v474 = vpop.f32.mrb[0].mxu0
  %475 = vmatprep.mubr.bf16.mxu0 0
  %476 = vmatmul.mubr.bf16.gmra.mrb[0].mxu0 %v237
  %v477 = vpop.f32.mrb[0].mxu0
  %v478 = vadd.f32 0.0, %v477
  %v479 = vpop.f32.mrb[0].mxu0
  %v480 = vpop.f32.mrb[0].mxu0
  %v481 = vadd.f32 0.0, %v480
  %v482 = vpop.f32.mrb[0].mxu0
  %483 = vmatprep.mubr.bf16.mxu0 0
  %484 = vmatmul.mubr.bf16.gmra.mrb[0].mxu0 %v240
  %v485 = vpop.f32.mrb[0].mxu0
  %v486 = vadd.f32 0.0, %v485
  %v487 = vpop.f32.mrb[0].mxu0
  %v488 = vpop.f32.mrb[0].mxu0
  %v489 = vadd.f32 0.0, %v488
  %v490 = vpop.f32.mrb[0].mxu0
  %491 = vmatprep.mubr.bf16.mxu0 0
  %492 = vmatmul.mubr.bf16.gmra.mrb[0].mxu0 %v243
  %v493 = vpop.f32.mrb[0].mxu0
  %v494 = vadd.f32 0.0, %v493
  %v495 = vpop.f32.mrb[0].mxu0
  %v496 = vpop.f32.mrb[0].mxu0
  %v497 = vadd.f32 0.0, %v496
  %v498 = vpop.f32.mrb[0].mxu0
  %499 = vmatprep.mubr.bf16.mxu0 0
  %500 = vmatmul.mubr.bf16.gmra.mrb[0].mxu0 %v246
  %v501 = vpop.f32.mrb[0].mxu0
  %v502 = vadd.f32 0.0, %v501
  %v503 = vpop.f32.mrb[0].mxu0
  %v504 = vpop.f32.mrb[0].mxu0
  %v505 = vadd.f32 0.0, %v504
  %v506 = vpop.f32.mrb[0].mxu0
  %507 = vmatprep.mubr.bf16.mxu0 0
  %508 = vmatmul.mubr.bf16.gmra.mrb[0].mxu0 %v249
  %v509 = vpop.f32.mrb[0].mxu0
  %v510 = vadd.f32 0.0, %v509
  %v511 = vpop.f32.mrb[0].mxu0
  %v512 = vpop.f32.mrb[0].mxu0
  %v513 = vadd.f32 0.0, %v512
  %v514 = vpop.f32.mrb[0].mxu0
  %515 = vmatprep.mubr.bf16.mxu0 0
  %516 = vmatmul.mubr.bf16.gmra.mrb[0].mxu0 %v252
  %v517 = vpop.f32.mrb[0].mxu0
  %v518 = vadd.f32 0.0, %v517
  %v519 = vpop.f32.mrb[0].mxu0
  %v520 = vpop.f32.mrb[0].mxu0
  %v521 = vadd.f32 0.0, %v520
  %v522 = vpop.f32.mrb[0].mxu0
  %523 = vmatprep.mubr.bf16.mxu0 0
  %524 = vmatmul.mubr.bf16.gmra.mrb[0].mxu0 %v255
  %v525 = vpop.f32.mrb[0].mxu0
  %v526 = vadd.f32 0.0, %v525
  %v527 = vpop.f32.mrb[0].mxu0
  %v528 = vpop.f32.mrb[0].mxu0
  %v529 = vadd.f32 0.0, %v528
  %v530 = vpop.f32.mrb[0].mxu0
  %531 = vmatprep.mubr.bf16.mxu0 0
  %532 = vmatmul.mubr.bf16.gmra.mrb[0].mxu0 %v258
  %v533 = vpop.f32.mrb[0].mxu0
  %v534 = vadd.f32 0.0, %v533
  %v535 = vpop.f32.mrb[0].mxu0
  %v536 = vpop.f32.mrb[0].mxu0
  %v537 = vadd.f32 0.0, %v536
  %v538 = vpop.f32.mrb[0].mxu0
  %539 = vmatprep.mubr.bf16.mxu0 0
  %540 = vmatmul.mubr.bf16.gmra.mrb[0].mxu0 %v261
  %v541 = vpop.f32.mrb[0].mxu0
  %v542 = vadd.f32 0.0, %v541
  %v543 = vpop.f32.mrb[0].mxu0
  %v544 = vpop.f32.mrb[0].mxu0
  %v545 = vadd.f32 0.0, %v544
  %v546 = vpop.f32.mrb[0].mxu0
  %547 = vmatprep.mubr.bf16.mxu0 0
  %548 = vmatmul.mubr.bf16.gmra.mrb[0].mxu0 %v264
  %v549 = vpop.f32.mrb[0].mxu0
  %v550 = vadd.f32 0.0, %v549
  %v551 = vpop.f32.mrb[0].mxu0
  %v552 = vpop.f32.mrb[0].mxu0
  %v553 = vadd.f32 0.0, %v552
  %v554 = vpop.f32.mrb[0].mxu0
  %555 = vmatprep.mubr.bf16.mxu0 0
  %556 = vmatmul.mubr.bf16.gmra.mrb[0].mxu0 %v267
  %v557 = vpop.f32.mrb[0].mxu0
  %v558 = vadd.f32 0.0, %v557
  %v559 = vpop.f32.mrb[0].mxu0
  %v560 = vpop.f32.mrb[0].mxu0
  %v561 = vadd.f32 0.0, %v560
  %v562 = vpop.f32.mrb[0].mxu0
  %563 = vmatprep.mubr.bf16.mxu0 0
  %564 = vmatmul.mubr.bf16.gmra.mrb[0].mxu0 %v270
  %v565 = vpop.f32.mrb[0].mxu0
  %v566 = vadd.f32 0.0, %v565
  %v567 = vpop.f32.mrb[0].mxu0
  %v568 = vpop.f32.mrb[0].mxu0
  %v569 = vadd.f32 0.0, %v568
  %v570 = vpop.f32.mrb[0].mxu0
  %571 = vmatprep.mubr.bf16.mxu0 0
  %572 = vmatmul.mubr.bf16.gmra.mrb[0].mxu0 %v273
  %v573 = vpop.f32.mrb[0].mxu0
  %v574 = vadd.f32 0.0, %v573
  %v575 = vpop.f32.mrb[0].mxu0
  %v576 = vpop.f32.mrb[0].mxu0
  %v577 = vadd.f32 0.0, %v576
  %v578 = vpop.f32.mrb[0].mxu0
  %579 = vmatprep.mubr.bf16.mxu0 0
  %580 = vmatmul.mubr.bf16.gmra.mrb[0].mxu0 %v276
  %v581 = vpop.f32.mrb[0].mxu0
  %v582 = vadd.f32 0.0, %v581
  %v583 = vpop.f32.mrb[0].mxu0
  %v584 = vpop.f32.mrb[0].mxu0
  %v585 = vadd.f32 0.0, %v584
  %v586 = vpop.f32.mrb[0].mxu0
  %587 = vmatprep.mubr.bf16.mxu0 0
  %588 = vmatmul.mubr.bf16.gmra.mrb[0].mxu0 %v279
  %v589 = vpop.f32.mrb[0].mxu0
  %v590 = vadd.f32 0.0, %v589
  %v591 = vpop.f32.mrb[0].mxu0
  %v592 = vpop.f32.mrb[0].mxu0
  %v593 = vadd.f32 0.0, %v592
  %v594 = vpop.f32.mrb[0].mxu0
  %595 = vmatprep.mubr.bf16.mxu0 0
  %596 = vmatmul.mubr.bf16.gmra.mrb[0].mxu0 %v282
  %v597 = vpop.f32.mrb[0].mxu0
  %v598 = vadd.f32 0.0, %v597
  %v599 = vpop.f32.mrb[0].mxu0
  %v600 = vpop.f32.mrb[0].mxu0
  %v601 = vadd.f32 0.0, %v600
  %v602 = vpop.f32.mrb[0].mxu0
  %603 = vmatprep.mubr.bf16.mxu0 0
  %604 = vmatmul.mubr.bf16.gmra.mrb[0].mxu0 %v285
  %v605 = vpop.f32.mrb[0].mxu0
  %v606 = vadd.f32 0.0, %v605
  %v607 = vpop.f32.mrb[0].mxu0
  %v608 = vpop.f32.mrb[0].mxu0
  %v609 = vadd.f32 0.0, %v608
  %v610 = vpop.f32.mrb[0].mxu0
  %611 = vmatprep.mubr.bf16.mxu0 0
  %612 = vmatmul.mubr.bf16.gmra.mrb[0].mxu0 %v288
  %v613 = vpop.f32.mrb[0].mxu0
  %v614 = vadd.f32 0.0, %v613
  %v615 = vpop.f32.mrb[0].mxu0
  %v616 = vpop.f32.mrb[0].mxu0
  %v617 = vadd.f32 0.0, %v616
  %v618 = vpop.f32.mrb[0].mxu0
  %619 = vmatprep.mubr.bf16.mxu0 0
  %620 = vmatmul.mubr.bf16.gmra.mrb[0].mxu0 %v291
  %v621 = vpop.f32.mrb[0].mxu0
  %v622 = vadd.f32 0.0, %v621
  %v623 = vpop.f32.mrb[0].mxu0
  %v624 = vpop.f32.mrb[0].mxu0
  %v625 = vadd.f32 0.0, %v624
  %v626 = vpop.f32.mrb[0].mxu0
  %627 = vmatprep.mubr.bf16.mxu0 0
  %628 = vmatmul.mubr.bf16.gmra.mrb[0].mxu0 %v294
  %v629 = vpop.f32.mrb[0].mxu0
  %v630 = vadd.f32 0.0, %v629
  %v631 = vpop.f32.mrb[0].mxu0
  %v632 = vpop.f32.mrb[0].mxu0
  %v633 = vadd.f32 0.0, %v632
  %v634 = vpop.f32.mrb[0].mxu0
  %635 = vmatprep.mubr.bf16.mxu0 0
  %636 = vmatmul.mubr.bf16.gmra.mrb[0].mxu0 %v297
  %v637 = vpop.f32.mrb[0].mxu0
  %v638 = vadd.f32 0.0, %v637
  %v639 = vpop.f32.mrb[0].mxu0
  %v640 = vpop.f32.mrb[0].mxu0
  %v641 = vadd.f32 0.0, %v640
  %v642 = vpop.f32.mrb[0].mxu0
  %643 = vmatprep.mubr.bf16.mxu0 0
  %644 = vmatmul.mubr.bf16.gmra.mrb[0].mxu0 %v300
  %v645 = vpop.f32.mrb[0].mxu0
  %v646 = vadd.f32 0.0, %v645
  %v647 = vpop.f32.mrb[0].mxu0
  %v648 = vpop.f32.mrb[0].mxu0
  %v649 = vadd.f32 0.0, %v648
  %v650 = vpop.f32.mrb[0].mxu0
  %651 = vmatprep.mubr.bf16.mxu0 0
  %652 = vmatmul.mubr.bf16.gmra.mrb[0].mxu0 %v303
  %v653 = vpop.f32.mrb[0].mxu0
  %v654 = vadd.f32 0.0, %v653
  %v655 = vpop.f32.mrb[0].mxu0
  %v656 = vpop.f32.mrb[0].mxu0
  %v657 = vadd.f32 0.0, %v656
  %v658 = vpop.f32.mrb[0].mxu0
  %659 = vmatprep.mubr.bf16.mxu0 0
  %660 = vmatmul.mubr.bf16.gmra.mrb[0].mxu0 %v306
  %v661 = vpop.f32.mrb[0].mxu0
  %v662 = vadd.f32 0.0, %v661
  %v663 = vpop.f32.mrb[0].mxu0
  %v664 = vpop.f32.mrb[0].mxu0
  %v665 = vadd.f32 0.0, %v664
  %v666 = vpop.f32.mrb[0].mxu0
  %667 = vmatprep.mubr.bf16.mxu0 0
  %668 = vmatmul.mubr.bf16.gmra.mrb[0].mxu0 %v309
  %v669 = vpop.f32.mrb[0].mxu0
  %v670 = vadd.f32 0.0, %v669
  %v671 = vpop.f32.mrb[0].mxu0
  %v672 = vpop.f32.mrb[0].mxu0
  %v673 = vadd.f32 0.0, %v672
  %v674 = vpop.f32.mrb[0].mxu0
  %675 = vmatprep.mubr.bf16.mxu0 0
  %676 = vmatmul.mubr.bf16.gmra.mrb[0].mxu0 %v312
  %v677 = vpop.f32.mrb[0].mxu0
  %v678 = vadd.f32 0.0, %v677
  %v679 = vpop.f32.mrb[0].mxu0
  %v680 = vpop.f32.mrb[0].mxu0
  %v681 = vadd.f32 0.0, %v680
  %v682 = vpop.f32.mrb[0].mxu0
  %683 = vmatprep.mubr.bf16.mxu0 0
  %684 = vmatmul.mubr.bf16.gmra.mrb[0].mxu0 %v315
  %v685 = vpop.f32.mrb[0].mxu0
  %v686 = vadd.f32 0.0, %v685
  %v687 = vpop.f32.mrb[0].mxu0
  %v688 = vpop.f32.mrb[0].mxu0
  %v689 = vadd.f32 0.0, %v688
  %v690 = vpop.f32.mrb[0].mxu0
  %691 = vmatprep.mubr.bf16.mxu0 0
  %692 = vmatmul.mubr.bf16.gmra.mrb[0].mxu0 %v318
  %v693 = vpop.f32.mrb[0].mxu0
  %v694 = vadd.f32 0.0, %v693
  %v695 = vpop.f32.mrb[0].mxu0
  %v696 = vpop.f32.mrb[0].mxu0
  %v697 = vadd.f32 0.0, %v696
  %v698 = vpop.f32.mrb[0].mxu0
  %699 = vmatprep.mubr.bf16.mxu0 0
  %700 = vmatmul.mubr.bf16.gmra.mrb[0].mxu0 %v321
  %v701 = vpop.f32.mrb[0].mxu0
  %v702 = vadd.f32 0.0, %v701
  %v703 = vpop.f32.mrb[0].mxu0
  %v704 = vpop.f32.mrb[0].mxu0
  %v705 = vadd.f32 0.0, %v704
  %v706 = vpop.f32.mrb[0].mxu0
  %707 = vmatprep.mubr.bf16.mxu0 0
  %708 = vmatmul.mubr.bf16.gmra.mrb[0].mxu0 %v324
  %v709 = vpop.f32.mrb[0].mxu0
  %v710 = vadd.f32 0.0, %v709
  %v711 = vpop.f32.mrb[0].mxu0
  %v712 = vpop.f32.mrb[0].mxu0
  %v713 = vadd.f32 0.0, %v712
  %v714 = vpop.f32.mrb[0].mxu0
  %715 = vmatprep.mubr.bf16.mxu0 0
  %716 = vmatmul.mubr.bf16.gmra.mrb[0].mxu0 %v327
  %v717 = vpop.f32.mrb[0].mxu0
  %v718 = vadd.f32 0.0, %v717
  %v719 = vpop.f32.mrb[0].mxu0
  %v720 = vpop.f32.mrb[0].mxu0
  %v721 = vadd.f32 0.0, %v720
  %v722 = vpop.f32.mrb[0].mxu0
  %723 = vmatprep.mubr.bf16.mxu0 0
  %724 = vmatmul.mubr.bf16.gmra.mrb[0].mxu0 %v330
  %v725 = vpop.f32.mrb[0].mxu0
  %v726 = vadd.f32 0.0, %v725
  %v727 = vpop.f32.mrb[0].mxu0
  %v728 = vpop.f32.mrb[0].mxu0
  %v729 = vadd.f32 0.0, %v728
  %v730 = vpop.f32.mrb[0].mxu0
  %731 = vmatprep.mubr.bf16.mxu0 0
  %732 = vmatmul.mubr.bf16.gmra.mrb[0].mxu0 %v333
  %v733 = vpop.f32.mrb[0].mxu0
  %v734 = vadd.f32 0.0, %v733
  %v735 = vpop.f32.mrb[0].mxu0
  %v736 = vpop.f32.mrb[0].mxu0
  %v737 = vadd.f32 0.0, %v736
  %v738 = vpop.f32.mrb[0].mxu0
  %739 = vmatprep.mubr.bf16.mxu0 0
  %740 = vmatmul.mubr.bf16.gmra.mrb[0].mxu0 %v336
  %v741 = vpop.f32.mrb[0].mxu0
  %v742 = vadd.f32 0.0, %v741
  %v743 = vpop.f32.mrb[0].mxu0
  %v744 = vpop.f32.mrb[0].mxu0
  %v745 = vadd.f32 0.0, %v744
  %v746 = vpop.f32.mrb[0].mxu0
  %747 = vmatprep.mubr.bf16.mxu0 0
  %748 = vmatmul.mubr.bf16.gmra.mrb[0].mxu0 %v339
  %v749 = vpop.f32.mrb[0].mxu0
  %v750 = vadd.f32 0.0, %v749
  %v751 = vpop.f32.mrb[0].mxu0
  %v752 = vpop.f32.mrb[0].mxu0
  %v753 = vadd.f32 0.0, %v752
  %v754 = vpop.f32.mrb[0].mxu0
  %755 = vmatprep.mubr.bf16.mxu0 0
  %756 = vmatmul.mubr.bf16.gmra.mrb[0].mxu0 %v342
  %v757 = vpop.f32.mrb[0].mxu0
  %v758 = vadd.f32 0.0, %v757
  %v759 = vpop.f32.mrb[0].mxu0
  %v760 = vpop.f32.mrb[0].mxu0
  %v761 = vadd.f32 0.0, %v760
  %v762 = vpop.f32.mrb[0].mxu0
  %763 = vmatprep.mubr.bf16.mxu0 0
  %764 = vmatmul.mubr.bf16.gmra.mrb[0].mxu0 %v345
  %v765 = vpop.f32.mrb[0].mxu0
  %v766 = vadd.f32 0.0, %v765
  %v767 = vpop.f32.mrb[0].mxu0
  %v768 = vpop.f32.mrb[0].mxu0
  %v769 = vadd.f32 0.0, %v768
  %v770 = vpop.f32.mrb[0].mxu0
  %771 = vmatprep.mubr.bf16.mxu0 0
  %772 = vmatmul.mubr.bf16.gmra.mrb[0].mxu0 %v348
  %v773 = vpop.f32.mrb[0].mxu0
  %v774 = vadd.f32 0.0, %v773
  %v775 = vpop.f32.mrb[0].mxu0
  %v776 = vpop.f32.mrb[0].mxu0
  %v777 = vadd.f32 0.0, %v776
  %v778 = vpop.f32.mrb[0].mxu0
  %779 = vmatprep.mubr.bf16.mxu0 0
  %780 = vmatmul.mubr.bf16.gmra.mrb[0].mxu0 %v351
  %v781 = vpop.f32.mrb[0].mxu0
  %v782 = vadd.f32 0.0, %v781
  %v783 = vpop.f32.mrb[0].mxu0
  %v784 = vpop.f32.mrb[0].mxu0
  %v785 = vadd.f32 0.0, %v784
  %v786 = vpop.f32.mrb[0].mxu0
  %787 = vmatprep.mubr.bf16.mxu0 0
  %788 = vmatmul.mubr.bf16.gmra.mrb[0].mxu0 %v354
  %v789 = vpop.f32.mrb[0].mxu0
  %v790 = vadd.f32 0.0, %v789
  %v791 = vpop.f32.mrb[0].mxu0
  %v792 = vpop.f32.mrb[0].mxu0
  %v793 = vadd.f32 0.0, %v792
  %v794 = vpop.f32.mrb[0].mxu0
  %795 = vmatprep.mubr.bf16.mxu0 0
  %796 = vmatmul.mubr.bf16.gmra.mrb[0].mxu0 %v357
  %v797 = vpop.f32.mrb[0].mxu0
  %v798 = vadd.f32 0.0, %v797
  %v799 = vpop.f32.mrb[0].mxu0
  %v800 = vpop.f32.mrb[0].mxu0
  %v801 = vadd.f32 0.0, %v800
  %v802 = vpop.f32.mrb[0].mxu0
  %803 = vmatprep.mubr.bf16.mxu0 0
  %804 = vmatmul.mubr.bf16.gmra.mrb[0].mxu0 %v360
  %v805 = vpop.f32.mrb[0].mxu0
  %v806 = vadd.f32 0.0, %v805
  %v807 = vpop.f32.mrb[0].mxu0
  %v808 = vpop.f32.mrb[0].mxu0
  %v809 = vadd.f32 0.0, %v808
  %v810 = vpop.f32.mrb[0].mxu0
  %811 = vmatprep.mubr.bf16.mxu0 0
  %812 = vmatmul.mubr.bf16.gmra.mrb[0].mxu0 %v363
  %v813 = vpop.f32.mrb[0].mxu0
  %v814 = vadd.f32 0.0, %v813
  %v815 = vpop.f32.mrb[0].mxu0
  %v816 = vpop.f32.mrb[0].mxu0
  %v817 = vadd.f32 0.0, %v816
  %v818 = vpop.f32.mrb[0].mxu0
  %819 = vmatprep.mubr.bf16.mxu0 0
  %820 = vmatmul.mubr.bf16.gmra.mrb[0].mxu0 %v366
  %v821 = vpop.f32.mrb[0].mxu0
  %v822 = vadd.f32 0.0, %v821
  %v823 = vpop.f32.mrb[0].mxu0
  %v824 = vpop.f32.mrb[0].mxu0
  %v825 = vadd.f32 0.0, %v824
  %v826 = vpop.f32.mrb[0].mxu0
  %827 = vmatprep.mubr.bf16.mxu0 0
  %828 = vmatmul.mubr.bf16.gmra.mrb[0].mxu0 %v369
  %v829 = vpop.f32.mrb[0].mxu0
  %v830 = vadd.f32 0.0, %v829
  %v831 = vpop.f32.mrb[0].mxu0
  %v832 = vpop.f32.mrb[0].mxu0
  %v833 = vadd.f32 0.0, %v832
  %v834 = vpop.f32.mrb[0].mxu0
  %835 = vmatprep.mubr.bf16.mxu0 0
  %836 = vmatmul.mubr.bf16.gmra.mrb[0].mxu0 %v372
  %v837 = vpop.f32.mrb[0].mxu0
  %v838 = vadd.f32 0.0, %v837
  %v839 = vpop.f32.mrb[0].mxu0
  %v840 = vpop.f32.mrb[0].mxu0
  %v841 = vadd.f32 0.0, %v840
  %v842 = vpop.f32.mrb[0].mxu0
  %843 = vmatprep.mubr.bf16.mxu0 0
  %844 = vmatmul.mubr.bf16.gmra.mrb[0].mxu0 %v375
  %v845 = vpop.f32.mrb[0].mxu0
  %v846 = vadd.f32 0.0, %v845
  %v847 = vpop.f32.mrb[0].mxu0
  %v848 = vpop.f32.mrb[0].mxu0
  %v849 = vadd.f32 0.0, %v848
  %v850 = vpop.f32.mrb[0].mxu0
  %851 = vmatprep.mubr.bf16.mxu0 0
  %852 = vmatmul.mubr.bf16.gmra.mrb[0].mxu0 %v378
  %v853 = vpop.f32.mrb[0].mxu0
  %v854 = vadd.f32 0.0, %v853
  %v855 = vpop.f32.mrb[0].mxu0
  %v856 = vpop.f32.mrb[0].mxu0
  %v857 = vadd.f32 0.0, %v856
  %v858 = vpop.f32.mrb[0].mxu0
  %859 = vmatprep.mubr.bf16.mxu0 0
  %860 = vmatmul.mubr.bf16.gmra.mrb[0].mxu0 %v381
  %v861 = vpop.f32.mrb[0].mxu0
  %v862 = vadd.f32 0.0, %v861
  %v863 = vpop.f32.mrb[0].mxu0
  %v864 = vpop.f32.mrb[0].mxu0
  %v865 = vadd.f32 0.0, %v864
  %v866 = vpop.f32.mrb[0].mxu0
  %867 = vmatprep.mubr.bf16.mxu0 0
  %868 = vmatmul.mubr.bf16.gmra.mrb[0].mxu0 %v384
  %v869 = vpop.f32.mrb[0].mxu0
  %v870 = vadd.f32 0.0, %v869
  %v871 = vpop.f32.mrb[0].mxu0
  %v872 = vpop.f32.mrb[0].mxu0
  %v873 = vadd.f32 0.0, %v872
  %v874 = vpop.f32.mrb[0].mxu0
  %875 = vmatprep.mubr.bf16.mxu0 0
  %876 = vmatmul.mubr.bf16.gmra.mrb[0].mxu0 %v387
  %v877 = vpop.f32.mrb[0].mxu0
  %v878 = vadd.f32 0.0, %v877
  %v879 = vpop.f32.mrb[0].mxu0
  %v880 = vpop.f32.mrb[0].mxu0
  %v881 = vadd.f32 0.0, %v880
  %v882 = vpop.f32.mrb[0].mxu0
  %883 = vmatprep.mubr.bf16.mxu0 0
  %884 = vmatmul.mubr.bf16.gmra.mrb[0].mxu0 %v390
  %v885 = vpop.f32.mrb[0].mxu0
  %v886 = vadd.f32 0.0, %v885
  %v887 = vpop.f32.mrb[0].mxu0
  %v888 = vpop.f32.mrb[0].mxu0
  %v889 = vadd.f32 0.0, %v888
  %v890 = vpop.f32.mrb[0].mxu0
  %891 = vmatprep.mubr.bf16.mxu0 0
  %892 = vmatmul.mubr.bf16.gmra.mrb[0].mxu0 %v393
  %v893 = vpop.f32.mrb[0].mxu0
  %v894 = vadd.f32 0.0, %v893
  %v895 = vpop.f32.mrb[0].mxu0
  %v896 = vpop.f32.mrb[0].mxu0
  %v897 = vadd.f32 0.0, %v896
  %v898 = vpop.f32.mrb[0].mxu0
  %899 = vmatprep.mubr.bf16.mxu0 0
  %900 = vmatmul.mubr.bf16.gmra.mrb[0].mxu0 %v396
  %v901 = vpop.f32.mrb[0].mxu0
  %v902 = vadd.f32 0.0, %v901
  %v903 = vpop.f32.mrb[0].mxu0
  %v904 = vpop.f32.mrb[0].mxu0
  %v905 = vadd.f32 0.0, %v904
  %v906 = vpop.f32.mrb[0].mxu0
  %907 = vmatprep.mubr.bf16.mxu0 0
  %908 = vmatmul.mubr.bf16.gmra.mrb[0].mxu0 %v399
  %v909 = vpop.f32.mrb[0].mxu0
  %v910 = vadd.f32 0.0, %v909
  %v911 = vpop.f32.mrb[0].mxu0
  %v912 = vpop.f32.mrb[0].mxu0
  %v913 = vadd.f32 0.0, %v912
  %v914 = vpop.f32.mrb[0].mxu0
  %915 = vmatprep.mubr.bf16.mxu0 0
  %916 = vmatmul.mubr.bf16.gmra.mrb[0].mxu0 %v402
  %v917 = vpop.f32.mrb[0].mxu0
  %v918 = vadd.f32 0.0, %v917
  %v919 = vpop.f32.mrb[0].mxu0
  %v920 = vpop.f32.mrb[0].mxu0
  %v921 = vadd.f32 0.0, %v920
  %v922 = vpop.f32.mrb[0].mxu0
  %923 = vmatprep.mubr.bf16.mxu0 0
  %924 = vmatmul.mubr.bf16.gmra.mrb[0].mxu0 %v405
  %v925 = vpop.f32.mrb[0].mxu0
  %v926 = vadd.f32 0.0, %v925
  %v927 = vpop.f32.mrb[0].mxu0
  %v928 = vpop.f32.mrb[0].mxu0
  %v929 = vadd.f32 0.0, %v928
  %v930 = vpop.f32.mrb[0].mxu0
  %931 = vmatprep.mubr.bf16.mxu0 0
  %932 = vmatmul.mubr.bf16.gmra.mrb[0].mxu0 %v408
  %v933 = vpop.f32.mrb[0].mxu0
  %v934 = vadd.f32 0.0, %v933
  %v935 = vpop.f32.mrb[0].mxu0
  %v936 = vpop.f32.mrb[0].mxu0
  %v937 = vadd.f32 0.0, %v936
  %v938 = vpop.f32.mrb[0].mxu0
  %939 = vmatprep.mubr.bf16.mxu0 0
  %940 = vmatmul.mubr.bf16.gmra.mrb[0].mxu0 %v411
  %v941 = vpop.f32.mrb[0].mxu0
  %v942 = vadd.f32 0.0, %v941
  %v943 = vpop.f32.mrb[0].mxu0
  %v944 = vpop.f32.mrb[0].mxu0
  %v945 = vadd.f32 0.0, %v944
  %v946 = vpop.f32.mrb[0].mxu0
  %947 = vmatprep.mubr.bf16.mxu0 0
  %948 = vmatmul.mubr.bf16.gmra.mrb[0].mxu0 %v414
  %v949 = vpop.f32.mrb[0].mxu0
  %v950 = vadd.f32 0.0, %v949
  %v951 = vpop.f32.mrb[0].mxu0
  %v952 = vpop.f32.mrb[0].mxu0
  %v953 = vadd.f32 0.0, %v952
  %v954 = vpop.f32.mrb[0].mxu0
  %955 = vmatprep.mubr.bf16.mxu0 0
  %956 = vmatmul.mubr.bf16.gmra.mrb[0].mxu0 %v417
  %v957 = vpop.f32.mrb[0].mxu0
  %v958 = vadd.f32 0.0, %v957
  %v959 = vpop.f32.mrb[0].mxu0
  %v960 = vpop.f32.mrb[0].mxu0
  %v961 = vadd.f32 0.0, %v960
  %v962 = vpop.f32.mrb[0].mxu0
  %963 = vdwg.mxu0
  %v964 = vld [vmem:[%s2] sm:$0x1]
  %v966 = vlaneseq
  %v967 = vshrl.u32 %v966, 7
  %v968 = vsub.s32 0, %v967
  %v969 = vrot.slane %v964, %v968
  %v971 = vmul.f32 %v454, %v969
  %v972 = vmul.f32 %v457, %v969
  %v973 = vmul.f32 %v462, %v969
  %v974 = vmul.f32 %v465, %v969
  %v975 = vmul.f32 %v470, %v969
  %v976 = vmul.f32 %v473, %v969
  %v977 = vmul.f32 %v478, %v969
  %v978 = vmul.f32 %v481, %v969
  %v979 = vmul.f32 %v486, %v969
  %v980 = vmul.f32 %v489, %v969
  %v981 = vmul.f32 %v494, %v969
  %v982 = vmul.f32 %v497, %v969
  %v983 = vmul.f32 %v502, %v969
  %v984 = vmul.f32 %v505, %v969
  %v985 = vmul.f32 %v510, %v969
  %v986 = vmul.f32 %v513, %v969
  %v987 = vmul.f32 %v518, %v969
  %v988 = vmul.f32 %v521, %v969
  %v989 = vmul.f32 %v526, %v969
  %v990 = vmul.f32 %v529, %v969
  %v991 = vmul.f32 %v534, %v969
  %v992 = vmul.f32 %v537, %v969
  %v993 = vmul.f32 %v542, %v969
  %v994 = vmul.f32 %v545, %v969
  %v995 = vmul.f32 %v550, %v969
  %v996 = vmul.f32 %v553, %v969
  %v997 = vmul.f32 %v558, %v969
  %v998 = vmul.f32 %v561, %v969
  %v999 = vmul.f32 %v566, %v969
  %v1000 = vmul.f32 %v569, %v969
  %v1001 = vmul.f32 %v574, %v969
  %v1002 = vmul.f32 %v577, %v969
  %v1003 = vmul.f32 %v582, %v969
  %v1004 = vmul.f32 %v585, %v969
  %v1005 = vmul.f32 %v590, %v969
  %v1006 = vmul.f32 %v593, %v969
  %v1007 = vmul.f32 %v598, %v969
  %v1008 = vmul.f32 %v601, %v969
  %v1009 = vmul.f32 %v606, %v969
  %v1010 = vmul.f32 %v609, %v969
  %v1011 = vmul.f32 %v614, %v969
  %v1012 = vmul.f32 %v617, %v969
  %v1013 = vmul.f32 %v622, %v969
  %v1014 = vmul.f32 %v625, %v969
  %v1015 = vmul.f32 %v630, %v969
  %v1016 = vmul.f32 %v633, %v969
  %v1017 = vmul.f32 %v638, %v969
  %v1018 = vmul.f32 %v641, %v969
  %v1019 = vmul.f32 %v646, %v969
  %v1020 = vmul.f32 %v649, %v969
  %v1021 = vmul.f32 %v654, %v969
  %v1022 = vmul.f32 %v657, %v969
  %v1023 = vmul.f32 %v662, %v969
  %v1024 = vmul.f32 %v665, %v969
  %v1025 = vmul.f32 %v670, %v969
  %v1026 = vmul.f32 %v673, %v969
  %v1027 = vmul.f32 %v678, %v969
  %v1028 = vmul.f32 %v681, %v969
  %v1029 = vmul.f32 %v686, %v969
  %v1030 = vmul.f32 %v689, %v969
  %v1031 = vmul.f32 %v694, %v969
  %v1032 = vmul.f32 %v697, %v969
  %v1033 = vmul.f32 %v702, %v969
  %v1034 = vmul.f32 %v705, %v969
  %v1035 = vmul.f32 %v710, %v969
  %v1036 = vmul.f32 %v713, %v969
  %v1037 = vmul.f32 %v718, %v969
  %v1038 = vmul.f32 %v721, %v969
  %v1039 = vmul.f32 %v726, %v969
  %v1040 = vmul.f32 %v729, %v969
  %v1041 = vmul.f32 %v734, %v969
  %v1042 = vmul.f32 %v737, %v969
  %v1043 = vmul.f32 %v742, %v969
  %v1044 = vmul.f32 %v745, %v969
  %v1045 = vmul.f32 %v750, %v969
  %v1046 = vmul.f32 %v753, %v969
  %v1047 = vmul.f32 %v758, %v969
  %v1048 = vmul.f32 %v761, %v969
  %v1049 = vmul.f32 %v766, %v969
  %v1050 = vmul.f32 %v769, %v969
  %v1051 = vmul.f32 %v774, %v969
  %v1052 = vmul.f32 %v777, %v969
  %v1053 = vmul.f32 %v782, %v969
  %v1054 = vmul.f32 %v785, %v969
  %v1055 = vmul.f32 %v790, %v969
  %v1056 = vmul.f32 %v793, %v969
  %v1057 = vmul.f32 %v798, %v969
  %v1058 = vmul.f32 %v801, %v969
  %v1059 = vmul.f32 %v806, %v969
  %v1060 = vmul.f32 %v809, %v969
  %v1061 = vmul.f32 %v814, %v969
  %v1062 = vmul.f32 %v817, %v969
  %v1063 = vmul.f32 %v822, %v969
  %v1064 = vmul.f32 %v825, %v969
  %v1065 = vmul.f32 %v830, %v969
  %v1066 = vmul.f32 %v833, %v969
  %v1067 = vmul.f32 %v838, %v969
  %v1068 = vmul.f32 %v841, %v969
  %v1069 = vmul.f32 %v846, %v969
  %v1070 = vmul.f32 %v849, %v969
  %v1071 = vmul.f32 %v854, %v969
  %v1072 = vmul.f32 %v857, %v969
  %v1073 = vmul.f32 %v862, %v969
  %v1074 = vmul.f32 %v865, %v969
  %v1075 = vmul.f32 %v870, %v969
  %v1076 = vmul.f32 %v873, %v969
  %v1077 = vmul.f32 %v878, %v969
  %v1078 = vmul.f32 %v881, %v969
  %v1079 = vmul.f32 %v886, %v969
  %v1080 = vmul.f32 %v889, %v969
  %v1081 = vmul.f32 %v894, %v969
  %v1082 = vmul.f32 %v897, %v969
  %v1083 = vmul.f32 %v902, %v969
  %v1084 = vmul.f32 %v905, %v969
  %v1085 = vmul.f32 %v910, %v969
  %v1086 = vmul.f32 %v913, %v969
  %v1087 = vmul.f32 %v918, %v969
  %v1088 = vmul.f32 %v921, %v969
  %v1089 = vmul.f32 %v926, %v969
  %v1090 = vmul.f32 %v929, %v969
  %v1091 = vmul.f32 %v934, %v969
  %v1092 = vmul.f32 %v937, %v969
  %v1093 = vmul.f32 %v942, %v969
  %v1094 = vmul.f32 %v945, %v969
  %v1095 = vmul.f32 %v950, %v969
  %v1096 = vmul.f32 %v953, %v969
  %v1097 = vmul.f32 %v958, %v969
  %v1098 = vmul.f32 %v961, %v969
  %v1099 = vld [vmem:[%s3] sm:$0x1]
  %v1101 = vlaneseq
  %v1102 = vshrl.u32 %v1101, 7
  %v1103 = vsub.s32 0, %v1102
  %v1104 = vrot.slane %v1099, %v1103
  %v1106 = vadd.f32 %v971, %v1104
  %v1107 = vadd.f32 %v972, %v1104
  %v1108 = vadd.f32 %v973, %v1104
  %v1109 = vadd.f32 %v974, %v1104
  %v1110 = vadd.f32 %v975, %v1104
  %v1111 = vadd.f32 %v976, %v1104
  %v1112 = vadd.f32 %v977, %v1104
  %v1113 = vadd.f32 %v978, %v1104
  %v1114 = vadd.f32 %v979, %v1104
  %v1115 = vadd.f32 %v980, %v1104
  %v1116 = vadd.f32 %v981, %v1104
  %v1117 = vadd.f32 %v982, %v1104
  %v1118 = vadd.f32 %v983, %v1104
  %v1119 = vadd.f32 %v984, %v1104
  %v1120 = vadd.f32 %v985, %v1104
  %v1121 = vadd.f32 %v986, %v1104
  %v1122 = vadd.f32 %v987, %v1104
  %v1123 = vadd.f32 %v988, %v1104
  %v1124 = vadd.f32 %v989, %v1104
  %v1125 = vadd.f32 %v990, %v1104
  %v1126 = vadd.f32 %v991, %v1104
  %v1127 = vadd.f32 %v992, %v1104
  %v1128 = vadd.f32 %v993, %v1104
  %v1129 = vadd.f32 %v994, %v1104
  %v1130 = vadd.f32 %v995, %v1104
  %v1131 = vadd.f32 %v996, %v1104
  %v1132 = vadd.f32 %v997, %v1104
  %v1133 = vadd.f32 %v998, %v1104
  %v1134 = vadd.f32 %v999, %v1104
  %v1135 = vadd.f32 %v1000, %v1104
  %v1136 = vadd.f32 %v1001, %v1104
  %v1137 = vadd.f32 %v1002, %v1104
  %v1138 = vadd.f32 %v1003, %v1104
  %v1139 = vadd.f32 %v1004, %v1104
  %v1140 = vadd.f32 %v1005, %v1104
  %v1141 = vadd.f32 %v1006, %v1104
  %v1142 = vadd.f32 %v1007, %v1104
  %v1143 = vadd.f32 %v1008, %v1104
  %v1144 = vadd.f32 %v1009, %v1104
  %v1145 = vadd.f32 %v1010, %v1104
  %v1146 = vadd.f32 %v1011, %v1104
  %v1147 = vadd.f32 %v1012, %v1104
  %v1148 = vadd.f32 %v1013, %v1104
  %v1149 = vadd.f32 %v1014, %v1104
  %v1150 = vadd.f32 %v1015, %v1104
  %v1151 = vadd.f32 %v1016, %v1104
  %v1152 = vadd.f32 %v1017, %v1104
  %v1153 = vadd.f32 %v1018, %v1104
  %v1154 = vadd.f32 %v1019, %v1104
  %v1155 = vadd.f32 %v1020, %v1104
  %v1156 = vadd.f32 %v1021, %v1104
  %v1157 = vadd.f32 %v1022, %v1104
  %v1158 = vadd.f32 %v1023, %v1104
  %v1159 = vadd.f32 %v1024, %v1104
  %v1160 = vadd.f32 %v1025, %v1104
  %v1161 = vadd.f32 %v1026, %v1104
  %v1162 = vadd.f32 %v1027, %v1104
  %v1163 = vadd.f32 %v1028, %v1104
  %v1164 = vadd.f32 %v1029, %v1104
  %v1165 = vadd.f32 %v1030, %v1104
  %v1166 = vadd.f32 %v1031, %v1104
  %v1167 = vadd.f32 %v1032, %v1104
  %v1168 = vadd.f32 %v1033, %v1104
  %v1169 = vadd.f32 %v1034, %v1104
  %v1170 = vadd.f32 %v1035, %v1104
  %v1171 = vadd.f32 %v1036, %v1104
  %v1172 = vadd.f32 %v1037, %v1104
  %v1173 = vadd.f32 %v1038, %v1104
  %v1174 = vadd.f32 %v1039, %v1104
  %v1175 = vadd.f32 %v1040, %v1104
  %v1176 = vadd.f32 %v1041, %v1104
  %v1177 = vadd.f32 %v1042, %v1104
  %v1178 = vadd.f32 %v1043, %v1104
  %v1179 = vadd.f32 %v1044, %v1104
  %v1180 = vadd.f32 %v1045, %v1104
  %v1181 = vadd.f32 %v1046, %v1104
  %v1182 = vadd.f32 %v1047, %v1104
  %v1183 = vadd.f32 %v1048, %v1104
  %v1184 = vadd.f32 %v1049, %v1104
  %v1185 = vadd.f32 %v1050, %v1104
  %v1186 = vadd.f32 %v1051, %v1104
  %v1187 = vadd.f32 %v1052, %v1104
  %v1188 = vadd.f32 %v1053, %v1104
  %v1189 = vadd.f32 %v1054, %v1104
  %v1190 = vadd.f32 %v1055, %v1104
  %v1191 = vadd.f32 %v1056, %v1104
  %v1192 = vadd.f32 %v1057, %v1104
  %v1193 = vadd.f32 %v1058, %v1104
  %v1194 = vadd.f32 %v1059, %v1104
  %v1195 = vadd.f32 %v1060, %v1104
  %v1196 = vadd.f32 %v1061, %v1104
  %v1197 = vadd.f32 %v1062, %v1104
  %v1198 = vadd.f32 %v1063, %v1104
  %v1199 = vadd.f32 %v1064, %v1104
  %v1200 = vadd.f32 %v1065, %v1104
  %v1201 = vadd.f32 %v1066, %v1104
  %v1202 = vadd.f32 %v1067, %v1104
  %v1203 = vadd.f32 %v1068, %v1104
  %v1204 = vadd.f32 %v1069, %v1104
  %v1205 = vadd.f32 %v1070, %v1104
  %v1206 = vadd.f32 %v1071, %v1104
  %v1207 = vadd.f32 %v1072, %v1104
  %v1208 = vadd.f32 %v1073, %v1104
  %v1209 = vadd.f32 %v1074, %v1104
  %v1210 = vadd.f32 %v1075, %v1104
  %v1211 = vadd.f32 %v1076, %v1104
  %v1212 = vadd.f32 %v1077, %v1104
  %v1213 = vadd.f32 %v1078, %v1104
  %v1214 = vadd.f32 %v1079, %v1104
  %v1215 = vadd.f32 %v1080, %v1104
  %v1216 = vadd.f32 %v1081, %v1104
  %v1217 = vadd.f32 %v1082, %v1104
  %v1218 = vadd.f32 %v1083, %v1104
  %v1219 = vadd.f32 %v1084, %v1104
  %v1220 = vadd.f32 %v1085, %v1104
  %v1221 = vadd.f32 %v1086, %v1104
  %v1222 = vadd.f32 %v1087, %v1104
  %v1223 = vadd.f32 %v1088, %v1104
  %v1224 = vadd.f32 %v1089, %v1104
  %v1225 = vadd.f32 %v1090, %v1104
  %v1226 = vadd.f32 %v1091, %v1104
  %v1227 = vadd.f32 %v1092, %v1104
  %v1228 = vadd.f32 %v1093, %v1104
  %v1229 = vadd.f32 %v1094, %v1104
  %v1230 = vadd.f32 %v1095, %v1104
  %v1231 = vadd.f32 %v1096, %v1104
  %v1232 = vadd.f32 %v1097, %v1104
  %v1233 = vadd.f32 %v1098, %v1104
  %v1234 = vmax.f32 %v1106, 0.0
  %v1235 = vmax.f32 %v1107, 0.0
  %v1236 = vmax.f32 %v1108, 0.0
  %v1237 = vmax.f32 %v1109, 0.0
  %v1238 = vmax.f32 %v1110, 0.0
  %v1239 = vmax.f32 %v1111, 0.0
  %v1240 = vmax.f32 %v1112, 0.0
  %v1241 = vmax.f32 %v1113, 0.0
  %v1242 = vmax.f32 %v1114, 0.0
  %v1243 = vmax.f32 %v1115, 0.0
  %v1244 = vmax.f32 %v1116, 0.0
  %v1245 = vmax.f32 %v1117, 0.0
  %v1246 = vmax.f32 %v1118, 0.0
  %v1247 = vmax.f32 %v1119, 0.0
  %v1248 = vmax.f32 %v1120, 0.0
  %v1249 = vmax.f32 %v1121, 0.0
  %v1250 = vmax.f32 %v1122, 0.0
  %v1251 = vmax.f32 %v1123, 0.0
  %v1252 = vmax.f32 %v1124, 0.0
  %v1253 = vmax.f32 %v1125, 0.0
  %v1254 = vmax.f32 %v1126, 0.0
  %v1255 = vmax.f32 %v1127, 0.0
  %v1256 = vmax.f32 %v1128, 0.0
  %v1257 = vmax.f32 %v1129, 0.0
  %v1258 = vmax.f32 %v1130, 0.0
  %v1259 = vmax.f32 %v1131, 0.0
  %v1260 = vmax.f32 %v1132, 0.0
  %v1261 = vmax.f32 %v1133, 0.0
  %v1262 = vmax.f32 %v1134, 0.0
  %v1263 = vmax.f32 %v1135, 0.0
  %v1264 = vmax.f32 %v1136, 0.0
  %v1265 = vmax.f32 %v1137, 0.0
  %v1266 = vmax.f32 %v1138, 0.0
  %v1267 = vmax.f32 %v1139, 0.0
  %v1268 = vmax.f32 %v1140, 0.0
  %v1269 = vmax.f32 %v1141, 0.0
  %v1270 = vmax.f32 %v1142, 0.0
  %v1271 = vmax.f32 %v1143, 0.0
  %v1272 = vmax.f32 %v1144, 0.0
  %v1273 = vmax.f32 %v1145, 0.0
  %v1274 = vmax.f32 %v1146, 0.0
  %v1275 = vmax.f32 %v1147, 0.0
  %v1276 = vmax.f32 %v1148, 0.0
  %v1277 = vmax.f32 %v1149, 0.0
  %v1278 = vmax.f32 %v1150, 0.0
  %v1279 = vmax.f32 %v1151, 0.0
  %v1280 = vmax.f32 %v1152, 0.0
  %v1281 = vmax.f32 %v1153, 0.0
  %v1282 = vmax.f32 %v1154, 0.0
  %v1283 = vmax.f32 %v1155, 0.0
  %v1284 = vmax.f32 %v1156, 0.0
  %v1285 = vmax.f32 %v1157, 0.0
  %v1286 = vmax.f32 %v1158, 0.0
  %v1287 = vmax.f32 %v1159, 0.0
  %v1288 = vmax.f32 %v1160, 0.0
  %v1289 = vmax.f32 %v1161, 0.0
  %v1290 = vmax.f32 %v1162, 0.0
  %v1291 = vmax.f32 %v1163, 0.0
  %v1292 = vmax.f32 %v1164, 0.0
  %v1293 = vmax.f32 %v1165, 0.0
  %v1294 = vmax.f32 %v1166, 0.0
  %v1295 = vmax.f32 %v1167, 0.0
  %v1296 = vmax.f32 %v1168, 0.0
  %v1297 = vmax.f32 %v1169, 0.0
  %v1298 = vmax.f32 %v1170, 0.0
  %v1299 = vmax.f32 %v1171, 0.0
  %v1300 = vmax.f32 %v1172, 0.0
  %v1301 = vmax.f32 %v1173, 0.0
  %v1302 = vmax.f32 %v1174, 0.0
  %v1303 = vmax.f32 %v1175, 0.0
  %v1304 = vmax.f32 %v1176, 0.0
  %v1305 = vmax.f32 %v1177, 0.0
  %v1306 = vmax.f32 %v1178, 0.0
  %v1307 = vmax.f32 %v1179, 0.0
  %v1308 = vmax.f32 %v1180, 0.0
  %v1309 = vmax.f32 %v1181, 0.0
  %v1310 = vmax.f32 %v1182, 0.0
  %v1311 = vmax.f32 %v1183, 0.0
  %v1312 = vmax.f32 %v1184, 0.0
  %v1313 = vmax.f32 %v1185, 0.0
  %v1314 = vmax.f32 %v1186, 0.0
  %v1315 = vmax.f32 %v1187, 0.0
  %v1316 = vmax.f32 %v1188, 0.0
  %v1317 = vmax.f32 %v1189, 0.0
  %v1318 = vmax.f32 %v1190, 0.0
  %v1319 = vmax.f32 %v1191, 0.0
  %v1320 = vmax.f32 %v1192, 0.0
  %v1321 = vmax.f32 %v1193, 0.0
  %v1322 = vmax.f32 %v1194, 0.0
  %v1323 = vmax.f32 %v1195, 0.0
  %v1324 = vmax.f32 %v1196, 0.0
  %v1325 = vmax.f32 %v1197, 0.0
  %v1326 = vmax.f32 %v1198, 0.0
  %v1327 = vmax.f32 %v1199, 0.0
  %v1328 = vmax.f32 %v1200, 0.0
  %v1329 = vmax.f32 %v1201, 0.0
  %v1330 = vmax.f32 %v1202, 0.0
  %v1331 = vmax.f32 %v1203, 0.0
  %v1332 = vmax.f32 %v1204, 0.0
  %v1333 = vmax.f32 %v1205, 0.0
  %v1334 = vmax.f32 %v1206, 0.0
  %v1335 = vmax.f32 %v1207, 0.0
  %v1336 = vmax.f32 %v1208, 0.0
  %v1337 = vmax.f32 %v1209, 0.0
  %v1338 = vmax.f32 %v1210, 0.0
  %v1339 = vmax.f32 %v1211, 0.0
  %v1340 = vmax.f32 %v1212, 0.0
  %v1341 = vmax.f32 %v1213, 0.0
  %v1342 = vmax.f32 %v1214, 0.0
  %v1343 = vmax.f32 %v1215, 0.0
  %v1344 = vmax.f32 %v1216, 0.0
  %v1345 = vmax.f32 %v1217, 0.0
  %v1346 = vmax.f32 %v1218, 0.0
  %v1347 = vmax.f32 %v1219, 0.0
  %v1348 = vmax.f32 %v1220, 0.0
  %v1349 = vmax.f32 %v1221, 0.0
  %v1350 = vmax.f32 %v1222, 0.0
  %v1351 = vmax.f32 %v1223, 0.0
  %v1352 = vmax.f32 %v1224, 0.0
  %v1353 = vmax.f32 %v1225, 0.0
  %v1354 = vmax.f32 %v1226, 0.0
  %v1355 = vmax.f32 %v1227, 0.0
  %v1356 = vmax.f32 %v1228, 0.0
  %v1357 = vmax.f32 %v1229, 0.0
  %v1358 = vmax.f32 %v1230, 0.0
  %v1359 = vmax.f32 %v1231, 0.0
  %v1360 = vmax.f32 %v1232, 0.0
  %v1361 = vmax.f32 %v1233, 0.0
  %vm1362 = vcmask 523264
  %1363 = vst.msk [vmem:[#allocation2] sm:$0xff] %vm1362, %v1234
  %1364 = vst.msk [vmem:[#allocation2 + $0x8] sm:$0xff] %vm1362, %v1235
  %1365 = vst.msk [vmem:[#allocation2 + $0x10] sm:$0xff] %vm1362, %v1236
  %1366 = vst.msk [vmem:[#allocation2 + $0x18] sm:$0xff] %vm1362, %v1237
  %1367 = vst.msk [vmem:[#allocation2 + $0x20] sm:$0xff] %vm1362, %v1238
  %1368 = vst.msk [vmem:[#allocation2 + $0x28] sm:$0xff] %vm1362, %v1239
  %1369 = vst.msk [vmem:[#allocation2 + $0x30] sm:$0xff] %vm1362, %v1240
  %1370 = vst.msk [vmem:[#allocation2 + $0x38] sm:$0xff] %vm1362, %v1241
  %1371 = vst.msk [vmem:[#allocation2 + $0x40] sm:$0xff] %vm1362, %v1242
  %1372 = vst.msk [vmem:[#allocation2 + $0x48] sm:$0xff] %vm1362, %v1243
  %1373 = vst.msk [vmem:[#allocation2 + $0x50] sm:$0xff] %vm1362, %v1244
  %1374 = vst.msk [vmem:[#allocation2 + $0x58] sm:$0xff] %vm1362, %v1245
  %1375 = vst.msk [vmem:[#allocation2 + $0x60] sm:$0xff] %vm1362, %v1246
  %1376 = vst.msk [vmem:[#allocation2 + $0x68] sm:$0xff] %vm1362, %v1247
  %1377 = vst.msk [vmem:[#allocation2 + $0x70] sm:$0xff] %vm1362, %v1248
  %1378 = vst.msk [vmem:[#allocation2 + $0x78] sm:$0xff] %vm1362, %v1249
  %1379 = vst.msk [vmem:[#allocation2 + $0x80] sm:$0xff] %vm1362, %v1250
  %1380 = vst.msk [vmem:[#allocation2 + $0x88] sm:$0xff] %vm1362, %v1251
  %1381 = vst.msk [vmem:[#allocation2 + $0x90] sm:$0xff] %vm1362, %v1252
  %1382 = vst.msk [vmem:[#allocation2 + $0x98] sm:$0xff] %vm1362, %v1253
  %1383 = vst.msk [vmem:[#allocation2 + $0xa0] sm:$0xff] %vm1362, %v1254
  %1384 = vst.msk [vmem:[#allocation2 + $0xa8] sm:$0xff] %vm1362, %v1255
  %1385 = vst.msk [vmem:[#allocation2 + $0xb0] sm:$0xff] %vm1362, %v1256
  %1386 = vst.msk [vmem:[#allocation2 + $0xb8] sm:$0xff] %vm1362, %v1257
  %1387 = vst.msk [vmem:[#allocation2 + $0xc0] sm:$0xff] %vm1362, %v1258
  %1388 = vst.msk [vmem:[#allocation2 + $0xc8] sm:$0xff] %vm1362, %v1259
  %1389 = vst.msk [vmem:[#allocation2 + $0xd0] sm:$0xff] %vm1362, %v1260
  %1390 = vst.msk [vmem:[#allocation2 + $0xd8] sm:$0xff] %vm1362, %v1261
  %1391 = vst.msk [vmem:[#allocation2 + $0xe0] sm:$0xff] %vm1362, %v1262
  %1392 = vst.msk [vmem:[#allocation2 + $0xe8] sm:$0xff] %vm1362, %v1263
  %1393 = vst.msk [vmem:[#allocation2 + $0xf0] sm:$0xff] %vm1362, %v1264
  %1394 = vst.msk [vmem:[#allocation2 + $0xf8] sm:$0xff] %vm1362, %v1265
  %1395 = vst.msk [vmem:[#allocation2 + $0x100] sm:$0xff] %vm1362, %v1266
  %1396 = vst.msk [vmem:[#allocation2 + $0x108] sm:$0xff] %vm1362, %v1267
  %1397 = vst.msk [vmem:[#allocation2 + $0x110] sm:$0xff] %vm1362, %v1268
  %1398 = vst.msk [vmem:[#allocation2 + $0x118] sm:$0xff] %vm1362, %v1269
  %1399 = vst.msk [vmem:[#allocation2 + $0x120] sm:$0xff] %vm1362, %v1270
  %1400 = vst.msk [vmem:[#allocation2 + $0x128] sm:$0xff] %vm1362, %v1271
  %1401 = vst.msk [vmem:[#allocation2 + $0x130] sm:$0xff] %vm1362, %v1272
  %1402 = vst.msk [vmem:[#allocation2 + $0x138] sm:$0xff] %vm1362, %v1273
  %1403 = vst.msk [vmem:[#allocation2 + $0x140] sm:$0xff] %vm1362, %v1274
  %1404 = vst.msk [vmem:[#allocation2 + $0x148] sm:$0xff] %vm1362, %v1275
  %1405 = vst.msk [vmem:[#allocation2 + $0x150] sm:$0xff] %vm1362, %v1276
  %1406 = vst.msk [vmem:[#allocation2 + $0x158] sm:$0xff] %vm1362, %v1277
  %1407 = vst.msk [vmem:[#allocation2 + $0x160] sm:$0xff] %vm1362, %v1278
  %1408 = vst.msk [vmem:[#allocation2 + $0x168] sm:$0xff] %vm1362, %v1279
  %1409 = vst.msk [vmem:[#allocation2 + $0x170] sm:$0xff] %vm1362, %v1280
  %1410 = vst.msk [vmem:[#allocation2 + $0x178] sm:$0xff] %vm1362, %v1281
  %1411 = vst.msk [vmem:[#allocation2 + $0x180] sm:$0xff] %vm1362, %v1282
  %1412 = vst.msk [vmem:[#allocation2 + $0x188] sm:$0xff] %vm1362, %v1283
  %1413 = vst.msk [vmem:[#allocation2 + $0x190] sm:$0xff] %vm1362, %v1284
  %1414 = vst.msk [vmem:[#allocation2 + $0x198] sm:$0xff] %vm1362, %v1285
  %1415 = vst.msk [vmem:[#allocation2 + $0x1a0] sm:$0xff] %vm1362, %v1286
  %1416 = vst.msk [vmem:[#allocation2 + $0x1a8] sm:$0xff] %vm1362, %v1287
  %1417 = vst.msk [vmem:[#allocation2 + $0x1b0] sm:$0xff] %vm1362, %v1288
  %1418 = vst.msk [vmem:[#allocation2 + $0x1b8] sm:$0xff] %vm1362, %v1289
  %1419 = vst.msk [vmem:[#allocation2 + $0x1c0] sm:$0xff] %vm1362, %v1290
  %1420 = vst.msk [vmem:[#allocation2 + $0x1c8] sm:$0xff] %vm1362, %v1291
  %1421 = vst.msk [vmem:[#allocation2 + $0x1d0] sm:$0xff] %vm1362, %v1292
  %1422 = vst.msk [vmem:[#allocation2 + $0x1d8] sm:$0xff] %vm1362, %v1293
  %1423 = vst.msk [vmem:[#allocation2 + $0x1e0] sm:$0xff] %vm1362, %v1294
  %1424 = vst.msk [vmem:[#allocation2 + $0x1e8] sm:$0xff] %vm1362, %v1295
  %1425 = vst.msk [vmem:[#allocation2 + $0x1f0] sm:$0xff] %vm1362, %v1296
  %1426 = vst.msk [vmem:[#allocation2 + $0x1f8] sm:$0xff] %vm1362, %v1297
  %1427 = vst.msk [vmem:[#allocation2 + $0x200] sm:$0xff] %vm1362, %v1298
  %1428 = vst.msk [vmem:[#allocation2 + $0x208] sm:$0xff] %vm1362, %v1299
  %1429 = vst.msk [vmem:[#allocation2 + $0x210] sm:$0xff] %vm1362, %v1300
  %1430 = vst.msk [vmem:[#allocation2 + $0x218] sm:$0xff] %vm1362, %v1301
  %1431 = vst.msk [vmem:[#allocation2 + $0x220] sm:$0xff] %vm1362, %v1302
  %1432 = vst.msk [vmem:[#allocation2 + $0x228] sm:$0xff] %vm1362, %v1303
  %1433 = vst.msk [vmem:[#allocation2 + $0x230] sm:$0xff] %vm1362, %v1304
  %1434 = vst.msk [vmem:[#allocation2 + $0x238] sm:$0xff] %vm1362, %v1305
  %1435 = vst.msk [vmem:[#allocation2 + $0x240] sm:$0xff] %vm1362, %v1306
  %1436 = vst.msk [vmem:[#allocation2 + $0x248] sm:$0xff] %vm1362, %v1307
  %1437 = vst.msk [vmem:[#allocation2 + $0x250] sm:$0xff] %vm1362, %v1308
  %1438 = vst.msk [vmem:[#allocation2 + $0x258] sm:$0xff] %vm1362, %v1309
  %1439 = vst.msk [vmem:[#allocation2 + $0x260] sm:$0xff] %vm1362, %v1310
  %1440 = vst.msk [vmem:[#allocation2 + $0x268] sm:$0xff] %vm1362, %v1311
  %1441 = vst.msk [vmem:[#allocation2 + $0x270] sm:$0xff] %vm1362, %v1312
  %1442 = vst.msk [vmem:[#allocation2 + $0x278] sm:$0xff] %vm1362, %v1313
  %1443 = vst.msk [vmem:[#allocation2 + $0x280] sm:$0xff] %vm1362, %v1314
  %1444 = vst.msk [vmem:[#allocation2 + $0x288] sm:$0xff] %vm1362, %v1315
  %1445 = vst.msk [vmem:[#allocation2 + $0x290] sm:$0xff] %vm1362, %v1316
  %1446 = vst.msk [vmem:[#allocation2 + $0x298] sm:$0xff] %vm1362, %v1317
  %1447 = vst.msk [vmem:[#allocation2 + $0x2a0] sm:$0xff] %vm1362, %v1318
  %1448 = vst.msk [vmem:[#allocation2 + $0x2a8] sm:$0xff] %vm1362, %v1319
  %1449 = vst.msk [vmem:[#allocation2 + $0x2b0] sm:$0xff] %vm1362, %v1320
  %1450 = vst.msk [vmem:[#allocation2 + $0x2b8] sm:$0xff] %vm1362, %v1321
  %1451 = vst.msk [vmem:[#allocation2 + $0x2c0] sm:$0xff] %vm1362, %v1322
  %1452 = vst.msk [vmem:[#allocation2 + $0x2c8] sm:$0xff] %vm1362, %v1323
  %1453 = vst.msk [vmem:[#allocation2 + $0x2d0] sm:$0xff] %vm1362, %v1324
  %1454 = vst.msk [vmem:[#allocation2 + $0x2d8] sm:$0xff] %vm1362, %v1325
  %1455 = vst.msk [vmem:[#allocation2 + $0x2e0] sm:$0xff] %vm1362, %v1326
  %1456 = vst.msk [vmem:[#allocation2 + $0x2e8] sm:$0xff] %vm1362, %v1327
  %1457 = vst.msk [vmem:[#allocation2 + $0x2f0] sm:$0xff] %vm1362, %v1328
  %1458 = vst.msk [vmem:[#allocation2 + $0x2f8] sm:$0xff] %vm1362, %v1329
  %1459 = vst.msk [vmem:[#allocation2 + $0x300] sm:$0xff] %vm1362, %v1330
  %1460 = vst.msk [vmem:[#allocation2 + $0x308] sm:$0xff] %vm1362, %v1331
  %1461 = vst.msk [vmem:[#allocation2 + $0x310] sm:$0xff] %vm1362, %v1332
  %1462 = vst.msk [vmem:[#allocation2 + $0x318] sm:$0xff] %vm1362, %v1333
  %1463 = vst.msk [vmem:[#allocation2 + $0x320] sm:$0xff] %vm1362, %v1334
  %1464 = vst.msk [vmem:[#allocation2 + $0x328] sm:$0xff] %vm1362, %v1335
  %1465 = vst.msk [vmem:[#allocation2 + $0x330] sm:$0xff] %vm1362, %v1336
  %1466 = vst.msk [vmem:[#allocation2 + $0x338] sm:$0xff] %vm1362, %v1337
  %1467 = vst.msk [vmem:[#allocation2 + $0x340] sm:$0xff] %vm1362, %v1338
  %1468 = vst.msk [vmem:[#allocation2 + $0x348] sm:$0xff] %vm1362, %v1339
  %1469 = vst.msk [vmem:[#allocation2 + $0x350] sm:$0xff] %vm1362, %v1340
  %1470 = vst.msk [vmem:[#allocation2 + $0x358] sm:$0xff] %vm1362, %v1341
  %1471 = vst.msk [vmem:[#allocation2 + $0x360] sm:$0xff] %vm1362, %v1342
  %1472 = vst.msk [vmem:[#allocation2 + $0x368] sm:$0xff] %vm1362, %v1343
  %1473 = vst.msk [vmem:[#allocation2 + $0x370] sm:$0xff] %vm1362, %v1344
  %1474 = vst.msk [vmem:[#allocation2 + $0x378] sm:$0xff] %vm1362, %v1345
  %1475 = vst.msk [vmem:[#allocation2 + $0x380] sm:$0xff] %vm1362, %v1346
  %1476 = vst.msk [vmem:[#allocation2 + $0x388] sm:$0xff] %vm1362, %v1347
  %1477 = vst.msk [vmem:[#allocation2 + $0x390] sm:$0xff] %vm1362, %v1348
  %1478 = vst.msk [vmem:[#allocation2 + $0x398] sm:$0xff] %vm1362, %v1349
  %1479 = vst.msk [vmem:[#allocation2 + $0x3a0] sm:$0xff] %vm1362, %v1350
  %1480 = vst.msk [vmem:[#allocation2 + $0x3a8] sm:$0xff] %vm1362, %v1351
  %1481 = vst.msk [vmem:[#allocation2 + $0x3b0] sm:$0xff] %vm1362, %v1352
  %1482 = vst.msk [vmem:[#allocation2 + $0x3b8] sm:$0xff] %vm1362, %v1353
  %1483 = vst.msk [vmem:[#allocation2 + $0x3c0] sm:$0xff] %vm1362, %v1354
  %1484 = vst.msk [vmem:[#allocation2 + $0x3c8] sm:$0xff] %vm1362, %v1355
  %1485 = vst.msk [vmem:[#allocation2 + $0x3d0] sm:$0xff] %vm1362, %v1356
  %1486 = vst.msk [vmem:[#allocation2 + $0x3d8] sm:$0xff] %vm1362, %v1357
  %1487 = vst.msk [vmem:[#allocation2 + $0x3e0] sm:$0xff] %vm1362, %v1358
  %1488 = vst.msk [vmem:[#allocation2 + $0x3e8] sm:$0xff] %vm1362, %v1359
  %1489 = vst.msk [vmem:[#allocation2 + $0x3f0] sm:$0xff] %vm1362, %v1360
  %1490 = vst.msk [vmem:[#allocation2 + $0x3f8] sm:$0xff] %vm1362, %v1361
  %v1491 = vld [vmem:[#allocation2] sm:$0xff]
  %v1492 = vld [vmem:[#allocation2 + $0x8] sm:$0xff]
  %v1493 = vld [vmem:[#allocation2 + $0x10] sm:$0xff]
  %v1494 = vld [vmem:[#allocation2 + $0x18] sm:$0xff]
  %v1495 = vld [vmem:[#allocation2 + $0x20] sm:$0xff]
  %v1496 = vld [vmem:[#allocation2 + $0x28] sm:$0xff]
  %v1497 = vld [vmem:[#allocation2 + $0x30] sm:$0xff]
  %v1498 = vld [vmem:[#allocation2 + $0x38] sm:$0xff]
  %v1499 = vld [vmem:[#allocation2 + $0x40] sm:$0xff]
  %v1500 = vld [vmem:[#allocation2 + $0x48] sm:$0xff]
  %v1501 = vld [vmem:[#allocation2 + $0x50] sm:$0xff]
  %v1502 = vld [vmem:[#allocation2 + $0x58] sm:$0xff]
  %v1503 = vld [vmem:[#allocation2 + $0x60] sm:$0xff]
  %v1504 = vld [vmem:[#allocation2 + $0x68] sm:$0xff]
  %v1505 = vld [vmem:[#allocation2 + $0x70] sm:$0xff]
  %v1506 = vld [vmem:[#allocation2 + $0x78] sm:$0xff]
  %v1507 = vld [vmem:[#allocation2 + $0x80] sm:$0xff]
  %v1508 = vld [vmem:[#allocation2 + $0x88] sm:$0xff]
  %v1509 = vld [vmem:[#allocation2 + $0x90] sm:$0xff]
  %v1510 = vld [vmem:[#allocation2 + $0x98] sm:$0xff]
  %v1511 = vld [vmem:[#allocation2 + $0xa0] sm:$0xff]
  %v1512 = vld [vmem:[#allocation2 + $0xa8] sm:$0xff]
  %v1513 = vld [vmem:[#allocation2 + $0xb0] sm:$0xff]
  %v1514 = vld [vmem:[#allocation2 + $0xb8] sm:$0xff]
  %v1515 = vld [vmem:[#allocation2 + $0xc0] sm:$0xff]
  %v1516 = vld [vmem:[#allocation2 + $0xc8] sm:$0xff]
  %v1517 = vld [vmem:[#allocation2 + $0xd0] sm:$0xff]
  %v1518 = vld [vmem:[#allocation2 + $0xd8] sm:$0xff]
  %v1519 = vld [vmem:[#allocation2 + $0xe0] sm:$0xff]
  %v1520 = vld [vmem:[#allocation2 + $0xe8] sm:$0xff]
  %v1521 = vld [vmem:[#allocation2 + $0xf0] sm:$0xff]
  %v1522 = vld [vmem:[#allocation2 + $0xf8] sm:$0xff]
  %v1523 = vld [vmem:[#allocation2 + $0x100] sm:$0xff]
  %v1524 = vld [vmem:[#allocation2 + $0x108] sm:$0xff]
  %v1525 = vld [vmem:[#allocation2 + $0x110] sm:$0xff]
  %v1526 = vld [vmem:[#allocation2 + $0x118] sm:$0xff]
  %v1527 = vld [vmem:[#allocation2 + $0x120] sm:$0xff]
  %v1528 = vld [vmem:[#allocation2 + $0x128] sm:$0xff]
  %v1529 = vld [vmem:[#allocation2 + $0x130] sm:$0xff]
  %v1530 = vld [vmem:[#allocation2 + $0x138] sm:$0xff]
  %v1531 = vld [vmem:[#allocation2 + $0x140] sm:$0xff]
  %v1532 = vld [vmem:[#allocation2 + $0x148] sm:$0xff]
  %v1533 = vld [vmem:[#allocation2 + $0x150] sm:$0xff]
  %v1534 = vld [vmem:[#allocation2 + $0x158] sm:$0xff]
  %v1535 = vld [vmem:[#allocation2 + $0x160] sm:$0xff]
  %v1536 = vld [vmem:[#allocation2 + $0x168] sm:$0xff]
  %v1537 = vld [vmem:[#allocation2 + $0x170] sm:$0xff]
  %v1538 = vld [vmem:[#allocation2 + $0x178] sm:$0xff]
  %v1539 = vld [vmem:[#allocation2 + $0x180] sm:$0xff]
  %v1540 = vld [vmem:[#allocation2 + $0x188] sm:$0xff]
  %v1541 = vld [vmem:[#allocation2 + $0x190] sm:$0xff]
  %v1542 = vld [vmem:[#allocation2 + $0x198] sm:$0xff]
  %v1543 = vld [vmem:[#allocation2 + $0x1a0] sm:$0xff]
  %v1544 = vld [vmem:[#allocation2 + $0x1a8] sm:$0xff]
  %v1545 = vld [vmem:[#allocation2 + $0x1b0] sm:$0xff]
  %v1546 = vld [vmem:[#allocation2 + $0x1b8] sm:$0xff]
  %v1547 = vld [vmem:[#allocation2 + $0x1c0] sm:$0xff]
  %v1548 = vld [vmem:[#allocation2 + $0x1c8] sm:$0xff]
  %v1549 = vld [vmem:[#allocation2 + $0x1d0] sm:$0xff]
  %v1550 = vld [vmem:[#allocation2 + $0x1d8] sm:$0xff]
  %v1551 = vld [vmem:[#allocation2 + $0x1e0] sm:$0xff]
  %v1552 = vld [vmem:[#allocation2 + $0x1e8] sm:$0xff]
  %v1553 = vld [vmem:[#allocation2 + $0x1f0] sm:$0xff]
  %v1554 = vld [vmem:[#allocation2 + $0x1f8] sm:$0xff]
  %v1555 = vld [vmem:[#allocation2 + $0x200] sm:$0xff]
  %v1556 = vld [vmem:[#allocation2 + $0x208] sm:$0xff]
  %v1557 = vld [vmem:[#allocation2 + $0x210] sm:$0xff]
  %v1558 = vld [vmem:[#allocation2 + $0x218] sm:$0xff]
  %v1559 = vld [vmem:[#allocation2 + $0x220] sm:$0xff]
  %v1560 = vld [vmem:[#allocation2 + $0x228] sm:$0xff]
  %v1561 = vld [vmem:[#allocation2 + $0x230] sm:$0xff]
  %v1562 = vld [vmem:[#allocation2 + $0x238] sm:$0xff]
  %v1563 = vld [vmem:[#allocation2 + $0x240] sm:$0xff]
  %v1564 = vld [vmem:[#allocation2 + $0x248] sm:$0xff]
  %v1565 = vld [vmem:[#allocation2 + $0x250] sm:$0xff]
  %v1566 = vld [vmem:[#allocation2 + $0x258] sm:$0xff]
  %v1567 = vld [vmem:[#allocation2 + $0x260] sm:$0xff]
  %v1568 = vld [vmem:[#allocation2 + $0x268] sm:$0xff]
  %v1569 = vld [vmem:[#allocation2 + $0x270] sm:$0xff]
  %v1570 = vld [vmem:[#allocation2 + $0x278] sm:$0xff]
  %v1571 = vld [vmem:[#allocation2 + $0x280] sm:$0xff]
  %v1572 = vld [vmem:[#allocation2 + $0x288] sm:$0xff]
  %v1573 = vld [vmem:[#allocation2 + $0x290] sm:$0xff]
  %v1574 = vld [vmem:[#allocation2 + $0x298] sm:$0xff]
  %v1575 = vld [vmem:[#allocation2 + $0x2a0] sm:$0xff]
  %v1576 = vld [vmem:[#allocation2 + $0x2a8] sm:$0xff]
  %v1577 = vld [vmem:[#allocation2 + $0x2b0] sm:$0xff]
  %v1578 = vld [vmem:[#allocation2 + $0x2b8] sm:$0xff]
  %v1579 = vld [vmem:[#allocation2 + $0x2c0] sm:$0xff]
  %v1580 = vld [vmem:[#allocation2 + $0x2c8] sm:$0xff]
  %v1581 = vld [vmem:[#allocation2 + $0x2d0] sm:$0xff]
  %v1582 = vld [vmem:[#allocation2 + $0x2d8] sm:$0xff]
  %v1583 = vld [vmem:[#allocation2 + $0x2e0] sm:$0xff]
  %v1584 = vld [vmem:[#allocation2 + $0x2e8] sm:$0xff]
  %v1585 = vld [vmem:[#allocation2 + $0x2f0] sm:$0xff]
  %v1586 = vld [vmem:[#allocation2 + $0x2f8] sm:$0xff]
  %v1587 = vld [vmem:[#allocation2 + $0x300] sm:$0xff]
  %v1588 = vld [vmem:[#allocation2 + $0x308] sm:$0xff]
  %v1589 = vld [vmem:[#allocation2 + $0x310] sm:$0xff]
  %v1590 = vld [vmem:[#allocation2 + $0x318] sm:$0xff]
  %v1591 = vld [vmem:[#allocation2 + $0x320] sm:$0xff]
  %v1592 = vld [vmem:[#allocation2 + $0x328] sm:$0xff]
  %v1593 = vld [vmem:[#allocation2 + $0x330] sm:$0xff]
  %v1594 = vld [vmem:[#allocation2 + $0x338] sm:$0xff]
  %v1595 = vld [vmem:[#allocation2 + $0x340] sm:$0xff]
  %v1596 = vld [vmem:[#allocation2 + $0x348] sm:$0xff]
  %v1597 = vld [vmem:[#allocation2 + $0x350] sm:$0xff]
  %v1598 = vld [vmem:[#allocation2 + $0x358] sm:$0xff]
  %v1599 = vld [vmem:[#allocation2 + $0x360] sm:$0xff]
  %v1600 = vld [vmem:[#allocation2 + $0x368] sm:$0xff]
  %v1601 = vld [vmem:[#allocation2 + $0x370] sm:$0xff]
  %v1602 = vld [vmem:[#allocation2 + $0x378] sm:$0xff]
  %v1603 = vld [vmem:[#allocation2 + $0x380] sm:$0xff]
  %v1604 = vld [vmem:[#allocation2 + $0x388] sm:$0xff]
  %v1605 = vld [vmem:[#allocation2 + $0x390] sm:$0xff]
  %v1606 = vld [vmem:[#allocation2 + $0x398] sm:$0xff]
  %v1607 = vld [vmem:[#allocation2 + $0x3a0] sm:$0xff]
  %v1608 = vld [vmem:[#allocation2 + $0x3a8] sm:$0xff]
  %v1609 = vld [vmem:[#allocation2 + $0x3b0] sm:$0xff]
  %v1610 = vld [vmem:[#allocation2 + $0x3b8] sm:$0xff]
  %v1611 = vld [vmem:[#allocation2 + $0x3c0] sm:$0xff]
  %v1612 = vld [vmem:[#allocation2 + $0x3c8] sm:$0xff]
  %v1613 = vld [vmem:[#allocation2 + $0x3d0] sm:$0xff]
  %v1614 = vld [vmem:[#allocation2 + $0x3d8] sm:$0xff]
  %v1615 = vld [vmem:[#allocation2 + $0x3e0] sm:$0xff]
  %v1616 = vld [vmem:[#allocation2 + $0x3e8] sm:$0xff]
  %v1617 = vld [vmem:[#allocation2 + $0x3f0] sm:$0xff]
  %v1618 = vld [vmem:[#allocation2 + $0x3f8] sm:$0xff]
  %v1619 = vmax.f32 %v1491, %v1495
  %v1620 = vmax.f32 %v1492, %v1496
  %v1621 = vmax.f32 %v1493, %v1497
  %v1622 = vmax.f32 %v1494, %v1498
  %v1623 = vmax.f32 %v1495, %v1499
  %v1624 = vmax.f32 %v1496, %v1500
  %v1625 = vmax.f32 %v1497, %v1501
  %v1626 = vmax.f32 %v1498, %v1502
  %v1627 = vmax.f32 %v1499, %v1503
  %v1628 = vmax.f32 %v1500, %v1504
  %v1629 = vmax.f32 %v1501, %v1505
  %v1630 = vmax.f32 %v1502, %v1506
  %v1631 = vmax.f32 %v1503, %v1507
  %v1632 = vmax.f32 %v1504, %v1508
  %v1633 = vmax.f32 %v1505, %v1509
  %v1634 = vmax.f32 %v1506, %v1510
  %v1635 = vmax.f32 %v1507, %v1511
  %v1636 = vmax.f32 %v1508, %v1512
  %v1637 = vmax.f32 %v1509, %v1513
  %v1638 = vmax.f32 %v1510, %v1514
  %v1639 = vmax.f32 %v1511, %v1515
  %v1640 = vmax.f32 %v1512, %v1516
  %v1641 = vmax.f32 %v1513, %v1517
  %v1642 = vmax.f32 %v1514, %v1518
  %v1643 = vmax.f32 %v1515, %v1519
  %v1644 = vmax.f32 %v1516, %v1520
  %v1645 = vmax.f32 %v1517, %v1521
  %v1646 = vmax.f32 %v1518, %v1522
  %v1647 = vmax.f32 %v1519, %v1523
  %v1648 = vmax.f32 %v1520, %v1524
  %v1649 = vmax.f32 %v1521, %v1525
  %v1650 = vmax.f32 %v1522, %v1526
  %v1651 = vmax.f32 %v1523, %v1527
  %v1652 = vmax.f32 %v1524, %v1528
  %v1653 = vmax.f32 %v1525, %v1529
  %v1654 = vmax.f32 %v1526, %v1530
  %v1655 = vmax.f32 %v1527, %v1531
  %v1656 = vmax.f32 %v1528, %v1532
  %v1657 = vmax.f32 %v1529, %v1533
  %v1658 = vmax.f32 %v1530, %v1534
  %v1659 = vmax.f32 %v1531, %v1535
  %v1660 = vmax.f32 %v1532, %v1536
  %v1661 = vmax.f32 %v1533, %v1537
  %v1662 = vmax.f32 %v1534, %v1538
  %v1663 = vmax.f32 %v1535, %v1539
  %v1664 = vmax.f32 %v1536, %v1540
  %v1665 = vmax.f32 %v1537, %v1541
  %v1666 = vmax.f32 %v1538, %v1542
  %v1667 = vmax.f32 %v1539, %v1543
  %v1668 = vmax.f32 %v1540, %v1544
  %v1669 = vmax.f32 %v1541, %v1545
  %v1670 = vmax.f32 %v1542, %v1546
  %v1671 = vmax.f32 %v1543, %v1547
  %v1672 = vmax.f32 %v1544, %v1548
  %v1673 = vmax.f32 %v1545, %v1549
  %v1674 = vmax.f32 %v1546, %v1550
  %v1675 = vmax.f32 %v1547, %v1551
  %v1676 = vmax.f32 %v1548, %v1552
  %v1677 = vmax.f32 %v1549, %v1553
  %v1678 = vmax.f32 %v1550, %v1554
  %v1679 = vmax.f32 %v1551, %v1555
  %v1680 = vmax.f32 %v1552, %v1556
  %v1681 = vmax.f32 %v1553, %v1557
  %v1682 = vmax.f32 %v1554, %v1558
  %v1683 = vmax.f32 %v1555, %v1559
  %v1684 = vmax.f32 %v1556, %v1560
  %v1685 = vmax.f32 %v1557, %v1561
  %v1686 = vmax.f32 %v1558, %v1562
  %v1687 = vmax.f32 %v1559, %v1563
  %v1688 = vmax.f32 %v1560, %v1564
  %v1689 = vmax.f32 %v1561, %v1565
  %v1690 = vmax.f32 %v1562, %v1566
  %v1691 = vmax.f32 %v1563, %v1567
  %v1692 = vmax.f32 %v1564, %v1568
  %v1693 = vmax.f32 %v1565, %v1569
  %v1694 = vmax.f32 %v1566, %v1570
  %v1695 = vmax.f32 %v1567, %v1571
  %v1696 = vmax.f32 %v1568, %v1572
  %v1697 = vmax.f32 %v1569, %v1573
  %v1698 = vmax.f32 %v1570, %v1574
  %v1699 = vmax.f32 %v1571, %v1575
  %v1700 = vmax.f32 %v1572, %v1576
  %v1701 = vmax.f32 %v1573, %v1577
  %v1702 = vmax.f32 %v1574, %v1578
  %v1703 = vmax.f32 %v1575, %v1579
  %v1704 = vmax.f32 %v1576, %v1580
  %v1705 = vmax.f32 %v1577, %v1581
  %v1706 = vmax.f32 %v1578, %v1582
  %v1707 = vmax.f32 %v1579, %v1583
  %v1708 = vmax.f32 %v1580, %v1584
  %v1709 = vmax.f32 %v1581, %v1585
  %v1710 = vmax.f32 %v1582, %v1586
  %v1711 = vmax.f32 %v1583, %v1587
  %v1712 = vmax.f32 %v1584, %v1588
  %v1713 = vmax.f32 %v1585, %v1589
  %v1714 = vmax.f32 %v1586, %v1590
  %v1715 = vmax.f32 %v1587, %v1591
  %v1716 = vmax.f32 %v1588, %v1592
  %v1717 = vmax.f32 %v1589, %v1593
  %v1718 = vmax.f32 %v1590, %v1594
  %v1719 = vmax.f32 %v1591, %v1595
  %v1720 = vmax.f32 %v1592, %v1596
  %v1721 = vmax.f32 %v1593, %v1597
  %v1722 = vmax.f32 %v1594, %v1598
  %v1723 = vmax.f32 %v1595, %v1599
  %v1724 = vmax.f32 %v1596, %v1600
  %v1725 = vmax.f32 %v1597, %v1601
  %v1726 = vmax.f32 %v1598, %v1602
  %v1727 = vmax.f32 %v1599, %v1603
  %v1728 = vmax.f32 %v1600, %v1604
  %v1729 = vmax.f32 %v1601, %v1605
  %v1730 = vmax.f32 %v1602, %v1606
  %v1731 = vmax.f32 %v1603, %v1607
  %v1732 = vmax.f32 %v1604, %v1608
  %v1733 = vmax.f32 %v1605, %v1609
  %v1734 = vmax.f32 %v1606, %v1610
  %v1735 = vmax.f32 %v1607, %v1611
  %v1736 = vmax.f32 %v1608, %v1612
  %v1737 = vmax.f32 %v1609, %v1613
  %v1738 = vmax.f32 %v1610, %v1614
  %v1739 = vmax.f32 %v1611, %v1615
  %v1740 = vmax.f32 %v1612, %v1616
  %v1741 = vmax.f32 %v1613, %v1617
  %v1742 = vmax.f32 %v1614, %v1618
  %1743 = vst.msk [vmem:[#allocation2] sm:$0xff] %vm1362, %v1619
  %1744 = vst.msk [vmem:[#allocation2 + $0x8] sm:$0xff] %vm1362, %v1620
  %1745 = vst.msk [vmem:[#allocation2 + $0x10] sm:$0xff] %vm1362, %v1621
  %1746 = vst.msk [vmem:[#allocation2 + $0x18] sm:$0xff] %vm1362, %v1622
  %1747 = vst.msk [vmem:[#allocation2 + $0x20] sm:$0xff] %vm1362, %v1623
  %1748 = vst.msk [vmem:[#allocation2 + $0x28] sm:$0xff] %vm1362, %v1624
  %1749 = vst.msk [vmem:[#allocation2 + $0x30] sm:$0xff] %vm1362, %v1625
  %1750 = vst.msk [vmem:[#allocation2 + $0x38] sm:$0xff] %vm1362, %v1626
  %1751 = vst.msk [vmem:[#allocation2 + $0x40] sm:$0xff] %vm1362, %v1627
  %1752 = vst.msk [vmem:[#allocation2 + $0x48] sm:$0xff] %vm1362, %v1628
  %1753 = vst.msk [vmem:[#allocation2 + $0x50] sm:$0xff] %vm1362, %v1629
  %1754 = vst.msk [vmem:[#allocation2 + $0x58] sm:$0xff] %vm1362, %v1630
  %1755 = vst.msk [vmem:[#allocation2 + $0x60] sm:$0xff] %vm1362, %v1631
  %1756 = vst.msk [vmem:[#allocation2 + $0x68] sm:$0xff] %vm1362, %v1632
  %1757 = vst.msk [vmem:[#allocation2 + $0x70] sm:$0xff] %vm1362, %v1633
  %1758 = vst.msk [vmem:[#allocation2 + $0x78] sm:$0xff] %vm1362, %v1634
  %1759 = vst.msk [vmem:[#allocation2 + $0x80] sm:$0xff] %vm1362, %v1635
  %1760 = vst.msk [vmem:[#allocation2 + $0x88] sm:$0xff] %vm1362, %v1636
  %1761 = vst.msk [vmem:[#allocation2 + $0x90] sm:$0xff] %vm1362, %v1637
  %1762 = vst.msk [vmem:[#allocation2 + $0x98] sm:$0xff] %vm1362, %v1638
  %1763 = vst.msk [vmem:[#allocation2 + $0xa0] sm:$0xff] %vm1362, %v1639
  %1764 = vst.msk [vmem:[#allocation2 + $0xa8] sm:$0xff] %vm1362, %v1640
  %1765 = vst.msk [vmem:[#allocation2 + $0xb0] sm:$0xff] %vm1362, %v1641
  %1766 = vst.msk [vmem:[#allocation2 + $0xb8] sm:$0xff] %vm1362, %v1642
  %1767 = vst.msk [vmem:[#allocation2 + $0xc0] sm:$0xff] %vm1362, %v1643
  %1768 = vst.msk [vmem:[#allocation2 + $0xc8] sm:$0xff] %vm1362, %v1644
  %1769 = vst.msk [vmem:[#allocation2 + $0xd0] sm:$0xff] %vm1362, %v1645
  %1770 = vst.msk [vmem:[#allocation2 + $0xd8] sm:$0xff] %vm1362, %v1646
  %1771 = vst.msk [vmem:[#allocation2 + $0xe0] sm:$0xff] %vm1362, %v1647
  %1772 = vst.msk [vmem:[#allocation2 + $0xe8] sm:$0xff] %vm1362, %v1648
  %1773 = vst.msk [vmem:[#allocation2 + $0xf0] sm:$0xff] %vm1362, %v1649
  %1774 = vst.msk [vmem:[#allocation2 + $0xf8] sm:$0xff] %vm1362, %v1650
  %1775 = vst.msk [vmem:[#allocation2 + $0x100] sm:$0xff] %vm1362, %v1651
  %1776 = vst.msk [vmem:[#allocation2 + $0x108] sm:$0xff] %vm1362, %v1652
  %1777 = vst.msk [vmem:[#allocation2 + $0x110] sm:$0xff] %vm1362, %v1653
  %1778 = vst.msk [vmem:[#allocation2 + $0x118] sm:$0xff] %vm1362, %v1654
  %1779 = vst.msk [vmem:[#allocation2 + $0x120] sm:$0xff] %vm1362, %v1655
  %1780 = vst.msk [vmem:[#allocation2 + $0x128] sm:$0xff] %vm1362, %v1656
  %1781 = vst.msk [vmem:[#allocation2 + $0x130] sm:$0xff] %vm1362, %v1657
  %1782 = vst.msk [vmem:[#allocation2 + $0x138] sm:$0xff] %vm1362, %v1658
  %1783 = vst.msk [vmem:[#allocation2 + $0x140] sm:$0xff] %vm1362, %v1659
  %1784 = vst.msk [vmem:[#allocation2 + $0x148] sm:$0xff] %vm1362, %v1660
  %1785 = vst.msk [vmem:[#allocation2 + $0x150] sm:$0xff] %vm1362, %v1661
  %1786 = vst.msk [vmem:[#allocation2 + $0x158] sm:$0xff] %vm1362, %v1662
  %1787 = vst.msk [vmem:[#allocation2 + $0x160] sm:$0xff] %vm1362, %v1663
  %1788 = vst.msk [vmem:[#allocation2 + $0x168] sm:$0xff] %vm1362, %v1664
  %1789 = vst.msk [vmem:[#allocation2 + $0x170] sm:$0xff] %vm1362, %v1665
  %1790 = vst.msk [vmem:[#allocation2 + $0x178] sm:$0xff] %vm1362, %v1666
  %1791 = vst.msk [vmem:[#allocation2 + $0x180] sm:$0xff] %vm1362, %v1667
  %1792 = vst.msk [vmem:[#allocation2 + $0x188] sm:$0xff] %vm1362, %v1668
  %1793 = vst.msk [vmem:[#allocation2 + $0x190] sm:$0xff] %vm1362, %v1669
  %1794 = vst.msk [vmem:[#allocation2 + $0x198] sm:$0xff] %vm1362, %v1670
  %1795 = vst.msk [vmem:[#allocation2 + $0x1a0] sm:$0xff] %vm1362, %v1671
  %1796 = vst.msk [vmem:[#allocation2 + $0x1a8] sm:$0xff] %vm1362, %v1672
  %1797 = vst.msk [vmem:[#allocation2 + $0x1b0] sm:$0xff] %vm1362, %v1673
  %1798 = vst.msk [vmem:[#allocation2 + $0x1b8] sm:$0xff] %vm1362, %v1674
  %1799 = vst.msk [vmem:[#allocation2 + $0x1c0] sm:$0xff] %vm1362, %v1675
  %1800 = vst.msk [vmem:[#allocation2 + $0x1c8] sm:$0xff] %vm1362, %v1676
  %1801 = vst.msk [vmem:[#allocation2 + $0x1d0] sm:$0xff] %vm1362, %v1677
  %1802 = vst.msk [vmem:[#allocation2 + $0x1d8] sm:$0xff] %vm1362, %v1678
  %1803 = vst.msk [vmem:[#allocation2 + $0x1e0] sm:$0xff] %vm1362, %v1679
  %1804 = vst.msk [vmem:[#allocation2 + $0x1e8] sm:$0xff] %vm1362, %v1680
  %1805 = vst.msk [vmem:[#allocation2 + $0x1f0] sm:$0xff] %vm1362, %v1681
  %1806 = vst.msk [vmem:[#allocation2 + $0x1f8] sm:$0xff] %vm1362, %v1682
  %1807 = vst.msk [vmem:[#allocation2 + $0x200] sm:$0xff] %vm1362, %v1683
  %1808 = vst.msk [vmem:[#allocation2 + $0x208] sm:$0xff] %vm1362, %v1684
  %1809 = vst.msk [vmem:[#allocation2 + $0x210] sm:$0xff] %vm1362, %v1685
  %1810 = vst.msk [vmem:[#allocation2 + $0x218] sm:$0xff] %vm1362, %v1686
  %1811 = vst.msk [vmem:[#allocation2 + $0x220] sm:$0xff] %vm1362, %v1687
  %1812 = vst.msk [vmem:[#allocation2 + $0x228] sm:$0xff] %vm1362, %v1688
  %1813 = vst.msk [vmem:[#allocation2 + $0x230] sm:$0xff] %vm1362, %v1689
  %1814 = vst.msk [vmem:[#allocation2 + $0x238] sm:$0xff] %vm1362, %v1690
  %1815 = vst.msk [vmem:[#allocation2 + $0x240] sm:$0xff] %vm1362, %v1691
  %1816 = vst.msk [vmem:[#allocation2 + $0x248] sm:$0xff] %vm1362, %v1692
  %1817 = vst.msk [vmem:[#allocation2 + $0x250] sm:$0xff] %vm1362, %v1693
  %1818 = vst.msk [vmem:[#allocation2 + $0x258] sm:$0xff] %vm1362, %v1694
  %1819 = vst.msk [vmem:[#allocation2 + $0x260] sm:$0xff] %vm1362, %v1695
  %1820 = vst.msk [vmem:[#allocation2 + $0x268] sm:$0xff] %vm1362, %v1696
  %1821 = vst.msk [vmem:[#allocation2 + $0x270] sm:$0xff] %vm1362, %v1697
  %1822 = vst.msk [vmem:[#allocation2 + $0x278] sm:$0xff] %vm1362, %v1698
  %1823 = vst.msk [vmem:[#allocation2 + $0x280] sm:$0xff] %vm1362, %v1699
  %1824 = vst.msk [vmem:[#allocation2 + $0x288] sm:$0xff] %vm1362, %v1700
  %1825 = vst.msk [vmem:[#allocation2 + $0x290] sm:$0xff] %vm1362, %v1701
  %1826 = vst.msk [vmem:[#allocation2 + $0x298] sm:$0xff] %vm1362, %v1702
  %1827 = vst.msk [vmem:[#allocation2 + $0x2a0] sm:$0xff] %vm1362, %v1703
  %1828 = vst.msk [vmem:[#allocation2 + $0x2a8] sm:$0xff] %vm1362, %v1704
  %1829 = vst.msk [vmem:[#allocation2 + $0x2b0] sm:$0xff] %vm1362, %v1705
  %1830 = vst.msk [vmem:[#allocation2 + $0x2b8] sm:$0xff] %vm1362, %v1706
  %1831 = vst.msk [vmem:[#allocation2 + $0x2c0] sm:$0xff] %vm1362, %v1707
  %1832 = vst.msk [vmem:[#allocation2 + $0x2c8] sm:$0xff] %vm1362, %v1708
  %1833 = vst.msk [vmem:[#allocation2 + $0x2d0] sm:$0xff] %vm1362, %v1709
  %1834 = vst.msk [vmem:[#allocation2 + $0x2d8] sm:$0xff] %vm1362, %v1710
  %1835 = vst.msk [vmem:[#allocation2 + $0x2e0] sm:$0xff] %vm1362, %v1711
  %1836 = vst.msk [vmem:[#allocation2 + $0x2e8] sm:$0xff] %vm1362, %v1712
  %1837 = vst.msk [vmem:[#allocation2 + $0x2f0] sm:$0xff] %vm1362, %v1713
  %1838 = vst.msk [vmem:[#allocation2 + $0x2f8] sm:$0xff] %vm1362, %v1714
  %1839 = vst.msk [vmem:[#allocation2 + $0x300] sm:$0xff] %vm1362, %v1715
  %1840 = vst.msk [vmem:[#allocation2 + $0x308] sm:$0xff] %vm1362, %v1716
  %1841 = vst.msk [vmem:[#allocation2 + $0x310] sm:$0xff] %vm1362, %v1717
  %1842 = vst.msk [vmem:[#allocation2 + $0x318] sm:$0xff] %vm1362, %v1718
  %1843 = vst.msk [vmem:[#allocation2 + $0x320] sm:$0xff] %vm1362, %v1719
  %1844 = vst.msk [vmem:[#allocation2 + $0x328] sm:$0xff] %vm1362, %v1720
  %1845 = vst.msk [vmem:[#allocation2 + $0x330] sm:$0xff] %vm1362, %v1721
  %1846 = vst.msk [vmem:[#allocation2 + $0x338] sm:$0xff] %vm1362, %v1722
  %1847 = vst.msk [vmem:[#allocation2 + $0x340] sm:$0xff] %vm1362, %v1723
  %1848 = vst.msk [vmem:[#allocation2 + $0x348] sm:$0xff] %vm1362, %v1724
  %1849 = vst.msk [vmem:[#allocation2 + $0x350] sm:$0xff] %vm1362, %v1725
  %1850 = vst.msk [vmem:[#allocation2 + $0x358] sm:$0xff] %vm1362, %v1726
  %1851 = vst.msk [vmem:[#allocation2 + $0x360] sm:$0xff] %vm1362, %v1727
  %1852 = vst.msk [vmem:[#allocation2 + $0x368] sm:$0xff] %vm1362, %v1728
  %1853 = vst.msk [vmem:[#allocation2 + $0x370] sm:$0xff] %vm1362, %v1729
  %1854 = vst.msk [vmem:[#allocation2 + $0x378] sm:$0xff] %vm1362, %v1730
  %1855 = vst.msk [vmem:[#allocation2 + $0x380] sm:$0xff] %vm1362, %v1731
  %1856 = vst.msk [vmem:[#allocation2 + $0x388] sm:$0xff] %vm1362, %v1732
  %1857 = vst.msk [vmem:[#allocation2 + $0x390] sm:$0xff] %vm1362, %v1733
  %1858 = vst.msk [vmem:[#allocation2 + $0x398] sm:$0xff] %vm1362, %v1734
  %1859 = vst.msk [vmem:[#allocation2 + $0x3a0] sm:$0xff] %vm1362, %v1735
  %1860 = vst.msk [vmem:[#allocation2 + $0x3a8] sm:$0xff] %vm1362, %v1736
  %1861 = vst.msk [vmem:[#allocation2 + $0x3b0] sm:$0xff] %vm1362, %v1737
  %1862 = vst.msk [vmem:[#allocation2 + $0x3b8] sm:$0xff] %vm1362, %v1738
  %1863 = vst.msk [vmem:[#allocation2 + $0x3c0] sm:$0xff] %vm1362, %v1739
  %1864 = vst.msk [vmem:[#allocation2 + $0x3c8] sm:$0xff] %vm1362, %v1740
  %1865 = vst.msk [vmem:[#allocation2 + $0x3d0] sm:$0xff] %vm1362, %v1741
  %1866 = vst.msk [vmem:[#allocation2 + $0x3d8] sm:$0xff] %vm1362, %v1742
  %v1867 = vld [vmem:[#allocation2] ss:$2 sm:$0xff]
  %s1868 = scalar_lea.vmem [#allocation2], 16
  %v1869 = vld [vmem:[%s1868] ss:$2 sm:$0xff]
  %s1870 = scalar_lea.vmem [#allocation2], 1
  %v1871 = vld [vmem:[%s1870] ss:$2 sm:$0xff]
  %s1872 = scalar_lea.vmem [#allocation2], 17
  %v1873 = vld [vmem:[%s1872] ss:$2 sm:$0xff]
  %v1874 = vmax.f32 %v1867, %v1871
  %v1875 = vmax.f32 %v1869, %v1873
  %1876 = vst.msk [vmem:[%s4] sm:$0xff] %vm1362, %v1874
  %1877 = vst.msk [vmem:[%s4 + $0x8] sm:$0xff] %vm1362, %v1875
  %s1878 = scalar_lea.vmem [#allocation2], 64
  %v1879 = vld [vmem:[%s1878] ss:$2 sm:$0xff]
  %s1880 = scalar_lea.vmem [#allocation2], 80
  %v1881 = vld [vmem:[%s1880] ss:$2 sm:$0xff]
  %s1882 = scalar_lea.vmem [#allocation2], 65
  %v1883 = vld [vmem:[%s1882] ss:$2 sm:$0xff]
  %s1884 = scalar_lea.vmem [#allocation2], 81
  %v1885 = vld [vmem:[%s1884] ss:$2 sm:$0xff]
  %v1886 = vmax.f32 %v1879, %v1883
  %v1887 = vmax.f32 %v1881, %v1885
  %1888 = vst.msk [vmem:[%s4 + $0x10] sm:$0xff] %vm1362, %v1886
  %1889 = vst.msk [vmem:[%s4 + $0x18] sm:$0xff] %vm1362, %v1887
  %s1890 = scalar_lea.vmem [#allocation2], 128
  %v1891 = vld [vmem:[%s1890] ss:$2 sm:$0xff]
  %s1892 = scalar_lea.vmem [#allocation2], 144
  %v1893 = vld [vmem:[%s1892] ss:$2 sm:$0xff]
  %s1894 = scalar_lea.vmem [#allocation2], 129
  %v1895 = vld [vmem:[%s1894] ss:$2 sm:$0xff]
  %s1896 = scalar_lea.vmem [#allocation2], 145
  %v1897 = vld [vmem:[%s1896] ss:$2 sm:$0xff]
  %v1898 = vmax.f32 %v1891, %v1895
  %v1899 = vmax.f32 %v1893, %v1897
  %1900 = vst.msk [vmem:[%s4 + $0x20] sm:$0xff] %vm1362, %v1898
  %1901 = vst.msk [vmem:[%s4 + $0x28] sm:$0xff] %vm1362, %v1899
  %s1902 = scalar_lea.vmem [#allocation2], 192
  %v1903 = vld [vmem:[%s1902] ss:$2 sm:$0xff]
  %s1904 = scalar_lea.vmem [#allocation2], 208
  %v1905 = vld [vmem:[%s1904] ss:$2 sm:$0xff]
  %s1906 = scalar_lea.vmem [#allocation2], 193
  %v1907 = vld [vmem:[%s1906] ss:$2 sm:$0xff]
  %s1908 = scalar_lea.vmem [#allocation2], 209
  %v1909 = vld [vmem:[%s1908] ss:$2 sm:$0xff]
  %v1910 = vmax.f32 %v1903, %v1907
  %v1911 = vmax.f32 %v1905, %v1909
  %1912 = vst.msk [vmem:[%s4 + $0x30] sm:$0xff] %vm1362, %v1910
  %1913 = vst.msk [vmem:[%s4 + $0x38] sm:$0xff] %vm1362, %v1911
  %s1914 = scalar_lea.vmem [#allocation2], 256
  %v1915 = vld [vmem:[%s1914] ss:$2 sm:$0xff]
  %s1916 = scalar_lea.vmem [#allocation2], 272
  %v1917 = vld [vmem:[%s1916] ss:$2 sm:$0xff]
  %s1918 = scalar_lea.vmem [#allocation2], 257
  %v1919 = vld [vmem:[%s1918] ss:$2 sm:$0xff]
  %s1920 = scalar_lea.vmem [#allocation2], 273
  %v1921 = vld [vmem:[%s1920] ss:$2 sm:$0xff]
  %v1922 = vmax.f32 %v1915, %v1919
  %v1923 = vmax.f32 %v1917, %v1921
  %1924 = vst.msk [vmem:[%s4 + $0x40] sm:$0xff] %vm1362, %v1922
  %1925 = vst.msk [vmem:[%s4 + $0x48] sm:$0xff] %vm1362, %v1923
  %s1926 = scalar_lea.vmem [#allocation2], 320
  %v1927 = vld [vmem:[%s1926] ss:$2 sm:$0xff]
  %s1928 = scalar_lea.vmem [#allocation2], 336
  %v1929 = vld [vmem:[%s1928] ss:$2 sm:$0xff]
  %s1930 = scalar_lea.vmem [#allocation2], 321
  %v1931 = vld [vmem:[%s1930] ss:$2 sm:$0xff]
  %s1932 = scalar_lea.vmem [#allocation2], 337
  %v1933 = vld [vmem:[%s1932] ss:$2 sm:$0xff]
  %v1934 = vmax.f32 %v1927, %v1931
  %v1935 = vmax.f32 %v1929, %v1933
  %1936 = vst.msk [vmem:[%s4 + $0x50] sm:$0xff] %vm1362, %v1934
  %1937 = vst.msk [vmem:[%s4 + $0x58] sm:$0xff] %vm1362, %v1935
  %s1938 = scalar_lea.vmem [#allocation2], 384
  %v1939 = vld [vmem:[%s1938] ss:$2 sm:$0xff]
  %s1940 = scalar_lea.vmem [#allocation2], 400
  %v1941 = vld [vmem:[%s1940] ss:$2 sm:$0xff]
  %s1942 = scalar_lea.vmem [#allocation2], 385
  %v1943 = vld [vmem:[%s1942] ss:$2 sm:$0xff]
  %s1944 = scalar_lea.vmem [#allocation2], 401
  %v1945 = vld [vmem:[%s1944] ss:$2 sm:$0xff]
  %v1946 = vmax.f32 %v1939, %v1943
  %v1947 = vmax.f32 %v1941, %v1945
  %1948 = vst.msk [vmem:[%s4 + $0x60] sm:$0xff] %vm1362, %v1946
  %1949 = vst.msk [vmem:[%s4 + $0x68] sm:$0xff] %vm1362, %v1947
  %s1950 = scalar_lea.vmem [#allocation2], 448
  %v1951 = vld [vmem:[%s1950] ss:$2 sm:$0xff]
  %s1952 = scalar_lea.vmem [#allocation2], 464
  %v1953 = vld [vmem:[%s1952] ss:$2 sm:$0xff]
  %s1954 = scalar_lea.vmem [#allocation2], 449
  %v1955 = vld [vmem:[%s1954] ss:$2 sm:$0xff]
  %s1956 = scalar_lea.vmem [#allocation2], 465
  %v1957 = vld [vmem:[%s1956] ss:$2 sm:$0xff]
  %v1958 = vmax.f32 %v1951, %v1955
  %v1959 = vmax.f32 %v1953, %v1957
  %1960 = vst.msk [vmem:[%s4 + $0x70] sm:$0xff] %vm1362, %v1958
  %1961 = vst.msk [vmem:[%s4 + $0x78] sm:$0xff] %vm1362, %v1959
  %s1962 = scalar_lea.vmem [#allocation2], 512
  %v1963 = vld [vmem:[%s1962] ss:$2 sm:$0xff]
  %s1964 = scalar_lea.vmem [#allocation2], 528
  %v1965 = vld [vmem:[%s1964] ss:$2 sm:$0xff]
  %s1966 = scalar_lea.vmem [#allocation2], 513
  %v1967 = vld [vmem:[%s1966] ss:$2 sm:$0xff]
  %s1968 = scalar_lea.vmem [#allocation2], 529
  %v1969 = vld [vmem:[%s1968] ss:$2 sm:$0xff]
  %v1970 = vmax.f32 %v1963, %v1967
  %v1971 = vmax.f32 %v1965, %v1969
  %1972 = vst.msk [vmem:[%s4 + $0x80] sm:$0xff] %vm1362, %v1970
  %1973 = vst.msk [vmem:[%s4 + $0x88] sm:$0xff] %vm1362, %v1971
  %s1974 = scalar_lea.vmem [#allocation2], 576
  %v1975 = vld [vmem:[%s1974] ss:$2 sm:$0xff]
  %s1976 = scalar_lea.vmem [#allocation2], 592
  %v1977 = vld [vmem:[%s1976] ss:$2 sm:$0xff]
  %s1978 = scalar_lea.vmem [#allocation2], 577
  %v1979 = vld [vmem:[%s1978] ss:$2 sm:$0xff]
  %s1980 = scalar_lea.vmem [#allocation2], 593
  %v1981 = vld [vmem:[%s1980] ss:$2 sm:$0xff]
  %v1982 = vmax.f32 %v1975, %v1979
  %v1983 = vmax.f32 %v1977, %v1981
  %1984 = vst.msk [vmem:[%s4 + $0x90] sm:$0xff] %vm1362, %v1982
  %1985 = vst.msk [vmem:[%s4 + $0x98] sm:$0xff] %vm1362, %v1983
  %s1986 = scalar_lea.vmem [#allocation2], 640
  %v1987 = vld [vmem:[%s1986] ss:$2 sm:$0xff]
  %s1988 = scalar_lea.vmem [#allocation2], 656
  %v1989 = vld [vmem:[%s1988] ss:$2 sm:$0xff]
  %s1990 = scalar_lea.vmem [#allocation2], 641
  %v1991 = vld [vmem:[%s1990] ss:$2 sm:$0xff]
  %s1992 = scalar_lea.vmem [#allocation2], 657
  %v1993 = vld [vmem:[%s1992] ss:$2 sm:$0xff]
  %v1994 = vmax.f32 %v1987, %v1991
  %v1995 = vmax.f32 %v1989, %v1993
  %1996 = vst.msk [vmem:[%s4 + $0xa0] sm:$0xff] %vm1362, %v1994
  %1997 = vst.msk [vmem:[%s4 + $0xa8] sm:$0xff] %vm1362, %v1995
  %s1998 = scalar_lea.vmem [#allocation2], 704
  %v1999 = vld [vmem:[%s1998] ss:$2 sm:$0xff]
  %s2000 = scalar_lea.vmem [#allocation2], 720
  %v2001 = vld [vmem:[%s2000] ss:$2 sm:$0xff]
  %s2002 = scalar_lea.vmem [#allocation2], 705
  %v2003 = vld [vmem:[%s2002] ss:$2 sm:$0xff]
  %s2004 = scalar_lea.vmem [#allocation2], 721
  %v2005 = vld [vmem:[%s2004] ss:$2 sm:$0xff]
  %v2006 = vmax.f32 %v1999, %v2003
  %v2007 = vmax.f32 %v2001, %v2005
  %2008 = vst.msk [vmem:[%s4 + $0xb0] sm:$0xff] %vm1362, %v2006
  %2009 = vst.msk [vmem:[%s4 + $0xb8] sm:$0xff] %vm1362, %v2007
  %s2010 = scalar_lea.vmem [#allocation2], 768
  %v2011 = vld [vmem:[%s2010] ss:$2 sm:$0xff]
  %s2012 = scalar_lea.vmem [#allocation2], 784
  %v2013 = vld [vmem:[%s2012] ss:$2 sm:$0xff]
  %s2014 = scalar_lea.vmem [#allocation2], 769
  %v2015 = vld [vmem:[%s2014] ss:$2 sm:$0xff]
  %s2016 = scalar_lea.vmem [#allocation2], 785
  %v2017 = vld [vmem:[%s2016] ss:$2 sm:$0xff]
  %v2018 = vmax.f32 %v2011, %v2015
  %v2019 = vmax.f32 %v2013, %v2017
  %2020 = vst.msk [vmem:[%s4 + $0xc0] sm:$0xff] %vm1362, %v2018
  %2021 = vst.msk [vmem:[%s4 + $0xc8] sm:$0xff] %vm1362, %v2019
  %s2022 = scalar_lea.vmem [#allocation2], 832
  %v2023 = vld [vmem:[%s2022] ss:$2 sm:$0xff]
  %s2024 = scalar_lea.vmem [#allocation2], 848
  %v2025 = vld [vmem:[%s2024] ss:$2 sm:$0xff]
  %s2026 = scalar_lea.vmem [#allocation2], 833
  %v2027 = vld [vmem:[%s2026] ss:$2 sm:$0xff]
  %s2028 = scalar_lea.vmem [#allocation2], 849
  %v2029 = vld [vmem:[%s2028] ss:$2 sm:$0xff]
  %v2030 = vmax.f32 %v2023, %v2027
  %v2031 = vmax.f32 %v2025, %v2029
  %2032 = vst.msk [vmem:[%s4 + $0xd0] sm:$0xff] %vm1362, %v2030
  %2033 = vst.msk [vmem:[%s4 + $0xd8] sm:$0xff] %vm1362, %v2031
  %s2034 = scalar_lea.vmem [#allocation2], 896
  %v2035 = vld [vmem:[%s2034] ss:$2 sm:$0xff]
  %s2036 = scalar_lea.vmem [#allocation2], 912
  %v2037 = vld [vmem:[%s2036] ss:$2 sm:$0xff]
  %s2038 = scalar_lea.vmem [#allocation2], 897
  %v2039 = vld [vmem:[%s2038] ss:$2 sm:$0xff]
  %s2040 = scalar_lea.vmem [#allocation2], 913
  %v2041 = vld [vmem:[%s2040] ss:$2 sm:$0xff]
  %v2042 = vmax.f32 %v2035, %v2039
  %v2043 = vmax.f32 %v2037, %v2041
  %2044 = vst.msk [vmem:[%s4 + $0xe0] sm:$0xff] %vm1362, %v2042
  %2045 = vst.msk [vmem:[%s4 + $0xe8] sm:$0xff] %vm1362, %v2043
  %s2046 = scalar_lea.vmem [#allocation2], 960
  %v2047 = vld [vmem:[%s2046] ss:$2 sm:$0xff]
  %s2048 = scalar_lea.vmem [#allocation2], 976
  %v2049 = vld [vmem:[%s2048] ss:$2 sm:$0xff]
  %s2050 = scalar_lea.vmem [#allocation2], 961
  %v2051 = vld [vmem:[%s2050] ss:$2 sm:$0xff]
  %s2052 = scalar_lea.vmem [#allocation2], 977
  %v2053 = vld [vmem:[%s2052] ss:$2 sm:$0xff]
  %v2054 = vmax.f32 %v2047, %v2051
  %v2055 = vmax.f32 %v2049, %v2053
  %2056 = vst.msk [vmem:[%s4 + $0xf0] sm:$0xff] %vm1362, %v2054
  %2057 = vst.msk [vmem:[%s4 + $0xf8] sm:$0xff] %vm1362, %v2055
  %s2058 = scalar_lea.vmem %s0, 1024
  %v2059 = vld [vmem:[%s2058] sm:$0xff]
  %v2060 = vld [vmem:[%s2058 + $0x8] sm:$0xff]
  %v2061 = vld [vmem:[%s2058 + $0x10] sm:$0xff]
  %v2062 = vld [vmem:[%s2058 + $0x18] sm:$0xff]
  %v2063 = vld [vmem:[%s2058 + $0x20] sm:$0xff]
  %v2064 = vld [vmem:[%s2058 + $0x28] sm:$0xff]
  %v2065 = vld [vmem:[%s2058 + $0x30] sm:$0xff]
  %v2066 = vld [vmem:[%s2058 + $0x38] sm:$0xff]
  %v2067 = vld [vmem:[%s2058 + $0x40] sm:$0xff]
  %v2068 = vld [vmem:[%s2058 + $0x48] sm:$0xff]
  %v2069 = vld [vmem:[%s2058 + $0x50] sm:$0xff]
  %v2070 = vld [vmem:[%s2058 + $0x58] sm:$0xff]
  %v2071 = vld [vmem:[%s2058 + $0x60] sm:$0xff]
  %v2072 = vld [vmem:[%s2058 + $0x68] sm:$0xff]
  %v2073 = vld [vmem:[%s2058 + $0x70] sm:$0xff]
  %v2074 = vld [vmem:[%s2058 + $0x78] sm:$0xff]
  %v2075 = vld [vmem:[%s2058 + $0x80] sm:$0xff]
  %v2076 = vld [vmem:[%s2058 + $0x88] sm:$0xff]
  %v2077 = vld [vmem:[%s2058 + $0x90] sm:$0xff]
  %v2078 = vld [vmem:[%s2058 + $0x98] sm:$0xff]
  %v2079 = vld [vmem:[%s2058 + $0xa0] sm:$0xff]
  %v2080 = vld [vmem:[%s2058 + $0xa8] sm:$0xff]
  %v2081 = vld [vmem:[%s2058 + $0xb0] sm:$0xff]
  %v2082 = vld [vmem:[%s2058 + $0xb8] sm:$0xff]
  %v2083 = vld [vmem:[%s2058 + $0xc0] sm:$0xff]
  %v2084 = vld [vmem:[%s2058 + $0xc8] sm:$0xff]
  %v2085 = vld [vmem:[%s2058 + $0xd0] sm:$0xff]
  %v2086 = vld [vmem:[%s2058 + $0xd8] sm:$0xff]
  %v2087 = vld [vmem:[%s2058 + $0xe0] sm:$0xff]
  %v2088 = vld [vmem:[%s2058 + $0xe8] sm:$0xff]
  %v2089 = vld [vmem:[%s2058 + $0xf0] sm:$0xff]
  %v2090 = vld [vmem:[%s2058 + $0xf8] sm:$0xff]
  %v2091 = vld [vmem:[%s2058 + $0x100] sm:$0xff]
  %v2092 = vld [vmem:[%s2058 + $0x108] sm:$0xff]
  %v2093 = vld [vmem:[%s2058 + $0x110] sm:$0xff]
  %v2094 = vld [vmem:[%s2058 + $0x118] sm:$0xff]
  %v2095 = vld [vmem:[%s2058 + $0x120] sm:$0xff]
  %v2096 = vld [vmem:[%s2058 + $0x128] sm:$0xff]
  %v2097 = vld [vmem:[%s2058 + $0x130] sm:$0xff]
  %v2098 = vld [vmem:[%s2058 + $0x138] sm:$0xff]
  %v2099 = vld [vmem:[%s2058 + $0x140] sm:$0xff]
  %v2100 = vld [vmem:[%s2058 + $0x148] sm:$0xff]
  %v2101 = vld [vmem:[%s2058 + $0x150] sm:$0xff]
  %v2102 = vld [vmem:[%s2058 + $0x158] sm:$0xff]
  %v2103 = vld [vmem:[%s2058 + $0x160] sm:$0xff]
  %v2104 = vld [vmem:[%s2058 + $0x168] sm:$0xff]
  %v2105 = vld [vmem:[%s2058 + $0x170] sm:$0xff]
  %v2106 = vld [vmem:[%s2058 + $0x178] sm:$0xff]
  %v2107 = vld [vmem:[%s2058 + $0x180] sm:$0xff]
  %v2108 = vld [vmem:[%s2058 + $0x188] sm:$0xff]
  %v2109 = vld [vmem:[%s2058 + $0x190] sm:$0xff]
  %v2110 = vld [vmem:[%s2058 + $0x198] sm:$0xff]
  %v2111 = vld [vmem:[%s2058 + $0x1a0] sm:$0xff]
  %v2112 = vld [vmem:[%s2058 + $0x1a8] sm:$0xff]
  %v2113 = vld [vmem:[%s2058 + $0x1b0] sm:$0xff]
  %v2114 = vld [vmem:[%s2058 + $0x1b8] sm:$0xff]
  %v2115 = vld [vmem:[%s2058 + $0x1c0] sm:$0xff]
  %v2116 = vld [vmem:[%s2058 + $0x1c8] sm:$0xff]
  %v2117 = vld [vmem:[%s2058 + $0x1d0] sm:$0xff]
  %v2118 = vld [vmem:[%s2058 + $0x1d8] sm:$0xff]
  %v2119 = vld [vmem:[%s2058 + $0x1e0] sm:$0xff]
  %v2120 = vld [vmem:[%s2058 + $0x1e8] sm:$0xff]
  %v2121 = vld [vmem:[%s2058 + $0x1f0] sm:$0xff]
  %v2122 = vld [vmem:[%s2058 + $0x1f8] sm:$0xff]
  %v2123 = vld [vmem:[%s2058 + $0x200] sm:$0xff]
  %v2124 = vld [vmem:[%s2058 + $0x208] sm:$0xff]
  %v2125 = vld [vmem:[%s2058 + $0x210] sm:$0xff]
  %v2126 = vld [vmem:[%s2058 + $0x218] sm:$0xff]
  %v2127 = vld [vmem:[%s2058 + $0x220] sm:$0xff]
  %v2128 = vld [vmem:[%s2058 + $0x228] sm:$0xff]
  %v2129 = vld [vmem:[%s2058 + $0x230] sm:$0xff]
  %v2130 = vld [vmem:[%s2058 + $0x238] sm:$0xff]
  %v2131 = vld [vmem:[%s2058 + $0x240] sm:$0xff]
  %v2132 = vld [vmem:[%s2058 + $0x248] sm:$0xff]
  %v2133 = vld [vmem:[%s2058 + $0x250] sm:$0xff]
  %v2134 = vld [vmem:[%s2058 + $0x258] sm:$0xff]
  %v2135 = vld [vmem:[%s2058 + $0x260] sm:$0xff]
  %v2136 = vld [vmem:[%s2058 + $0x268] sm:$0xff]
  %v2137 = vld [vmem:[%s2058 + $0x270] sm:$0xff]
  %v2138 = vld [vmem:[%s2058 + $0x278] sm:$0xff]
  %v2139 = vld [vmem:[%s2058 + $0x280] sm:$0xff]
  %v2140 = vld [vmem:[%s2058 + $0x288] sm:$0xff]
  %v2141 = vld [vmem:[%s2058 + $0x290] sm:$0xff]
  %v2142 = vld [vmem:[%s2058 + $0x298] sm:$0xff]
  %v2143 = vld [vmem:[%s2058 + $0x2a0] sm:$0xff]
  %v2144 = vld [vmem:[%s2058 + $0x2a8] sm:$0xff]
  %v2145 = vld [vmem:[%s2058 + $0x2b0] sm:$0xff]
  %v2146 = vld [vmem:[%s2058 + $0x2b8] sm:$0xff]
  %v2147 = vld [vmem:[%s2058 + $0x2c0] sm:$0xff]
  %v2148 = vld [vmem:[%s2058 + $0x2c8] sm:$0xff]
  %v2149 = vld [vmem:[%s2058 + $0x2d0] sm:$0xff]
  %v2150 = vld [vmem:[%s2058 + $0x2d8] sm:$0xff]
  %v2151 = vld [vmem:[%s2058 + $0x2e0] sm:$0xff]
  %v2152 = vld [vmem:[%s2058 + $0x2e8] sm:$0xff]
  %v2153 = vld [vmem:[%s2058 + $0x2f0] sm:$0xff]
  %v2154 = vld [vmem:[%s2058 + $0x2f8] sm:$0xff]
  %v2155 = vld [vmem:[%s2058 + $0x300] sm:$0xff]
  %v2156 = vld [vmem:[%s2058 + $0x308] sm:$0xff]
  %v2157 = vld [vmem:[%s2058 + $0x310] sm:$0xff]
  %v2158 = vld [vmem:[%s2058 + $0x318] sm:$0xff]
  %v2159 = vld [vmem:[%s2058 + $0x320] sm:$0xff]
  %v2160 = vld [vmem:[%s2058 + $0x328] sm:$0xff]
  %v2161 = vld [vmem:[%s2058 + $0x330] sm:$0xff]
  %v2162 = vld [vmem:[%s2058 + $0x338] sm:$0xff]
  %v2163 = vld [vmem:[%s2058 + $0x340] sm:$0xff]
  %v2164 = vld [vmem:[%s2058 + $0x348] sm:$0xff]
  %v2165 = vld [vmem:[%s2058 + $0x350] sm:$0xff]
  %v2166 = vld [vmem:[%s2058 + $0x358] sm:$0xff]
  %v2167 = vld [vmem:[%s2058 + $0x360] sm:$0xff]
  %v2168 = vld [vmem:[%s2058 + $0x368] sm:$0xff]
  %v2169 = vld [vmem:[%s2058 + $0x370] sm:$0xff]
  %v2170 = vld [vmem:[%s2058 + $0x378] sm:$0xff]
  %v2171 = vld [vmem:[%s2058 + $0x380] sm:$0xff]
  %v2172 = vld [vmem:[%s2058 + $0x388] sm:$0xff]
  %v2173 = vld [vmem:[%s2058 + $0x390] sm:$0xff]
  %v2174 = vld [vmem:[%s2058 + $0x398] sm:$0xff]
  %v2175 = vld [vmem:[%s2058 + $0x3a0] sm:$0xff]
  %v2176 = vld [vmem:[%s2058 + $0x3a8] sm:$0xff]
  %v2177 = vld [vmem:[%s2058 + $0x3b0] sm:$0xff]
  %v2178 = vld [vmem:[%s2058 + $0x3b8] sm:$0xff]
  %v2179 = vld [vmem:[%s2058 + $0x3c0] sm:$0xff]
  %v2180 = vld [vmem:[%s2058 + $0x3c8] sm:$0xff]
  %v2181 = vld [vmem:[%s2058 + $0x3d0] sm:$0xff]
  %v2182 = vld [vmem:[%s2058 + $0x3d8] sm:$0xff]
  %v2183 = vld [vmem:[%s2058 + $0x3e0] sm:$0xff]
  %v2184 = vld [vmem:[%s2058 + $0x3e8] sm:$0xff]
  %v2185 = vld [vmem:[%s2058 + $0x3f0] sm:$0xff]
  %v2186 = vld [vmem:[%s2058 + $0x3f8] sm:$0xff]
  %v2187 = vpack.c.bf16 %v2060, %v2059
  %v2188 = vpack.c.bf16 %v2062, %v2061
  %v2189 = vpack.c.bf16 %v2064, %v2063
  %v2190 = vpack.c.bf16 %v2066, %v2065
  %v2191 = vpack.c.bf16 %v2068, %v2067
  %v2192 = vpack.c.bf16 %v2070, %v2069
  %v2193 = vpack.c.bf16 %v2072, %v2071
  %v2194 = vpack.c.bf16 %v2074, %v2073
  %v2195 = vpack.c.bf16 %v2076, %v2075
  %v2196 = vpack.c.bf16 %v2078, %v2077
  %v2197 = vpack.c.bf16 %v2080, %v2079
  %v2198 = vpack.c.bf16 %v2082, %v2081
  %v2199 = vpack.c.bf16 %v2084, %v2083
  %v2200 = vpack.c.bf16 %v2086, %v2085
  %v2201 = vpack.c.bf16 %v2088, %v2087
  %v2202 = vpack.c.bf16 %v2090, %v2089
  %v2203 = vpack.c.bf16 %v2092, %v2091
  %v2204 = vpack.c.bf16 %v2094, %v2093
  %v2205 = vpack.c.bf16 %v2096, %v2095
  %v2206 = vpack.c.bf16 %v2098, %v2097
  %v2207 = vpack.c.bf16 %v2100, %v2099
  %v2208 = vpack.c.bf16 %v2102, %v2101
  %v2209 = vpack.c.bf16 %v2104, %v2103
  %v2210 = vpack.c.bf16 %v2106, %v2105
  %v2211 = vpack.c.bf16 %v2108, %v2107
  %v2212 = vpack.c.bf16 %v2110, %v2109
  %v2213 = vpack.c.bf16 %v2112, %v2111
  %v2214 = vpack.c.bf16 %v2114, %v2113
  %v2215 = vpack.c.bf16 %v2116, %v2115
  %v2216 = vpack.c.bf16 %v2118, %v2117
  %v2217 = vpack.c.bf16 %v2120, %v2119
  %v2218 = vpack.c.bf16 %v2122, %v2121
  %v2219 = vpack.c.bf16 %v2124, %v2123
  %v2220 = vpack.c.bf16 %v2126, %v2125
  %v2221 = vpack.c.bf16 %v2128, %v2127
  %v2222 = vpack.c.bf16 %v2130, %v2129
  %v2223 = vpack.c.bf16 %v2132, %v2131
  %v2224 = vpack.c.bf16 %v2134, %v2133
  %v2225 = vpack.c.bf16 %v2136, %v2135
  %v2226 = vpack.c.bf16 %v2138, %v2137
  %v2227 = vpack.c.bf16 %v2140, %v2139
  %v2228 = vpack.c.bf16 %v2142, %v2141
  %v2229 = vpack.c.bf16 %v2144, %v2143
  %v2230 = vpack.c.bf16 %v2146, %v2145
  %v2231 = vpack.c.bf16 %v2148, %v2147
  %v2232 = vpack.c.bf16 %v2150, %v2149
  %v2233 = vpack.c.bf16 %v2152, %v2151
  %v2234 = vpack.c.bf16 %v2154, %v2153
  %v2235 = vpack.c.bf16 %v2156, %v2155
  %v2236 = vpack.c.bf16 %v2158, %v2157
  %v2237 = vpack.c.bf16 %v2160, %v2159
  %v2238 = vpack.c.bf16 %v2162, %v2161
  %v2239 = vpack.c.bf16 %v2164, %v2163
  %v2240 = vpack.c.bf16 %v2166, %v2165
  %v2241 = vpack.c.bf16 %v2168, %v2167
  %v2242 = vpack.c.bf16 %v2170, %v2169
  %v2243 = vpack.c.bf16 %v2172, %v2171
  %v2244 = vpack.c.bf16 %v2174, %v2173
  %v2245 = vpack.c.bf16 %v2176, %v2175
  %v2246 = vpack.c.bf16 %v2178, %v2177
  %v2247 = vpack.c.bf16 %v2180, %v2179
  %v2248 = vpack.c.bf16 %v2182, %v2181
  %v2249 = vpack.c.bf16 %v2184, %v2183
  %v2250 = vpack.c.bf16 %v2186, %v2185
  %v2251 = vld [vmem:[%s1] sm:$0xf]
  %v2252 = vld [vmem:[%s1 + $0x4] sm:$0xf]
  %v2253 = vld [vmem:[%s1 + $0x8] sm:$0xf]
  %v2254 = vld [vmem:[%s1 + $0xc] sm:$0xf]
  %v2259 = vunpack.c.l.b16 %v2251
  %v2260 = vunpack.c.l.b16 %v2252
  %v2261 = vunpack.c.l.b16 %v2253
  %v2262 = vunpack.c.l.b16 %v2254
  %v2263 = vpack.c.b16 %v2260, %v2259
  %v2264 = vpack.c.b16 %v2262, %v2261
  %v2268 = vsel %vm226, %v2187, 0
  %v2271 = vsel %vm226, %v2188, 0
  %v2274 = vsel %vm226, %v2189, 0
  %v2277 = vsel %vm226, %v2190, 0
  %v2280 = vsel %vm226, %v2191, 0
  %v2283 = vsel %vm226, %v2192, 0
  %v2286 = vsel %vm226, %v2193, 0
  %v2289 = vsel %vm226, %v2194, 0
  %v2292 = vsel %vm226, %v2195, 0
  %v2295 = vsel %vm226, %v2196, 0
  %v2298 = vsel %vm226, %v2197, 0
  %v2301 = vsel %vm226, %v2198, 0
  %v2304 = vsel %vm226, %v2199, 0
  %v2307 = vsel %vm226, %v2200, 0
  %v2310 = vsel %vm226, %v2201, 0
  %v2313 = vsel %vm226, %v2202, 0
  %v2316 = vsel %vm226, %v2203, 0
  %v2319 = vsel %vm226, %v2204, 0
  %v2322 = vsel %vm226, %v2205, 0
  %v2325 = vsel %vm226, %v2206, 0
  %v2328 = vsel %vm226, %v2207, 0
  %v2331 = vsel %vm226, %v2208, 0
  %v2334 = vsel %vm226, %v2209, 0
  %v2337 = vsel %vm226, %v2210, 0
  %v2340 = vsel %vm226, %v2211, 0
  %v2343 = vsel %vm226, %v2212, 0
  %v2346 = vsel %vm226, %v2213, 0
  %v2349 = vsel %vm226, %v2214, 0
  %v2352 = vsel %vm226, %v2215, 0
  %v2355 = vsel %vm226, %v2216, 0
  %v2358 = vsel %vm226, %v2217, 0
  %v2361 = vsel %vm226, %v2218, 0
  %v2364 = vsel %vm226, %v2219, 0
  %v2367 = vsel %vm226, %v2220, 0
  %v2370 = vsel %vm226, %v2221, 0
  %v2373 = vsel %vm226, %v2222, 0
  %v2376 = vsel %vm226, %v2223, 0
  %v2379 = vsel %vm226, %v2224, 0
  %v2382 = vsel %vm226, %v2225, 0
  %v2385 = vsel %vm226, %v2226, 0
  %v2388 = vsel %vm226, %v2227, 0
  %v2391 = vsel %vm226, %v2228, 0
  %v2394 = vsel %vm226, %v2229, 0
  %v2397 = vsel %vm226, %v2230, 0
  %v2400 = vsel %vm226, %v2231, 0
  %v2403 = vsel %vm226, %v2232, 0
  %v2406 = vsel %vm226, %v2233, 0
  %v2409 = vsel %vm226, %v2234, 0
  %v2412 = vsel %vm226, %v2235, 0
  %v2415 = vsel %vm226, %v2236, 0
  %v2418 = vsel %vm226, %v2237, 0
  %v2421 = vsel %vm226, %v2238, 0
  %v2424 = vsel %vm226, %v2239, 0
  %v2427 = vsel %vm226, %v2240, 0
  %v2430 = vsel %vm226, %v2241, 0
  %v2433 = vsel %vm226, %v2242, 0
  %v2436 = vsel %vm226, %v2243, 0
  %v2439 = vsel %vm226, %v2244, 0
  %v2442 = vsel %vm226, %v2245, 0
  %v2445 = vsel %vm226, %v2246, 0
  %v2448 = vsel %vm226, %v2247, 0
  %v2451 = vsel %vm226, %v2248, 0
  %v2454 = vsel %vm226, %v2249, 0
  %v2457 = vsel %vm226, %v2250, 0
  %2459 = vmatprep.subr.bf16.mxu0 0
  %2460 = vmatpush1.bf16.msra.mxu0 %v2263
  %2461 = vmatprep.subr.bf16.mxu0 0
  %2462 = vmatpush1.bf16.msra.mxu0 %v2264
  %2463 = vmatprep.subr.bf16.mxu0 0
  %2464 = vmatpush1.bf16.msra.mxu0 0
  %2465 = vmatprep.subr.bf16.mxu0 0
  %2466 = vmatpush1.bf16.msra.mxu0 0
  %2467 = vmatprep.subr.bf16.mxu0 0
  %2468 = vmatpush1.bf16.msra.mxu0 0
  %2469 = vmatprep.subr.bf16.mxu0 0
  %2470 = vmatpush1.bf16.msra.mxu0 0
  %2471 = vmatprep.subr.bf16.mxu0 0
  %2472 = vmatpush1.bf16.msra.mxu0 0
  %2473 = vmatprep.subr.bf16.mxu0 0
  %2474 = vmatpush1.bf16.msra.mxu0 0
  %2475 = vmatprep.subr.bf16.mxu0 0
  %2476 = vmatpush1.bf16.msra.mxu0 0
  %2477 = vmatprep.subr.bf16.mxu0 0
  %2478 = vmatpush1.bf16.msra.mxu0 0
  %2479 = vmatprep.subr.bf16.mxu0 0
  %2480 = vmatpush1.bf16.msra.mxu0 0
  %2481 = vmatprep.subr.bf16.mxu0 0
  %2482 = vmatpush1.bf16.msra.mxu0 0
  %2483 = vmatprep.subr.bf16.mxu0 0
  %2484 = vmatpush1.bf16.msra.mxu0 0
  %2485 = vmatprep.subr.bf16.mxu0 0
  %2486 = vmatpush1.bf16.msra.mxu0 0
  %2487 = vmatprep.subr.bf16.mxu0 0
  %2488 = vmatpush1.bf16.msra.mxu0 0
  %2489 = vmatprep.subr.bf16.mxu0 0
  %2490 = vmatpush1.bf16.msra.mxu0 0
  %2491 = vmatprep.mubr.bf16.mxu0 0
  %2492 = vmatmul.mubr.bf16.gmra.mrb[0].mxu0 %v2268
  %v2493 = vpop.f32.mrb[0].mxu0
  %v2494 = vadd.f32 0.0, %v2493
  %v2495 = vpop.f32.mrb[0].mxu0
  %v2496 = vpop.f32.mrb[0].mxu0
  %v2497 = vadd.f32 0.0, %v2496
  %v2498 = vpop.f32.mrb[0].mxu0
  %2499 = vmatprep.mubr.bf16.mxu0 0
  %2500 = vmatmul.mubr.bf16.gmra.mrb[0].mxu0 %v2271
  %v2501 = vpop.f32.mrb[0].mxu0
  %v2502 = vadd.f32 0.0, %v2501
  %v2503 = vpop.f32.mrb[0].mxu0
  %v2504 = vpop.f32.mrb[0].mxu0
  %v2505 = vadd.f32 0.0, %v2504
  %v2506 = vpop.f32.mrb[0].mxu0
  %2507 = vmatprep.mubr.bf16.mxu0 0
  %2508 = vmatmul.mubr.bf16.gmra.mrb[0].mxu0 %v2274
  %v2509 = vpop.f32.mrb[0].mxu0
  %v2510 = vadd.f32 0.0, %v2509
  %v2511 = vpop.f32.mrb[0].mxu0
  %v2512 = vpop.f32.mrb[0].mxu0
  %v2513 = vadd.f32 0.0, %v2512
  %v2514 = vpop.f32.mrb[0].mxu0
  %2515 = vmatprep.mubr.bf16.mxu0 0
  %2516 = vmatmul.mubr.bf16.gmra.mrb[0].mxu0 %v2277
  %v2517 = vpop.f32.mrb[0].mxu0
  %v2518 = vadd.f32 0.0, %v2517
  %v2519 = vpop.f32.mrb[0].mxu0
  %v2520 = vpop.f32.mrb[0].mxu0
  %v2521 = vadd.f32 0.0, %v2520
  %v2522 = vpop.f32.mrb[0].mxu0
  %2523 = vmatprep.mubr.bf16.mxu0 0
  %2524 = vmatmul.mubr.bf16.gmra.mrb[0].mxu0 %v2280
  %v2525 = vpop.f32.mrb[0].mxu0
  %v2526 = vadd.f32 0.0, %v2525
  %v2527 = vpop.f32.mrb[0].mxu0
  %v2528 = vpop.f32.mrb[0].mxu0
  %v2529 = vadd.f32 0.0, %v2528
  %v2530 = vpop.f32.mrb[0].mxu0
  %2531 = vmatprep.mubr.bf16.mxu0 0
  %2532 = vmatmul.mubr.bf16.gmra.mrb[0].mxu0 %v2283
  %v2533 = vpop.f32.mrb[0].mxu0
  %v2534 = vadd.f32 0.0, %v2533
  %v2535 = vpop.f32.mrb[0].mxu0
  %v2536 = vpop.f32.mrb[0].mxu0
  %v2537 = vadd.f32 0.0, %v2536
  %v2538 = vpop.f32.mrb[0].mxu0
  %2539 = vmatprep.mubr.bf16.mxu0 0
  %2540 = vmatmul.mubr.bf16.gmra.mrb[0].mxu0 %v2286
  %v2541 = vpop.f32.mrb[0].mxu0
  %v2542 = vadd.f32 0.0, %v2541
  %v2543 = vpop.f32.mrb[0].mxu0
  %v2544 = vpop.f32.mrb[0].mxu0
  %v2545 = vadd.f32 0.0, %v2544
  %v2546 = vpop.f32.mrb[0].mxu0
  %2547 = vmatprep.mubr.bf16.mxu0 0
  %2548 = vmatmul.mubr.bf16.gmra.mrb[0].mxu0 %v2289
  %v2549 = vpop.f32.mrb[0].mxu0
  %v2550 = vadd.f32 0.0, %v2549
  %v2551 = vpop.f32.mrb[0].mxu0
  %v2552 = vpop.f32.mrb[0].mxu0
  %v2553 = vadd.f32 0.0, %v2552
  %v2554 = vpop.f32.mrb[0].mxu0
  %2555 = vmatprep.mubr.bf16.mxu0 0
  %2556 = vmatmul.mubr.bf16.gmra.mrb[0].mxu0 %v2292
  %v2557 = vpop.f32.mrb[0].mxu0
  %v2558 = vadd.f32 0.0, %v2557
  %v2559 = vpop.f32.mrb[0].mxu0
  %v2560 = vpop.f32.mrb[0].mxu0
  %v2561 = vadd.f32 0.0, %v2560
  %v2562 = vpop.f32.mrb[0].mxu0
  %2563 = vmatprep.mubr.bf16.mxu0 0
  %2564 = vmatmul.mubr.bf16.gmra.mrb[0].mxu0 %v2295
  %v2565 = vpop.f32.mrb[0].mxu0
  %v2566 = vadd.f32 0.0, %v2565
  %v2567 = vpop.f32.mrb[0].mxu0
  %v2568 = vpop.f32.mrb[0].mxu0
  %v2569 = vadd.f32 0.0, %v2568
  %v2570 = vpop.f32.mrb[0].mxu0
  %2571 = vmatprep.mubr.bf16.mxu0 0
  %2572 = vmatmul.mubr.bf16.gmra.mrb[0].mxu0 %v2298
  %v2573 = vpop.f32.mrb[0].mxu0
  %v2574 = vadd.f32 0.0, %v2573
  %v2575 = vpop.f32.mrb[0].mxu0
  %v2576 = vpop.f32.mrb[0].mxu0
  %v2577 = vadd.f32 0.0, %v2576
  %v2578 = vpop.f32.mrb[0].mxu0
  %2579 = vmatprep.mubr.bf16.mxu0 0
  %2580 = vmatmul.mubr.bf16.gmra.mrb[0].mxu0 %v2301
  %v2581 = vpop.f32.mrb[0].mxu0
  %v2582 = vadd.f32 0.0, %v2581
  %v2583 = vpop.f32.mrb[0].mxu0
  %v2584 = vpop.f32.mrb[0].mxu0
  %v2585 = vadd.f32 0.0, %v2584
  %v2586 = vpop.f32.mrb[0].mxu0
  %2587 = vmatprep.mubr.bf16.mxu0 0
  %2588 = vmatmul.mubr.bf16.gmra.mrb[0].mxu0 %v2304
  %v2589 = vpop.f32.mrb[0].mxu0
  %v2590 = vadd.f32 0.0, %v2589
  %v2591 = vpop.f32.mrb[0].mxu0
  %v2592 = vpop.f32.mrb[0].mxu0
  %v2593 = vadd.f32 0.0, %v2592
  %v2594 = vpop.f32.mrb[0].mxu0
  %2595 = vmatprep.mubr.bf16.mxu0 0
  %2596 = vmatmul.mubr.bf16.gmra.mrb[0].mxu0 %v2307
  %v2597 = vpop.f32.mrb[0].mxu0
  %v2598 = vadd.f32 0.0, %v2597
  %v2599 = vpop.f32.mrb[0].mxu0
  %v2600 = vpop.f32.mrb[0].mxu0
  %v2601 = vadd.f32 0.0, %v2600
  %v2602 = vpop.f32.mrb[0].mxu0
  %2603 = vmatprep.mubr.bf16.mxu0 0
  %2604 = vmatmul.mubr.bf16.gmra.mrb[0].mxu0 %v2310
  %v2605 = vpop.f32.mrb[0].mxu0
  %v2606 = vadd.f32 0.0, %v2605
  %v2607 = vpop.f32.mrb[0].mxu0
  %v2608 = vpop.f32.mrb[0].mxu0
  %v2609 = vadd.f32 0.0, %v2608
  %v2610 = vpop.f32.mrb[0].mxu0
  %2611 = vmatprep.mubr.bf16.mxu0 0
  %2612 = vmatmul.mubr.bf16.gmra.mrb[0].mxu0 %v2313
  %v2613 = vpop.f32.mrb[0].mxu0
  %v2614 = vadd.f32 0.0, %v2613
  %v2615 = vpop.f32.mrb[0].mxu0
  %v2616 = vpop.f32.mrb[0].mxu0
  %v2617 = vadd.f32 0.0, %v2616
  %v2618 = vpop.f32.mrb[0].mxu0
  %2619 = vmatprep.mubr.bf16.mxu0 0
  %2620 = vmatmul.mubr.bf16.gmra.mrb[0].mxu0 %v2316
  %v2621 = vpop.f32.mrb[0].mxu0
  %v2622 = vadd.f32 0.0, %v2621
  %v2623 = vpop.f32.mrb[0].mxu0
  %v2624 = vpop.f32.mrb[0].mxu0
  %v2625 = vadd.f32 0.0, %v2624
  %v2626 = vpop.f32.mrb[0].mxu0
  %2627 = vmatprep.mubr.bf16.mxu0 0
  %2628 = vmatmul.mubr.bf16.gmra.mrb[0].mxu0 %v2319
  %v2629 = vpop.f32.mrb[0].mxu0
  %v2630 = vadd.f32 0.0, %v2629
  %v2631 = vpop.f32.mrb[0].mxu0
  %v2632 = vpop.f32.mrb[0].mxu0
  %v2633 = vadd.f32 0.0, %v2632
  %v2634 = vpop.f32.mrb[0].mxu0
  %2635 = vmatprep.mubr.bf16.mxu0 0
  %2636 = vmatmul.mubr.bf16.gmra.mrb[0].mxu0 %v2322
  %v2637 = vpop.f32.mrb[0].mxu0
  %v2638 = vadd.f32 0.0, %v2637
  %v2639 = vpop.f32.mrb[0].mxu0
  %v2640 = vpop.f32.mrb[0].mxu0
  %v2641 = vadd.f32 0.0, %v2640
  %v2642 = vpop.f32.mrb[0].mxu0
  %2643 = vmatprep.mubr.bf16.mxu0 0
  %2644 = vmatmul.mubr.bf16.gmra.mrb[0].mxu0 %v2325
  %v2645 = vpop.f32.mrb[0].mxu0
  %v2646 = vadd.f32 0.0, %v2645
  %v2647 = vpop.f32.mrb[0].mxu0
  %v2648 = vpop.f32.mrb[0].mxu0
  %v2649 = vadd.f32 0.0, %v2648
  %v2650 = vpop.f32.mrb[0].mxu0
  %2651 = vmatprep.mubr.bf16.mxu0 0
  %2652 = vmatmul.mubr.bf16.gmra.mrb[0].mxu0 %v2328
  %v2653 = vpop.f32.mrb[0].mxu0
  %v2654 = vadd.f32 0.0, %v2653
  %v2655 = vpop.f32.mrb[0].mxu0
  %v2656 = vpop.f32.mrb[0].mxu0
  %v2657 = vadd.f32 0.0, %v2656
  %v2658 = vpop.f32.mrb[0].mxu0
  %2659 = vmatprep.mubr.bf16.mxu0 0
  %2660 = vmatmul.mubr.bf16.gmra.mrb[0].mxu0 %v2331
  %v2661 = vpop.f32.mrb[0].mxu0
  %v2662 = vadd.f32 0.0, %v2661
  %v2663 = vpop.f32.mrb[0].mxu0
  %v2664 = vpop.f32.mrb[0].mxu0
  %v2665 = vadd.f32 0.0, %v2664
  %v2666 = vpop.f32.mrb[0].mxu0
  %2667 = vmatprep.mubr.bf16.mxu0 0
  %2668 = vmatmul.mubr.bf16.gmra.mrb[0].mxu0 %v2334
  %v2669 = vpop.f32.mrb[0].mxu0
  %v2670 = vadd.f32 0.0, %v2669
  %v2671 = vpop.f32.mrb[0].mxu0
  %v2672 = vpop.f32.mrb[0].mxu0
  %v2673 = vadd.f32 0.0, %v2672
  %v2674 = vpop.f32.mrb[0].mxu0
  %2675 = vmatprep.mubr.bf16.mxu0 0
  %2676 = vmatmul.mubr.bf16.gmra.mrb[0].mxu0 %v2337
  %v2677 = vpop.f32.mrb[0].mxu0
  %v2678 = vadd.f32 0.0, %v2677
  %v2679 = vpop.f32.mrb[0].mxu0
  %v2680 = vpop.f32.mrb[0].mxu0
  %v2681 = vadd.f32 0.0, %v2680
  %v2682 = vpop.f32.mrb[0].mxu0
  %2683 = vmatprep.mubr.bf16.mxu0 0
  %2684 = vmatmul.mubr.bf16.gmra.mrb[0].mxu0 %v2340
  %v2685 = vpop.f32.mrb[0].mxu0
  %v2686 = vadd.f32 0.0, %v2685
  %v2687 = vpop.f32.mrb[0].mxu0
  %v2688 = vpop.f32.mrb[0].mxu0
  %v2689 = vadd.f32 0.0, %v2688
  %v2690 = vpop.f32.mrb[0].mxu0
  %2691 = vmatprep.mubr.bf16.mxu0 0
  %2692 = vmatmul.mubr.bf16.gmra.mrb[0].mxu0 %v2343
  %v2693 = vpop.f32.mrb[0].mxu0
  %v2694 = vadd.f32 0.0, %v2693
  %v2695 = vpop.f32.mrb[0].mxu0
  %v2696 = vpop.f32.mrb[0].mxu0
  %v2697 = vadd.f32 0.0, %v2696
  %v2698 = vpop.f32.mrb[0].mxu0
  %2699 = vmatprep.mubr.bf16.mxu0 0
  %2700 = vmatmul.mubr.bf16.gmra.mrb[0].mxu0 %v2346
  %v2701 = vpop.f32.mrb[0].mxu0
  %v2702 = vadd.f32 0.0, %v2701
  %v2703 = vpop.f32.mrb[0].mxu0
  %v2704 = vpop.f32.mrb[0].mxu0
  %v2705 = vadd.f32 0.0, %v2704
  %v2706 = vpop.f32.mrb[0].mxu0
  %2707 = vmatprep.mubr.bf16.mxu0 0
  %2708 = vmatmul.mubr.bf16.gmra.mrb[0].mxu0 %v2349
  %v2709 = vpop.f32.mrb[0].mxu0
  %v2710 = vadd.f32 0.0, %v2709
  %v2711 = vpop.f32.mrb[0].mxu0
  %v2712 = vpop.f32.mrb[0].mxu0
  %v2713 = vadd.f32 0.0, %v2712
  %v2714 = vpop.f32.mrb[0].mxu0
  %2715 = vmatprep.mubr.bf16.mxu0 0
  %2716 = vmatmul.mubr.bf16.gmra.mrb[0].mxu0 %v2352
  %v2717 = vpop.f32.mrb[0].mxu0
  %v2718 = vadd.f32 0.0, %v2717
  %v2719 = vpop.f32.mrb[0].mxu0
  %v2720 = vpop.f32.mrb[0].mxu0
  %v2721 = vadd.f32 0.0, %v2720
  %v2722 = vpop.f32.mrb[0].mxu0
  %2723 = vmatprep.mubr.bf16.mxu0 0
  %2724 = vmatmul.mubr.bf16.gmra.mrb[0].mxu0 %v2355
  %v2725 = vpop.f32.mrb[0].mxu0
  %v2726 = vadd.f32 0.0, %v2725
  %v2727 = vpop.f32.mrb[0].mxu0
  %v2728 = vpop.f32.mrb[0].mxu0
  %v2729 = vadd.f32 0.0, %v2728
  %v2730 = vpop.f32.mrb[0].mxu0
  %2731 = vmatprep.mubr.bf16.mxu0 0
  %2732 = vmatmul.mubr.bf16.gmra.mrb[0].mxu0 %v2358
  %v2733 = vpop.f32.mrb[0].mxu0
  %v2734 = vadd.f32 0.0, %v2733
  %v2735 = vpop.f32.mrb[0].mxu0
  %v2736 = vpop.f32.mrb[0].mxu0
  %v2737 = vadd.f32 0.0, %v2736
  %v2738 = vpop.f32.mrb[0].mxu0
  %2739 = vmatprep.mubr.bf16.mxu0 0
  %2740 = vmatmul.mubr.bf16.gmra.mrb[0].mxu0 %v2361
  %v2741 = vpop.f32.mrb[0].mxu0
  %v2742 = vadd.f32 0.0, %v2741
  %v2743 = vpop.f32.mrb[0].mxu0
  %v2744 = vpop.f32.mrb[0].mxu0
  %v2745 = vadd.f32 0.0, %v2744
  %v2746 = vpop.f32.mrb[0].mxu0
  %2747 = vmatprep.mubr.bf16.mxu0 0
  %2748 = vmatmul.mubr.bf16.gmra.mrb[0].mxu0 %v2364
  %v2749 = vpop.f32.mrb[0].mxu0
  %v2750 = vadd.f32 0.0, %v2749
  %v2751 = vpop.f32.mrb[0].mxu0
  %v2752 = vpop.f32.mrb[0].mxu0
  %v2753 = vadd.f32 0.0, %v2752
  %v2754 = vpop.f32.mrb[0].mxu0
  %2755 = vmatprep.mubr.bf16.mxu0 0
  %2756 = vmatmul.mubr.bf16.gmra.mrb[0].mxu0 %v2367
  %v2757 = vpop.f32.mrb[0].mxu0
  %v2758 = vadd.f32 0.0, %v2757
  %v2759 = vpop.f32.mrb[0].mxu0
  %v2760 = vpop.f32.mrb[0].mxu0
  %v2761 = vadd.f32 0.0, %v2760
  %v2762 = vpop.f32.mrb[0].mxu0
  %2763 = vmatprep.mubr.bf16.mxu0 0
  %2764 = vmatmul.mubr.bf16.gmra.mrb[0].mxu0 %v2370
  %v2765 = vpop.f32.mrb[0].mxu0
  %v2766 = vadd.f32 0.0, %v2765
  %v2767 = vpop.f32.mrb[0].mxu0
  %v2768 = vpop.f32.mrb[0].mxu0
  %v2769 = vadd.f32 0.0, %v2768
  %v2770 = vpop.f32.mrb[0].mxu0
  %2771 = vmatprep.mubr.bf16.mxu0 0
  %2772 = vmatmul.mubr.bf16.gmra.mrb[0].mxu0 %v2373
  %v2773 = vpop.f32.mrb[0].mxu0
  %v2774 = vadd.f32 0.0, %v2773
  %v2775 = vpop.f32.mrb[0].mxu0
  %v2776 = vpop.f32.mrb[0].mxu0
  %v2777 = vadd.f32 0.0, %v2776
  %v2778 = vpop.f32.mrb[0].mxu0
  %2779 = vmatprep.mubr.bf16.mxu0 0
  %2780 = vmatmul.mubr.bf16.gmra.mrb[0].mxu0 %v2376
  %v2781 = vpop.f32.mrb[0].mxu0
  %v2782 = vadd.f32 0.0, %v2781
  %v2783 = vpop.f32.mrb[0].mxu0
  %v2784 = vpop.f32.mrb[0].mxu0
  %v2785 = vadd.f32 0.0, %v2784
  %v2786 = vpop.f32.mrb[0].mxu0
  %2787 = vmatprep.mubr.bf16.mxu0 0
  %2788 = vmatmul.mubr.bf16.gmra.mrb[0].mxu0 %v2379
  %v2789 = vpop.f32.mrb[0].mxu0
  %v2790 = vadd.f32 0.0, %v2789
  %v2791 = vpop.f32.mrb[0].mxu0
  %v2792 = vpop.f32.mrb[0].mxu0
  %v2793 = vadd.f32 0.0, %v2792
  %v2794 = vpop.f32.mrb[0].mxu0
  %2795 = vmatprep.mubr.bf16.mxu0 0
  %2796 = vmatmul.mubr.bf16.gmra.mrb[0].mxu0 %v2382
  %v2797 = vpop.f32.mrb[0].mxu0
  %v2798 = vadd.f32 0.0, %v2797
  %v2799 = vpop.f32.mrb[0].mxu0
  %v2800 = vpop.f32.mrb[0].mxu0
  %v2801 = vadd.f32 0.0, %v2800
  %v2802 = vpop.f32.mrb[0].mxu0
  %2803 = vmatprep.mubr.bf16.mxu0 0
  %2804 = vmatmul.mubr.bf16.gmra.mrb[0].mxu0 %v2385
  %v2805 = vpop.f32.mrb[0].mxu0
  %v2806 = vadd.f32 0.0, %v2805
  %v2807 = vpop.f32.mrb[0].mxu0
  %v2808 = vpop.f32.mrb[0].mxu0
  %v2809 = vadd.f32 0.0, %v2808
  %v2810 = vpop.f32.mrb[0].mxu0
  %2811 = vmatprep.mubr.bf16.mxu0 0
  %2812 = vmatmul.mubr.bf16.gmra.mrb[0].mxu0 %v2388
  %v2813 = vpop.f32.mrb[0].mxu0
  %v2814 = vadd.f32 0.0, %v2813
  %v2815 = vpop.f32.mrb[0].mxu0
  %v2816 = vpop.f32.mrb[0].mxu0
  %v2817 = vadd.f32 0.0, %v2816
  %v2818 = vpop.f32.mrb[0].mxu0
  %2819 = vmatprep.mubr.bf16.mxu0 0
  %2820 = vmatmul.mubr.bf16.gmra.mrb[0].mxu0 %v2391
  %v2821 = vpop.f32.mrb[0].mxu0
  %v2822 = vadd.f32 0.0, %v2821
  %v2823 = vpop.f32.mrb[0].mxu0
  %v2824 = vpop.f32.mrb[0].mxu0
  %v2825 = vadd.f32 0.0, %v2824
  %v2826 = vpop.f32.mrb[0].mxu0
  %2827 = vmatprep.mubr.bf16.mxu0 0
  %2828 = vmatmul.mubr.bf16.gmra.mrb[0].mxu0 %v2394
  %v2829 = vpop.f32.mrb[0].mxu0
  %v2830 = vadd.f32 0.0, %v2829
  %v2831 = vpop.f32.mrb[0].mxu0
  %v2832 = vpop.f32.mrb[0].mxu0
  %v2833 = vadd.f32 0.0, %v2832
  %v2834 = vpop.f32.mrb[0].mxu0
  %2835 = vmatprep.mubr.bf16.mxu0 0
  %2836 = vmatmul.mubr.bf16.gmra.mrb[0].mxu0 %v2397
  %v2837 = vpop.f32.mrb[0].mxu0
  %v2838 = vadd.f32 0.0, %v2837
  %v2839 = vpop.f32.mrb[0].mxu0
  %v2840 = vpop.f32.mrb[0].mxu0
  %v2841 = vadd.f32 0.0, %v2840
  %v2842 = vpop.f32.mrb[0].mxu0
  %2843 = vmatprep.mubr.bf16.mxu0 0
  %2844 = vmatmul.mubr.bf16.gmra.mrb[0].mxu0 %v2400
  %v2845 = vpop.f32.mrb[0].mxu0
  %v2846 = vadd.f32 0.0, %v2845
  %v2847 = vpop.f32.mrb[0].mxu0
  %v2848 = vpop.f32.mrb[0].mxu0
  %v2849 = vadd.f32 0.0, %v2848
  %v2850 = vpop.f32.mrb[0].mxu0
  %2851 = vmatprep.mubr.bf16.mxu0 0
  %2852 = vmatmul.mubr.bf16.gmra.mrb[0].mxu0 %v2403
  %v2853 = vpop.f32.mrb[0].mxu0
  %v2854 = vadd.f32 0.0, %v2853
  %v2855 = vpop.f32.mrb[0].mxu0
  %v2856 = vpop.f32.mrb[0].mxu0
  %v2857 = vadd.f32 0.0, %v2856
  %v2858 = vpop.f32.mrb[0].mxu0
  %2859 = vmatprep.mubr.bf16.mxu0 0
  %2860 = vmatmul.mubr.bf16.gmra.mrb[0].mxu0 %v2406
  %v2861 = vpop.f32.mrb[0].mxu0
  %v2862 = vadd.f32 0.0, %v2861
  %v2863 = vpop.f32.mrb[0].mxu0
  %v2864 = vpop.f32.mrb[0].mxu0
  %v2865 = vadd.f32 0.0, %v2864
  %v2866 = vpop.f32.mrb[0].mxu0
  %2867 = vmatprep.mubr.bf16.mxu0 0
  %2868 = vmatmul.mubr.bf16.gmra.mrb[0].mxu0 %v2409
  %v2869 = vpop.f32.mrb[0].mxu0
  %v2870 = vadd.f32 0.0, %v2869
  %v2871 = vpop.f32.mrb[0].mxu0
  %v2872 = vpop.f32.mrb[0].mxu0
  %v2873 = vadd.f32 0.0, %v2872
  %v2874 = vpop.f32.mrb[0].mxu0
  %2875 = vmatprep.mubr.bf16.mxu0 0
  %2876 = vmatmul.mubr.bf16.gmra.mrb[0].mxu0 %v2412
  %v2877 = vpop.f32.mrb[0].mxu0
  %v2878 = vadd.f32 0.0, %v2877
  %v2879 = vpop.f32.mrb[0].mxu0
  %v2880 = vpop.f32.mrb[0].mxu0
  %v2881 = vadd.f32 0.0, %v2880
  %v2882 = vpop.f32.mrb[0].mxu0
  %2883 = vmatprep.mubr.bf16.mxu0 0
  %2884 = vmatmul.mubr.bf16.gmra.mrb[0].mxu0 %v2415
  %v2885 = vpop.f32.mrb[0].mxu0
  %v2886 = vadd.f32 0.0, %v2885
  %v2887 = vpop.f32.mrb[0].mxu0
  %v2888 = vpop.f32.mrb[0].mxu0
  %v2889 = vadd.f32 0.0, %v2888
  %v2890 = vpop.f32.mrb[0].mxu0
  %2891 = vmatprep.mubr.bf16.mxu0 0
  %2892 = vmatmul.mubr.bf16.gmra.mrb[0].mxu0 %v2418
  %v2893 = vpop.f32.mrb[0].mxu0
  %v2894 = vadd.f32 0.0, %v2893
  %v2895 = vpop.f32.mrb[0].mxu0
  %v2896 = vpop.f32.mrb[0].mxu0
  %v2897 = vadd.f32 0.0, %v2896
  %v2898 = vpop.f32.mrb[0].mxu0
  %2899 = vmatprep.mubr.bf16.mxu0 0
  %2900 = vmatmul.mubr.bf16.gmra.mrb[0].mxu0 %v2421
  %v2901 = vpop.f32.mrb[0].mxu0
  %v2902 = vadd.f32 0.0, %v2901
  %v2903 = vpop.f32.mrb[0].mxu0
  %v2904 = vpop.f32.mrb[0].mxu0
  %v2905 = vadd.f32 0.0, %v2904
  %v2906 = vpop.f32.mrb[0].mxu0
  %2907 = vmatprep.mubr.bf16.mxu0 0
  %2908 = vmatmul.mubr.bf16.gmra.mrb[0].mxu0 %v2424
  %v2909 = vpop.f32.mrb[0].mxu0
  %v2910 = vadd.f32 0.0, %v2909
  %v2911 = vpop.f32.mrb[0].mxu0
  %v2912 = vpop.f32.mrb[0].mxu0
  %v2913 = vadd.f32 0.0, %v2912
  %v2914 = vpop.f32.mrb[0].mxu0
  %2915 = vmatprep.mubr.bf16.mxu0 0
  %2916 = vmatmul.mubr.bf16.gmra.mrb[0].mxu0 %v2427
  %v2917 = vpop.f32.mrb[0].mxu0
  %v2918 = vadd.f32 0.0, %v2917
  %v2919 = vpop.f32.mrb[0].mxu0
  %v2920 = vpop.f32.mrb[0].mxu0
  %v2921 = vadd.f32 0.0, %v2920
  %v2922 = vpop.f32.mrb[0].mxu0
  %2923 = vmatprep.mubr.bf16.mxu0 0
  %2924 = vmatmul.mubr.bf16.gmra.mrb[0].mxu0 %v2430
  %v2925 = vpop.f32.mrb[0].mxu0
  %v2926 = vadd.f32 0.0, %v2925
  %v2927 = vpop.f32.mrb[0].mxu0
  %v2928 = vpop.f32.mrb[0].mxu0
  %v2929 = vadd.f32 0.0, %v2928
  %v2930 = vpop.f32.mrb[0].mxu0
  %2931 = vmatprep.mubr.bf16.mxu0 0
  %2932 = vmatmul.mubr.bf16.gmra.mrb[0].mxu0 %v2433
  %v2933 = vpop.f32.mrb[0].mxu0
  %v2934 = vadd.f32 0.0, %v2933
  %v2935 = vpop.f32.mrb[0].mxu0
  %v2936 = vpop.f32.mrb[0].mxu0
  %v2937 = vadd.f32 0.0, %v2936
  %v2938 = vpop.f32.mrb[0].mxu0
  %2939 = vmatprep.mubr.bf16.mxu0 0
  %2940 = vmatmul.mubr.bf16.gmra.mrb[0].mxu0 %v2436
  %v2941 = vpop.f32.mrb[0].mxu0
  %v2942 = vadd.f32 0.0, %v2941
  %v2943 = vpop.f32.mrb[0].mxu0
  %v2944 = vpop.f32.mrb[0].mxu0
  %v2945 = vadd.f32 0.0, %v2944
  %v2946 = vpop.f32.mrb[0].mxu0
  %2947 = vmatprep.mubr.bf16.mxu0 0
  %2948 = vmatmul.mubr.bf16.gmra.mrb[0].mxu0 %v2439
  %v2949 = vpop.f32.mrb[0].mxu0
  %v2950 = vadd.f32 0.0, %v2949
  %v2951 = vpop.f32.mrb[0].mxu0
  %v2952 = vpop.f32.mrb[0].mxu0
  %v2953 = vadd.f32 0.0, %v2952
  %v2954 = vpop.f32.mrb[0].mxu0
  %2955 = vmatprep.mubr.bf16.mxu0 0
  %2956 = vmatmul.mubr.bf16.gmra.mrb[0].mxu0 %v2442
  %v2957 = vpop.f32.mrb[0].mxu0
  %v2958 = vadd.f32 0.0, %v2957
  %v2959 = vpop.f32.mrb[0].mxu0
  %v2960 = vpop.f32.mrb[0].mxu0
  %v2961 = vadd.f32 0.0, %v2960
  %v2962 = vpop.f32.mrb[0].mxu0
  %2963 = vmatprep.mubr.bf16.mxu0 0
  %2964 = vmatmul.mubr.bf16.gmra.mrb[0].mxu0 %v2445
  %v2965 = vpop.f32.mrb[0].mxu0
  %v2966 = vadd.f32 0.0, %v2965
  %v2967 = vpop.f32.mrb[0].mxu0
  %v2968 = vpop.f32.mrb[0].mxu0
  %v2969 = vadd.f32 0.0, %v2968
  %v2970 = vpop.f32.mrb[0].mxu0
  %2971 = vmatprep.mubr.bf16.mxu0 0
  %2972 = vmatmul.mubr.bf16.gmra.mrb[0].mxu0 %v2448
  %v2973 = vpop.f32.mrb[0].mxu0
  %v2974 = vadd.f32 0.0, %v2973
  %v2975 = vpop.f32.mrb[0].mxu0
  %v2976 = vpop.f32.mrb[0].mxu0
  %v2977 = vadd.f32 0.0, %v2976
  %v2978 = vpop.f32.mrb[0].mxu0
  %2979 = vmatprep.mubr.bf16.mxu0 0
  %2980 = vmatmul.mubr.bf16.gmra.mrb[0].mxu0 %v2451
  %v2981 = vpop.f32.mrb[0].mxu0
  %v2982 = vadd.f32 0.0, %v2981
  %v2983 = vpop.f32.mrb[0].mxu0
  %v2984 = vpop.f32.mrb[0].mxu0
  %v2985 = vadd.f32 0.0, %v2984
  %v2986 = vpop.f32.mrb[0].mxu0
  %2987 = vmatprep.mubr.bf16.mxu0 0
  %2988 = vmatmul.mubr.bf16.gmra.mrb[0].mxu0 %v2454
  %v2989 = vpop.f32.mrb[0].mxu0
  %v2990 = vadd.f32 0.0, %v2989
  %v2991 = vpop.f32.mrb[0].mxu0
  %v2992 = vpop.f32.mrb[0].mxu0
  %v2993 = vadd.f32 0.0, %v2992
  %v2994 = vpop.f32.mrb[0].mxu0
  %2995 = vmatprep.mubr.bf16.mxu0 0
  %2996 = vmatmul.mubr.bf16.gmra.mrb[0].mxu0 %v2457
  %v2997 = vpop.f32.mrb[0].mxu0
  %v2998 = vadd.f32 0.0, %v2997
  %v2999 = vpop.f32.mrb[0].mxu0
  %v3000 = vpop.f32.mrb[0].mxu0
  %v3001 = vadd.f32 0.0, %v3000
  %v3002 = vpop.f32.mrb[0].mxu0
  %3003 = vdwg.mxu0
  %v3004 = vld [vmem:[%s2] sm:$0x1]
  %v3006 = vlaneseq
  %v3007 = vshrl.u32 %v3006, 7
  %v3008 = vsub.s32 0, %v3007
  %v3009 = vrot.slane %v3004, %v3008
  %v3011 = vmul.f32 %v2494, %v3009
  %v3012 = vmul.f32 %v2497, %v3009
  %v3013 = vmul.f32 %v2502, %v3009
  %v3014 = vmul.f32 %v2505, %v3009
  %v3015 = vmul.f32 %v2510, %v3009
  %v3016 = vmul.f32 %v2513, %v3009
  %v3017 = vmul.f32 %v2518, %v3009
  %v3018 = vmul.f32 %v2521, %v3009
  %v3019 = vmul.f32 %v2526, %v3009
  %v3020 = vmul.f32 %v2529, %v3009
  %v3021 = vmul.f32 %v2534, %v3009
  %v3022 = vmul.f32 %v2537, %v3009
  %v3023 = vmul.f32 %v2542, %v3009
  %v3024 = vmul.f32 %v2545, %v3009
  %v3025 = vmul.f32 %v2550, %v3009
  %v3026 = vmul.f32 %v2553, %v3009
  %v3027 = vmul.f32 %v2558, %v3009
  %v3028 = vmul.f32 %v2561, %v3009
  %v3029 = vmul.f32 %v2566, %v3009
  %v3030 = vmul.f32 %v2569, %v3009
  %v3031 = vmul.f32 %v2574, %v3009
  %v3032 = vmul.f32 %v2577, %v3009
  %v3033 = vmul.f32 %v2582, %v3009
  %v3034 = vmul.f32 %v2585, %v3009
  %v3035 = vmul.f32 %v2590, %v3009
  %v3036 = vmul.f32 %v2593, %v3009
  %v3037 = vmul.f32 %v2598, %v3009
  %v3038 = vmul.f32 %v2601, %v3009
  %v3039 = vmul.f32 %v2606, %v3009
  %v3040 = vmul.f32 %v2609, %v3009
  %v3041 = vmul.f32 %v2614, %v3009
  %v3042 = vmul.f32 %v2617, %v3009
  %v3043 = vmul.f32 %v2622, %v3009
  %v3044 = vmul.f32 %v2625, %v3009
  %v3045 = vmul.f32 %v2630, %v3009
  %v3046 = vmul.f32 %v2633, %v3009
  %v3047 = vmul.f32 %v2638, %v3009
  %v3048 = vmul.f32 %v2641, %v3009
  %v3049 = vmul.f32 %v2646, %v3009
  %v3050 = vmul.f32 %v2649, %v3009
  %v3051 = vmul.f32 %v2654, %v3009
  %v3052 = vmul.f32 %v2657, %v3009
  %v3053 = vmul.f32 %v2662, %v3009
  %v3054 = vmul.f32 %v2665, %v3009
  %v3055 = vmul.f32 %v2670, %v3009
  %v3056 = vmul.f32 %v2673, %v3009
  %v3057 = vmul.f32 %v2678, %v3009
  %v3058 = vmul.f32 %v2681, %v3009
  %v3059 = vmul.f32 %v2686, %v3009
  %v3060 = vmul.f32 %v2689, %v3009
  %v3061 = vmul.f32 %v2694, %v3009
  %v3062 = vmul.f32 %v2697, %v3009
  %v3063 = vmul.f32 %v2702, %v3009
  %v3064 = vmul.f32 %v2705, %v3009
  %v3065 = vmul.f32 %v2710, %v3009
  %v3066 = vmul.f32 %v2713, %v3009
  %v3067 = vmul.f32 %v2718, %v3009
  %v3068 = vmul.f32 %v2721, %v3009
  %v3069 = vmul.f32 %v2726, %v3009
  %v3070 = vmul.f32 %v2729, %v3009
  %v3071 = vmul.f32 %v2734, %v3009
  %v3072 = vmul.f32 %v2737, %v3009
  %v3073 = vmul.f32 %v2742, %v3009
  %v3074 = vmul.f32 %v2745, %v3009
  %v3075 = vmul.f32 %v2750, %v3009
  %v3076 = vmul.f32 %v2753, %v3009
  %v3077 = vmul.f32 %v2758, %v3009
  %v3078 = vmul.f32 %v2761, %v3009
  %v3079 = vmul.f32 %v2766, %v3009
  %v3080 = vmul.f32 %v2769, %v3009
  %v3081 = vmul.f32 %v2774, %v3009
  %v3082 = vmul.f32 %v2777, %v3009
  %v3083 = vmul.f32 %v2782, %v3009
  %v3084 = vmul.f32 %v2785, %v3009
  %v3085 = vmul.f32 %v2790, %v3009
  %v3086 = vmul.f32 %v2793, %v3009
  %v3087 = vmul.f32 %v2798, %v3009
  %v3088 = vmul.f32 %v2801, %v3009
  %v3089 = vmul.f32 %v2806, %v3009
  %v3090 = vmul.f32 %v2809, %v3009
  %v3091 = vmul.f32 %v2814, %v3009
  %v3092 = vmul.f32 %v2817, %v3009
  %v3093 = vmul.f32 %v2822, %v3009
  %v3094 = vmul.f32 %v2825, %v3009
  %v3095 = vmul.f32 %v2830, %v3009
  %v3096 = vmul.f32 %v2833, %v3009
  %v3097 = vmul.f32 %v2838, %v3009
  %v3098 = vmul.f32 %v2841, %v3009
  %v3099 = vmul.f32 %v2846, %v3009
  %v3100 = vmul.f32 %v2849, %v3009
  %v3101 = vmul.f32 %v2854, %v3009
  %v3102 = vmul.f32 %v2857, %v3009
  %v3103 = vmul.f32 %v2862, %v3009
  %v3104 = vmul.f32 %v2865, %v3009
  %v3105 = vmul.f32 %v2870, %v3009
  %v3106 = vmul.f32 %v2873, %v3009
  %v3107 = vmul.f32 %v2878, %v3009
  %v3108 = vmul.f32 %v2881, %v3009
  %v3109 = vmul.f32 %v2886, %v3009
  %v3110 = vmul.f32 %v2889, %v3009
  %v3111 = vmul.f32 %v2894, %v3009
  %v3112 = vmul.f32 %v2897, %v3009
  %v3113 = vmul.f32 %v2902, %v3009
  %v3114 = vmul.f32 %v2905, %v3009
  %v3115 = vmul.f32 %v2910, %v3009
  %v3116 = vmul.f32 %v2913, %v3009
  %v3117 = vmul.f32 %v2918, %v3009
  %v3118 = vmul.f32 %v2921, %v3009
  %v3119 = vmul.f32 %v2926, %v3009
  %v3120 = vmul.f32 %v2929, %v3009
  %v3121 = vmul.f32 %v2934, %v3009
  %v3122 = vmul.f32 %v2937, %v3009
  %v3123 = vmul.f32 %v2942, %v3009
  %v3124 = vmul.f32 %v2945, %v3009
  %v3125 = vmul.f32 %v2950, %v3009
  %v3126 = vmul.f32 %v2953, %v3009
  %v3127 = vmul.f32 %v2958, %v3009
  %v3128 = vmul.f32 %v2961, %v3009
  %v3129 = vmul.f32 %v2966, %v3009
  %v3130 = vmul.f32 %v2969, %v3009
  %v3131 = vmul.f32 %v2974, %v3009
  %v3132 = vmul.f32 %v2977, %v3009
  %v3133 = vmul.f32 %v2982, %v3009
  %v3134 = vmul.f32 %v2985, %v3009
  %v3135 = vmul.f32 %v2990, %v3009
  %v3136 = vmul.f32 %v2993, %v3009
  %v3137 = vmul.f32 %v2998, %v3009
  %v3138 = vmul.f32 %v3001, %v3009
  %v3139 = vld [vmem:[%s3] sm:$0x1]
  %v3141 = vlaneseq
  %v3142 = vshrl.u32 %v3141, 7
  %v3143 = vsub.s32 0, %v3142
  %v3144 = vrot.slane %v3139, %v3143
  %v3146 = vadd.f32 %v3011, %v3144
  %v3147 = vadd.f32 %v3012, %v3144
  %v3148 = vadd.f32 %v3013, %v3144
  %v3149 = vadd.f32 %v3014, %v3144
  %v3150 = vadd.f32 %v3015, %v3144
  %v3151 = vadd.f32 %v3016, %v3144
  %v3152 = vadd.f32 %v3017, %v3144
  %v3153 = vadd.f32 %v3018, %v3144
  %v3154 = vadd.f32 %v3019, %v3144
  %v3155 = vadd.f32 %v3020, %v3144
  %v3156 = vadd.f32 %v3021, %v3144
  %v3157 = vadd.f32 %v3022, %v3144
  %v3158 = vadd.f32 %v3023, %v3144
  %v3159 = vadd.f32 %v3024, %v3144
  %v3160 = vadd.f32 %v3025, %v3144
  %v3161 = vadd.f32 %v3026, %v3144
  %v3162 = vadd.f32 %v3027, %v3144
  %v3163 = vadd.f32 %v3028, %v3144
  %v3164 = vadd.f32 %v3029, %v3144
  %v3165 = vadd.f32 %v3030, %v3144
  %v3166 = vadd.f32 %v3031, %v3144
  %v3167 = vadd.f32 %v3032, %v3144
  %v3168 = vadd.f32 %v3033, %v3144
  %v3169 = vadd.f32 %v3034, %v3144
  %v3170 = vadd.f32 %v3035, %v3144
  %v3171 = vadd.f32 %v3036, %v3144
  %v3172 = vadd.f32 %v3037, %v3144
  %v3173 = vadd.f32 %v3038, %v3144
  %v3174 = vadd.f32 %v3039, %v3144
  %v3175 = vadd.f32 %v3040, %v3144
  %v3176 = vadd.f32 %v3041, %v3144
  %v3177 = vadd.f32 %v3042, %v3144
  %v3178 = vadd.f32 %v3043, %v3144
  %v3179 = vadd.f32 %v3044, %v3144
  %v3180 = vadd.f32 %v3045, %v3144
  %v3181 = vadd.f32 %v3046, %v3144
  %v3182 = vadd.f32 %v3047, %v3144
  %v3183 = vadd.f32 %v3048, %v3144
  %v3184 = vadd.f32 %v3049, %v3144
  %v3185 = vadd.f32 %v3050, %v3144
  %v3186 = vadd.f32 %v3051, %v3144
  %v3187 = vadd.f32 %v3052, %v3144
  %v3188 = vadd.f32 %v3053, %v3144
  %v3189 = vadd.f32 %v3054, %v3144
  %v3190 = vadd.f32 %v3055, %v3144
  %v3191 = vadd.f32 %v3056, %v3144
  %v3192 = vadd.f32 %v3057, %v3144
  %v3193 = vadd.f32 %v3058, %v3144
  %v3194 = vadd.f32 %v3059, %v3144
  %v3195 = vadd.f32 %v3060, %v3144
  %v3196 = vadd.f32 %v3061, %v3144
  %v3197 = vadd.f32 %v3062, %v3144
  %v3198 = vadd.f32 %v3063, %v3144
  %v3199 = vadd.f32 %v3064, %v3144
  %v3200 = vadd.f32 %v3065, %v3144
  %v3201 = vadd.f32 %v3066, %v3144
  %v3202 = vadd.f32 %v3067, %v3144
  %v3203 = vadd.f32 %v3068, %v3144
  %v3204 = vadd.f32 %v3069, %v3144
  %v3205 = vadd.f32 %v3070, %v3144
  %v3206 = vadd.f32 %v3071, %v3144
  %v3207 = vadd.f32 %v3072, %v3144
  %v3208 = vadd.f32 %v3073, %v3144
  %v3209 = vadd.f32 %v3074, %v3144
  %v3210 = vadd.f32 %v3075, %v3144
  %v3211 = vadd.f32 %v3076, %v3144
  %v3212 = vadd.f32 %v3077, %v3144
  %v3213 = vadd.f32 %v3078, %v3144
  %v3214 = vadd.f32 %v3079, %v3144
  %v3215 = vadd.f32 %v3080, %v3144
  %v3216 = vadd.f32 %v3081, %v3144
  %v3217 = vadd.f32 %v3082, %v3144
  %v3218 = vadd.f32 %v3083, %v3144
  %v3219 = vadd.f32 %v3084, %v3144
  %v3220 = vadd.f32 %v3085, %v3144
  %v3221 = vadd.f32 %v3086, %v3144
  %v3222 = vadd.f32 %v3087, %v3144
  %v3223 = vadd.f32 %v3088, %v3144
  %v3224 = vadd.f32 %v3089, %v3144
  %v3225 = vadd.f32 %v3090, %v3144
  %v3226 = vadd.f32 %v3091, %v3144
  %v3227 = vadd.f32 %v3092, %v3144
  %v3228 = vadd.f32 %v3093, %v3144
  %v3229 = vadd.f32 %v3094, %v3144
  %v3230 = vadd.f32 %v3095, %v3144
  %v3231 = vadd.f32 %v3096, %v3144
  %v3232 = vadd.f32 %v3097, %v3144
  %v3233 = vadd.f32 %v3098, %v3144
  %v3234 = vadd.f32 %v3099, %v3144
  %v3235 = vadd.f32 %v3100, %v3144
  %v3236 = vadd.f32 %v3101, %v3144
  %v3237 = vadd.f32 %v3102, %v3144
  %v3238 = vadd.f32 %v3103, %v3144
  %v3239 = vadd.f32 %v3104, %v3144
  %v3240 = vadd.f32 %v3105, %v3144
  %v3241 = vadd.f32 %v3106, %v3144
  %v3242 = vadd.f32 %v3107, %v3144
  %v3243 = vadd.f32 %v3108, %v3144
  %v3244 = vadd.f32 %v3109, %v3144
  %v3245 = vadd.f32 %v3110, %v3144
  %v3246 = vadd.f32 %v3111, %v3144
  %v3247 = vadd.f32 %v3112, %v3144
  %v3248 = vadd.f32 %v3113, %v3144
  %v3249 = vadd.f32 %v3114, %v3144
  %v3250 = vadd.f32 %v3115, %v3144
  %v3251 = vadd.f32 %v3116, %v3144
  %v3252 = vadd.f32 %v3117, %v3144
  %v3253 = vadd.f32 %v3118, %v3144
  %v3254 = vadd.f32 %v3119, %v3144
  %v3255 = vadd.f32 %v3120, %v3144
  %v3256 = vadd.f32 %v3121, %v3144
  %v3257 = vadd.f32 %v3122, %v3144
  %v3258 = vadd.f32 %v3123, %v3144
  %v3259 = vadd.f32 %v3124, %v3144
  %v3260 = vadd.f32 %v3125, %v3144
  %v3261 = vadd.f32 %v3126, %v3144
  %v3262 = vadd.f32 %v3127, %v3144
  %v3263 = vadd.f32 %v3128, %v3144
  %v3264 = vadd.f32 %v3129, %v3144
  %v3265 = vadd.f32 %v3130, %v3144
  %v3266 = vadd.f32 %v3131, %v3144
  %v3267 = vadd.f32 %v3132, %v3144
  %v3268 = vadd.f32 %v3133, %v3144
  %v3269 = vadd.f32 %v3134, %v3144
  %v3270 = vadd.f32 %v3135, %v3144
  %v3271 = vadd.f32 %v3136, %v3144
  %v3272 = vadd.f32 %v3137, %v3144
  %v3273 = vadd.f32 %v3138, %v3144
  %v3274 = vmax.f32 %v3146, 0.0
  %v3275 = vmax.f32 %v3147, 0.0
  %v3276 = vmax.f32 %v3148, 0.0
  %v3277 = vmax.f32 %v3149, 0.0
  %v3278 = vmax.f32 %v3150, 0.0
  %v3279 = vmax.f32 %v3151, 0.0
  %v3280 = vmax.f32 %v3152, 0.0
  %v3281 = vmax.f32 %v3153, 0.0
  %v3282 = vmax.f32 %v3154, 0.0
  %v3283 = vmax.f32 %v3155, 0.0
  %v3284 = vmax.f32 %v3156, 0.0
  %v3285 = vmax.f32 %v3157, 0.0
  %v3286 = vmax.f32 %v3158, 0.0
  %v3287 = vmax.f32 %v3159, 0.0
  %v3288 = vmax.f32 %v3160, 0.0
  %v3289 = vmax.f32 %v3161, 0.0
  %v3290 = vmax.f32 %v3162, 0.0
  %v3291 = vmax.f32 %v3163, 0.0
  %v3292 = vmax.f32 %v3164, 0.0
  %v3293 = vmax.f32 %v3165, 0.0
  %v3294 = vmax.f32 %v3166, 0.0
  %v3295 = vmax.f32 %v3167, 0.0
  %v3296 = vmax.f32 %v3168, 0.0
  %v3297 = vmax.f32 %v3169, 0.0
  %v3298 = vmax.f32 %v3170, 0.0
  %v3299 = vmax.f32 %v3171, 0.0
  %v3300 = vmax.f32 %v3172, 0.0
  %v3301 = vmax.f32 %v3173, 0.0
  %v3302 = vmax.f32 %v3174, 0.0
  %v3303 = vmax.f32 %v3175, 0.0
  %v3304 = vmax.f32 %v3176, 0.0
  %v3305 = vmax.f32 %v3177, 0.0
  %v3306 = vmax.f32 %v3178, 0.0
  %v3307 = vmax.f32 %v3179, 0.0
  %v3308 = vmax.f32 %v3180, 0.0
  %v3309 = vmax.f32 %v3181, 0.0
  %v3310 = vmax.f32 %v3182, 0.0
  %v3311 = vmax.f32 %v3183, 0.0
  %v3312 = vmax.f32 %v3184, 0.0
  %v3313 = vmax.f32 %v3185, 0.0
  %v3314 = vmax.f32 %v3186, 0.0
  %v3315 = vmax.f32 %v3187, 0.0
  %v3316 = vmax.f32 %v3188, 0.0
  %v3317 = vmax.f32 %v3189, 0.0
  %v3318 = vmax.f32 %v3190, 0.0
  %v3319 = vmax.f32 %v3191, 0.0
  %v3320 = vmax.f32 %v3192, 0.0
  %v3321 = vmax.f32 %v3193, 0.0
  %v3322 = vmax.f32 %v3194, 0.0
  %v3323 = vmax.f32 %v3195, 0.0
  %v3324 = vmax.f32 %v3196, 0.0
  %v3325 = vmax.f32 %v3197, 0.0
  %v3326 = vmax.f32 %v3198, 0.0
  %v3327 = vmax.f32 %v3199, 0.0
  %v3328 = vmax.f32 %v3200, 0.0
  %v3329 = vmax.f32 %v3201, 0.0
  %v3330 = vmax.f32 %v3202, 0.0
  %v3331 = vmax.f32 %v3203, 0.0
  %v3332 = vmax.f32 %v3204, 0.0
  %v3333 = vmax.f32 %v3205, 0.0
  %v3334 = vmax.f32 %v3206, 0.0
  %v3335 = vmax.f32 %v3207, 0.0
  %v3336 = vmax.f32 %v3208, 0.0
  %v3337 = vmax.f32 %v3209, 0.0
  %v3338 = vmax.f32 %v3210, 0.0
  %v3339 = vmax.f32 %v3211, 0.0
  %v3340 = vmax.f32 %v3212, 0.0
  %v3341 = vmax.f32 %v3213, 0.0
  %v3342 = vmax.f32 %v3214, 0.0
  %v3343 = vmax.f32 %v3215, 0.0
  %v3344 = vmax.f32 %v3216, 0.0
  %v3345 = vmax.f32 %v3217, 0.0
  %v3346 = vmax.f32 %v3218, 0.0
  %v3347 = vmax.f32 %v3219, 0.0
  %v3348 = vmax.f32 %v3220, 0.0
  %v3349 = vmax.f32 %v3221, 0.0
  %v3350 = vmax.f32 %v3222, 0.0
  %v3351 = vmax.f32 %v3223, 0.0
  %v3352 = vmax.f32 %v3224, 0.0
  %v3353 = vmax.f32 %v3225, 0.0
  %v3354 = vmax.f32 %v3226, 0.0
  %v3355 = vmax.f32 %v3227, 0.0
  %v3356 = vmax.f32 %v3228, 0.0
  %v3357 = vmax.f32 %v3229, 0.0
  %v3358 = vmax.f32 %v3230, 0.0
  %v3359 = vmax.f32 %v3231, 0.0
  %v3360 = vmax.f32 %v3232, 0.0
  %v3361 = vmax.f32 %v3233, 0.0
  %v3362 = vmax.f32 %v3234, 0.0
  %v3363 = vmax.f32 %v3235, 0.0
  %v3364 = vmax.f32 %v3236, 0.0
  %v3365 = vmax.f32 %v3237, 0.0
  %v3366 = vmax.f32 %v3238, 0.0
  %v3367 = vmax.f32 %v3239, 0.0
  %v3368 = vmax.f32 %v3240, 0.0
  %v3369 = vmax.f32 %v3241, 0.0
  %v3370 = vmax.f32 %v3242, 0.0
  %v3371 = vmax.f32 %v3243, 0.0
  %v3372 = vmax.f32 %v3244, 0.0
  %v3373 = vmax.f32 %v3245, 0.0
  %v3374 = vmax.f32 %v3246, 0.0
  %v3375 = vmax.f32 %v3247, 0.0
  %v3376 = vmax.f32 %v3248, 0.0
  %v3377 = vmax.f32 %v3249, 0.0
  %v3378 = vmax.f32 %v3250, 0.0
  %v3379 = vmax.f32 %v3251, 0.0
  %v3380 = vmax.f32 %v3252, 0.0
  %v3381 = vmax.f32 %v3253, 0.0
  %v3382 = vmax.f32 %v3254, 0.0
  %v3383 = vmax.f32 %v3255, 0.0
  %v3384 = vmax.f32 %v3256, 0.0
  %v3385 = vmax.f32 %v3257, 0.0
  %v3386 = vmax.f32 %v3258, 0.0
  %v3387 = vmax.f32 %v3259, 0.0
  %v3388 = vmax.f32 %v3260, 0.0
  %v3389 = vmax.f32 %v3261, 0.0
  %v3390 = vmax.f32 %v3262, 0.0
  %v3391 = vmax.f32 %v3263, 0.0
  %v3392 = vmax.f32 %v3264, 0.0
  %v3393 = vmax.f32 %v3265, 0.0
  %v3394 = vmax.f32 %v3266, 0.0
  %v3395 = vmax.f32 %v3267, 0.0
  %v3396 = vmax.f32 %v3268, 0.0
  %v3397 = vmax.f32 %v3269, 0.0
  %v3398 = vmax.f32 %v3270, 0.0
  %v3399 = vmax.f32 %v3271, 0.0
  %v3400 = vmax.f32 %v3272, 0.0
  %v3401 = vmax.f32 %v3273, 0.0
  %3402 = vst.msk [vmem:[#allocation2] sm:$0xff] %vm1362, %v3274
  %3403 = vst.msk [vmem:[#allocation2 + $0x8] sm:$0xff] %vm1362, %v3275
  %3404 = vst.msk [vmem:[#allocation2 + $0x10] sm:$0xff] %vm1362, %v3276
  %3405 = vst.msk [vmem:[#allocation2 + $0x18] sm:$0xff] %vm1362, %v3277
  %3406 = vst.msk [vmem:[#allocation2 + $0x20] sm:$0xff] %vm1362, %v3278
  %3407 = vst.msk [vmem:[#allocation2 + $0x28] sm:$0xff] %vm1362, %v3279
  %3408 = vst.msk [vmem:[#allocation2 + $0x30] sm:$0xff] %vm1362, %v3280
  %3409 = vst.msk [vmem:[#allocation2 + $0x38] sm:$0xff] %vm1362, %v3281
  %3410 = vst.msk [vmem:[#allocation2 + $0x40] sm:$0xff] %vm1362, %v3282
  %3411 = vst.msk [vmem:[#allocation2 + $0x48] sm:$0xff] %vm1362, %v3283
  %3412 = vst.msk [vmem:[#allocation2 + $0x50] sm:$0xff] %vm1362, %v3284
  %3413 = vst.msk [vmem:[#allocation2 + $0x58] sm:$0xff] %vm1362, %v3285
  %3414 = vst.msk [vmem:[#allocation2 + $0x60] sm:$0xff] %vm1362, %v3286
  %3415 = vst.msk [vmem:[#allocation2 + $0x68] sm:$0xff] %vm1362, %v3287
  %3416 = vst.msk [vmem:[#allocation2 + $0x70] sm:$0xff] %vm1362, %v3288
  %3417 = vst.msk [vmem:[#allocation2 + $0x78] sm:$0xff] %vm1362, %v3289
  %3418 = vst.msk [vmem:[#allocation2 + $0x80] sm:$0xff] %vm1362, %v3290
  %3419 = vst.msk [vmem:[#allocation2 + $0x88] sm:$0xff] %vm1362, %v3291
  %3420 = vst.msk [vmem:[#allocation2 + $0x90] sm:$0xff] %vm1362, %v3292
  %3421 = vst.msk [vmem:[#allocation2 + $0x98] sm:$0xff] %vm1362, %v3293
  %3422 = vst.msk [vmem:[#allocation2 + $0xa0] sm:$0xff] %vm1362, %v3294
  %3423 = vst.msk [vmem:[#allocation2 + $0xa8] sm:$0xff] %vm1362, %v3295
  %3424 = vst.msk [vmem:[#allocation2 + $0xb0] sm:$0xff] %vm1362, %v3296
  %3425 = vst.msk [vmem:[#allocation2 + $0xb8] sm:$0xff] %vm1362, %v3297
  %3426 = vst.msk [vmem:[#allocation2 + $0xc0] sm:$0xff] %vm1362, %v3298
  %3427 = vst.msk [vmem:[#allocation2 + $0xc8] sm:$0xff] %vm1362, %v3299
  %3428 = vst.msk [vmem:[#allocation2 + $0xd0] sm:$0xff] %vm1362, %v3300
  %3429 = vst.msk [vmem:[#allocation2 + $0xd8] sm:$0xff] %vm1362, %v3301
  %3430 = vst.msk [vmem:[#allocation2 + $0xe0] sm:$0xff] %vm1362, %v3302
  %3431 = vst.msk [vmem:[#allocation2 + $0xe8] sm:$0xff] %vm1362, %v3303
  %3432 = vst.msk [vmem:[#allocation2 + $0xf0] sm:$0xff] %vm1362, %v3304
  %3433 = vst.msk [vmem:[#allocation2 + $0xf8] sm:$0xff] %vm1362, %v3305
  %3434 = vst.msk [vmem:[#allocation2 + $0x100] sm:$0xff] %vm1362, %v3306
  %3435 = vst.msk [vmem:[#allocation2 + $0x108] sm:$0xff] %vm1362, %v3307
  %3436 = vst.msk [vmem:[#allocation2 + $0x110] sm:$0xff] %vm1362, %v3308
  %3437 = vst.msk [vmem:[#allocation2 + $0x118] sm:$0xff] %vm1362, %v3309
  %3438 = vst.msk [vmem:[#allocation2 + $0x120] sm:$0xff] %vm1362, %v3310
  %3439 = vst.msk [vmem:[#allocation2 + $0x128] sm:$0xff] %vm1362, %v3311
  %3440 = vst.msk [vmem:[#allocation2 + $0x130] sm:$0xff] %vm1362, %v3312
  %3441 = vst.msk [vmem:[#allocation2 + $0x138] sm:$0xff] %vm1362, %v3313
  %3442 = vst.msk [vmem:[#allocation2 + $0x140] sm:$0xff] %vm1362, %v3314
  %3443 = vst.msk [vmem:[#allocation2 + $0x148] sm:$0xff] %vm1362, %v3315
  %3444 = vst.msk [vmem:[#allocation2 + $0x150] sm:$0xff] %vm1362, %v3316
  %3445 = vst.msk [vmem:[#allocation2 + $0x158] sm:$0xff] %vm1362, %v3317
  %3446 = vst.msk [vmem:[#allocation2 + $0x160] sm:$0xff] %vm1362, %v3318
  %3447 = vst.msk [vmem:[#allocation2 + $0x168] sm:$0xff] %vm1362, %v3319
  %3448 = vst.msk [vmem:[#allocation2 + $0x170] sm:$0xff] %vm1362, %v3320
  %3449 = vst.msk [vmem:[#allocation2 + $0x178] sm:$0xff] %vm1362, %v3321
  %3450 = vst.msk [vmem:[#allocation2 + $0x180] sm:$0xff] %vm1362, %v3322
  %3451 = vst.msk [vmem:[#allocation2 + $0x188] sm:$0xff] %vm1362, %v3323
  %3452 = vst.msk [vmem:[#allocation2 + $0x190] sm:$0xff] %vm1362, %v3324
  %3453 = vst.msk [vmem:[#allocation2 + $0x198] sm:$0xff] %vm1362, %v3325
  %3454 = vst.msk [vmem:[#allocation2 + $0x1a0] sm:$0xff] %vm1362, %v3326
  %3455 = vst.msk [vmem:[#allocation2 + $0x1a8] sm:$0xff] %vm1362, %v3327
  %3456 = vst.msk [vmem:[#allocation2 + $0x1b0] sm:$0xff] %vm1362, %v3328
  %3457 = vst.msk [vmem:[#allocation2 + $0x1b8] sm:$0xff] %vm1362, %v3329
  %3458 = vst.msk [vmem:[#allocation2 + $0x1c0] sm:$0xff] %vm1362, %v3330
  %3459 = vst.msk [vmem:[#allocation2 + $0x1c8] sm:$0xff] %vm1362, %v3331
  %3460 = vst.msk [vmem:[#allocation2 + $0x1d0] sm:$0xff] %vm1362, %v3332
  %3461 = vst.msk [vmem:[#allocation2 + $0x1d8] sm:$0xff] %vm1362, %v3333
  %3462 = vst.msk [vmem:[#allocation2 + $0x1e0] sm:$0xff] %vm1362, %v3334
  %3463 = vst.msk [vmem:[#allocation2 + $0x1e8] sm:$0xff] %vm1362, %v3335
  %3464 = vst.msk [vmem:[#allocation2 + $0x1f0] sm:$0xff] %vm1362, %v3336
  %3465 = vst.msk [vmem:[#allocation2 + $0x1f8] sm:$0xff] %vm1362, %v3337
  %3466 = vst.msk [vmem:[#allocation2 + $0x200] sm:$0xff] %vm1362, %v3338
  %3467 = vst.msk [vmem:[#allocation2 + $0x208] sm:$0xff] %vm1362, %v3339
  %3468 = vst.msk [vmem:[#allocation2 + $0x210] sm:$0xff] %vm1362, %v3340
  %3469 = vst.msk [vmem:[#allocation2 + $0x218] sm:$0xff] %vm1362, %v3341
  %3470 = vst.msk [vmem:[#allocation2 + $0x220] sm:$0xff] %vm1362, %v3342
  %3471 = vst.msk [vmem:[#allocation2 + $0x228] sm:$0xff] %vm1362, %v3343
  %3472 = vst.msk [vmem:[#allocation2 + $0x230] sm:$0xff] %vm1362, %v3344
  %3473 = vst.msk [vmem:[#allocation2 + $0x238] sm:$0xff] %vm1362, %v3345
  %3474 = vst.msk [vmem:[#allocation2 + $0x240] sm:$0xff] %vm1362, %v3346
  %3475 = vst.msk [vmem:[#allocation2 + $0x248] sm:$0xff] %vm1362, %v3347
  %3476 = vst.msk [vmem:[#allocation2 + $0x250] sm:$0xff] %vm1362, %v3348
  %3477 = vst.msk [vmem:[#allocation2 + $0x258] sm:$0xff] %vm1362, %v3349
  %3478 = vst.msk [vmem:[#allocation2 + $0x260] sm:$0xff] %vm1362, %v3350
  %3479 = vst.msk [vmem:[#allocation2 + $0x268] sm:$0xff] %vm1362, %v3351
  %3480 = vst.msk [vmem:[#allocation2 + $0x270] sm:$0xff] %vm1362, %v3352
  %3481 = vst.msk [vmem:[#allocation2 + $0x278] sm:$0xff] %vm1362, %v3353
  %3482 = vst.msk [vmem:[#allocation2 + $0x280] sm:$0xff] %vm1362, %v3354
  %3483 = vst.msk [vmem:[#allocation2 + $0x288] sm:$0xff] %vm1362, %v3355
  %3484 = vst.msk [vmem:[#allocation2 + $0x290] sm:$0xff] %vm1362, %v3356
  %3485 = vst.msk [vmem:[#allocation2 + $0x298] sm:$0xff] %vm1362, %v3357
  %3486 = vst.msk [vmem:[#allocation2 + $0x2a0] sm:$0xff] %vm1362, %v3358
  %3487 = vst.msk [vmem:[#allocation2 + $0x2a8] sm:$0xff] %vm1362, %v3359
  %3488 = vst.msk [vmem:[#allocation2 + $0x2b0] sm:$0xff] %vm1362, %v3360
  %3489 = vst.msk [vmem:[#allocation2 + $0x2b8] sm:$0xff] %vm1362, %v3361
  %3490 = vst.msk [vmem:[#allocation2 + $0x2c0] sm:$0xff] %vm1362, %v3362
  %3491 = vst.msk [vmem:[#allocation2 + $0x2c8] sm:$0xff] %vm1362, %v3363
  %3492 = vst.msk [vmem:[#allocation2 + $0x2d0] sm:$0xff] %vm1362, %v3364
  %3493 = vst.msk [vmem:[#allocation2 + $0x2d8] sm:$0xff] %vm1362, %v3365
  %3494 = vst.msk [vmem:[#allocation2 + $0x2e0] sm:$0xff] %vm1362, %v3366
  %3495 = vst.msk [vmem:[#allocation2 + $0x2e8] sm:$0xff] %vm1362, %v3367
  %3496 = vst.msk [vmem:[#allocation2 + $0x2f0] sm:$0xff] %vm1362, %v3368
  %3497 = vst.msk [vmem:[#allocation2 + $0x2f8] sm:$0xff] %vm1362, %v3369
  %3498 = vst.msk [vmem:[#allocation2 + $0x300] sm:$0xff] %vm1362, %v3370
  %3499 = vst.msk [vmem:[#allocation2 + $0x308] sm:$0xff] %vm1362, %v3371
  %3500 = vst.msk [vmem:[#allocation2 + $0x310] sm:$0xff] %vm1362, %v3372
  %3501 = vst.msk [vmem:[#allocation2 + $0x318] sm:$0xff] %vm1362, %v3373
  %3502 = vst.msk [vmem:[#allocation2 + $0x320] sm:$0xff] %vm1362, %v3374
  %3503 = vst.msk [vmem:[#allocation2 + $0x328] sm:$0xff] %vm1362, %v3375
  %3504 = vst.msk [vmem:[#allocation2 + $0x330] sm:$0xff] %vm1362, %v3376
  %3505 = vst.msk [vmem:[#allocation2 + $0x338] sm:$0xff] %vm1362, %v3377
  %3506 = vst.msk [vmem:[#allocation2 + $0x340] sm:$0xff] %vm1362, %v3378
  %3507 = vst.msk [vmem:[#allocation2 + $0x348] sm:$0xff] %vm1362, %v3379
  %3508 = vst.msk [vmem:[#allocation2 + $0x350] sm:$0xff] %vm1362, %v3380
  %3509 = vst.msk [vmem:[#allocation2 + $0x358] sm:$0xff] %vm1362, %v3381
  %3510 = vst.msk [vmem:[#allocation2 + $0x360] sm:$0xff] %vm1362, %v3382
  %3511 = vst.msk [vmem:[#allocation2 + $0x368] sm:$0xff] %vm1362, %v3383
  %3512 = vst.msk [vmem:[#allocation2 + $0x370] sm:$0xff] %vm1362, %v3384
  %3513 = vst.msk [vmem:[#allocation2 + $0x378] sm:$0xff] %vm1362, %v3385
  %3514 = vst.msk [vmem:[#allocation2 + $0x380] sm:$0xff] %vm1362, %v3386
  %3515 = vst.msk [vmem:[#allocation2 + $0x388] sm:$0xff] %vm1362, %v3387
  %3516 = vst.msk [vmem:[#allocation2 + $0x390] sm:$0xff] %vm1362, %v3388
  %3517 = vst.msk [vmem:[#allocation2 + $0x398] sm:$0xff] %vm1362, %v3389
  %3518 = vst.msk [vmem:[#allocation2 + $0x3a0] sm:$0xff] %vm1362, %v3390
  %3519 = vst.msk [vmem:[#allocation2 + $0x3a8] sm:$0xff] %vm1362, %v3391
  %3520 = vst.msk [vmem:[#allocation2 + $0x3b0] sm:$0xff] %vm1362, %v3392
  %3521 = vst.msk [vmem:[#allocation2 + $0x3b8] sm:$0xff] %vm1362, %v3393
  %3522 = vst.msk [vmem:[#allocation2 + $0x3c0] sm:$0xff] %vm1362, %v3394
  %3523 = vst.msk [vmem:[#allocation2 + $0x3c8] sm:$0xff] %vm1362, %v3395
  %3524 = vst.msk [vmem:[#allocation2 + $0x3d0] sm:$0xff] %vm1362, %v3396
  %3525 = vst.msk [vmem:[#allocation2 + $0x3d8] sm:$0xff] %vm1362, %v3397
  %3526 = vst.msk [vmem:[#allocation2 + $0x3e0] sm:$0xff] %vm1362, %v3398
  %3527 = vst.msk [vmem:[#allocation2 + $0x3e8] sm:$0xff] %vm1362, %v3399
  %3528 = vst.msk [vmem:[#allocation2 + $0x3f0] sm:$0xff] %vm1362, %v3400
  %3529 = vst.msk [vmem:[#allocation2 + $0x3f8] sm:$0xff] %vm1362, %v3401
  %v3530 = vld [vmem:[#allocation2] sm:$0xff]
  %v3531 = vld [vmem:[#allocation2 + $0x8] sm:$0xff]
  %v3532 = vld [vmem:[#allocation2 + $0x10] sm:$0xff]
  %v3533 = vld [vmem:[#allocation2 + $0x18] sm:$0xff]
  %v3534 = vld [vmem:[#allocation2 + $0x20] sm:$0xff]
  %v3535 = vld [vmem:[#allocation2 + $0x28] sm:$0xff]
  %v3536 = vld [vmem:[#allocation2 + $0x30] sm:$0xff]
  %v3537 = vld [vmem:[#allocation2 + $0x38] sm:$0xff]
  %v3538 = vld [vmem:[#allocation2 + $0x40] sm:$0xff]
  %v3539 = vld [vmem:[#allocation2 + $0x48] sm:$0xff]
  %v3540 = vld [vmem:[#allocation2 + $0x50] sm:$0xff]
  %v3541 = vld [vmem:[#allocation2 + $0x58] sm:$0xff]
  %v3542 = vld [vmem:[#allocation2 + $0x60] sm:$0xff]
  %v3543 = vld [vmem:[#allocation2 + $0x68] sm:$0xff]
  %v3544 = vld [vmem:[#allocation2 + $0x70] sm:$0xff]
  %v3545 = vld [vmem:[#allocation2 + $0x78] sm:$0xff]
  %v3546 = vld [vmem:[#allocation2 + $0x80] sm:$0xff]
  %v3547 = vld [vmem:[#allocation2 + $0x88] sm:$0xff]
  %v3548 = vld [vmem:[#allocation2 + $0x90] sm:$0xff]
  %v3549 = vld [vmem:[#allocation2 + $0x98] sm:$0xff]
  %v3550 = vld [vmem:[#allocation2 + $0xa0] sm:$0xff]
  %v3551 = vld [vmem:[#allocation2 + $0xa8] sm:$0xff]
  %v3552 = vld [vmem:[#allocation2 + $0xb0] sm:$0xff]
  %v3553 = vld [vmem:[#allocation2 + $0xb8] sm:$0xff]
  %v3554 = vld [vmem:[#allocation2 + $0xc0] sm:$0xff]
  %v3555 = vld [vmem:[#allocation2 + $0xc8] sm:$0xff]
  %v3556 = vld [vmem:[#allocation2 + $0xd0] sm:$0xff]
  %v3557 = vld [vmem:[#allocation2 + $0xd8] sm:$0xff]
  %v3558 = vld [vmem:[#allocation2 + $0xe0] sm:$0xff]
  %v3559 = vld [vmem:[#allocation2 + $0xe8] sm:$0xff]
  %v3560 = vld [vmem:[#allocation2 + $0xf0] sm:$0xff]
  %v3561 = vld [vmem:[#allocation2 + $0xf8] sm:$0xff]
  %v3562 = vld [vmem:[#allocation2 + $0x100] sm:$0xff]
  %v3563 = vld [vmem:[#allocation2 + $0x108] sm:$0xff]
  %v3564 = vld [vmem:[#allocation2 + $0x110] sm:$0xff]
  %v3565 = vld [vmem:[#allocation2 + $0x118] sm:$0xff]
  %v3566 = vld [vmem:[#allocation2 + $0x120] sm:$0xff]
  %v3567 = vld [vmem:[#allocation2 + $0x128] sm:$0xff]
  %v3568 = vld [vmem:[#allocation2 + $0x130] sm:$0xff]
  %v3569 = vld [vmem:[#allocation2 + $0x138] sm:$0xff]
  %v3570 = vld [vmem:[#allocation2 + $0x140] sm:$0xff]
  %v3571 = vld [vmem:[#allocation2 + $0x148] sm:$0xff]
  %v3572 = vld [vmem:[#allocation2 + $0x150] sm:$0xff]
  %v3573 = vld [vmem:[#allocation2 + $0x158] sm:$0xff]
  %v3574 = vld [vmem:[#allocation2 + $0x160] sm:$0xff]
  %v3575 = vld [vmem:[#allocation2 + $0x168] sm:$0xff]
  %v3576 = vld [vmem:[#allocation2 + $0x170] sm:$0xff]
  %v3577 = vld [vmem:[#allocation2 + $0x178] sm:$0xff]
  %v3578 = vld [vmem:[#allocation2 + $0x180] sm:$0xff]
  %v3579 = vld [vmem:[#allocation2 + $0x188] sm:$0xff]
  %v3580 = vld [vmem:[#allocation2 + $0x190] sm:$0xff]
  %v3581 = vld [vmem:[#allocation2 + $0x198] sm:$0xff]
  %v3582 = vld [vmem:[#allocation2 + $0x1a0] sm:$0xff]
  %v3583 = vld [vmem:[#allocation2 + $0x1a8] sm:$0xff]
  %v3584 = vld [vmem:[#allocation2 + $0x1b0] sm:$0xff]
  %v3585 = vld [vmem:[#allocation2 + $0x1b8] sm:$0xff]
  %v3586 = vld [vmem:[#allocation2 + $0x1c0] sm:$0xff]
  %v3587 = vld [vmem:[#allocation2 + $0x1c8] sm:$0xff]
  %v3588 = vld [vmem:[#allocation2 + $0x1d0] sm:$0xff]
  %v3589 = vld [vmem:[#allocation2 + $0x1d8] sm:$0xff]
  %v3590 = vld [vmem:[#allocation2 + $0x1e0] sm:$0xff]
  %v3591 = vld [vmem:[#allocation2 + $0x1e8] sm:$0xff]
  %v3592 = vld [vmem:[#allocation2 + $0x1f0] sm:$0xff]
  %v3593 = vld [vmem:[#allocation2 + $0x1f8] sm:$0xff]
  %v3594 = vld [vmem:[#allocation2 + $0x200] sm:$0xff]
  %v3595 = vld [vmem:[#allocation2 + $0x208] sm:$0xff]
  %v3596 = vld [vmem:[#allocation2 + $0x210] sm:$0xff]
  %v3597 = vld [vmem:[#allocation2 + $0x218] sm:$0xff]
  %v3598 = vld [vmem:[#allocation2 + $0x220] sm:$0xff]
  %v3599 = vld [vmem:[#allocation2 + $0x228] sm:$0xff]
  %v3600 = vld [vmem:[#allocation2 + $0x230] sm:$0xff]
  %v3601 = vld [vmem:[#allocation2 + $0x238] sm:$0xff]
  %v3602 = vld [vmem:[#allocation2 + $0x240] sm:$0xff]
  %v3603 = vld [vmem:[#allocation2 + $0x248] sm:$0xff]
  %v3604 = vld [vmem:[#allocation2 + $0x250] sm:$0xff]
  %v3605 = vld [vmem:[#allocation2 + $0x258] sm:$0xff]
  %v3606 = vld [vmem:[#allocation2 + $0x260] sm:$0xff]
  %v3607 = vld [vmem:[#allocation2 + $0x268] sm:$0xff]
  %v3608 = vld [vmem:[#allocation2 + $0x270] sm:$0xff]
  %v3609 = vld [vmem:[#allocation2 + $0x278] sm:$0xff]
  %v3610 = vld [vmem:[#allocation2 + $0x280] sm:$0xff]
  %v3611 = vld [vmem:[#allocation2 + $0x288] sm:$0xff]
  %v3612 = vld [vmem:[#allocation2 + $0x290] sm:$0xff]
  %v3613 = vld [vmem:[#allocation2 + $0x298] sm:$0xff]
  %v3614 = vld [vmem:[#allocation2 + $0x2a0] sm:$0xff]
  %v3615 = vld [vmem:[#allocation2 + $0x2a8] sm:$0xff]
  %v3616 = vld [vmem:[#allocation2 + $0x2b0] sm:$0xff]
  %v3617 = vld [vmem:[#allocation2 + $0x2b8] sm:$0xff]
  %v3618 = vld [vmem:[#allocation2 + $0x2c0] sm:$0xff]
  %v3619 = vld [vmem:[#allocation2 + $0x2c8] sm:$0xff]
  %v3620 = vld [vmem:[#allocation2 + $0x2d0] sm:$0xff]
  %v3621 = vld [vmem:[#allocation2 + $0x2d8] sm:$0xff]
  %v3622 = vld [vmem:[#allocation2 + $0x2e0] sm:$0xff]
  %v3623 = vld [vmem:[#allocation2 + $0x2e8] sm:$0xff]
  %v3624 = vld [vmem:[#allocation2 + $0x2f0] sm:$0xff]
  %v3625 = vld [vmem:[#allocation2 + $0x2f8] sm:$0xff]
  %v3626 = vld [vmem:[#allocation2 + $0x300] sm:$0xff]
  %v3627 = vld [vmem:[#allocation2 + $0x308] sm:$0xff]
  %v3628 = vld [vmem:[#allocation2 + $0x310] sm:$0xff]
  %v3629 = vld [vmem:[#allocation2 + $0x318] sm:$0xff]
  %v3630 = vld [vmem:[#allocation2 + $0x320] sm:$0xff]
  %v3631 = vld [vmem:[#allocation2 + $0x328] sm:$0xff]
  %v3632 = vld [vmem:[#allocation2 + $0x330] sm:$0xff]
  %v3633 = vld [vmem:[#allocation2 + $0x338] sm:$0xff]
  %v3634 = vld [vmem:[#allocation2 + $0x340] sm:$0xff]
  %v3635 = vld [vmem:[#allocation2 + $0x348] sm:$0xff]
  %v3636 = vld [vmem:[#allocation2 + $0x350] sm:$0xff]
  %v3637 = vld [vmem:[#allocation2 + $0x358] sm:$0xff]
  %v3638 = vld [vmem:[#allocation2 + $0x360] sm:$0xff]
  %v3639 = vld [vmem:[#allocation2 + $0x368] sm:$0xff]
  %v3640 = vld [vmem:[#allocation2 + $0x370] sm:$0xff]
  %v3641 = vld [vmem:[#allocation2 + $0x378] sm:$0xff]
  %v3642 = vld [vmem:[#allocation2 + $0x380] sm:$0xff]
  %v3643 = vld [vmem:[#allocation2 + $0x388] sm:$0xff]
  %v3644 = vld [vmem:[#allocation2 + $0x390] sm:$0xff]
  %v3645 = vld [vmem:[#allocation2 + $0x398] sm:$0xff]
  %v3646 = vld [vmem:[#allocation2 + $0x3a0] sm:$0xff]
  %v3647 = vld [vmem:[#allocation2 + $0x3a8] sm:$0xff]
  %v3648 = vld [vmem:[#allocation2 + $0x3b0] sm:$0xff]
  %v3649 = vld [vmem:[#allocation2 + $0x3b8] sm:$0xff]
  %v3650 = vld [vmem:[#allocation2 + $0x3c0] sm:$0xff]
  %v3651 = vld [vmem:[#allocation2 + $0x3c8] sm:$0xff]
  %v3652 = vld [vmem:[#allocation2 + $0x3d0] sm:$0xff]
  %v3653 = vld [vmem:[#allocation2 + $0x3d8] sm:$0xff]
  %v3654 = vld [vmem:[#allocation2 + $0x3e0] sm:$0xff]
  %v3655 = vld [vmem:[#allocation2 + $0x3e8] sm:$0xff]
  %v3656 = vld [vmem:[#allocation2 + $0x3f0] sm:$0xff]
  %v3657 = vld [vmem:[#allocation2 + $0x3f8] sm:$0xff]
  %v3658 = vmax.f32 %v3530, %v3534
  %v3659 = vmax.f32 %v3531, %v3535
  %v3660 = vmax.f32 %v3532, %v3536
  %v3661 = vmax.f32 %v3533, %v3537
  %v3662 = vmax.f32 %v3534, %v3538
  %v3663 = vmax.f32 %v3535, %v3539
  %v3664 = vmax.f32 %v3536, %v3540
  %v3665 = vmax.f32 %v3537, %v3541
  %v3666 = vmax.f32 %v3538, %v3542
  %v3667 = vmax.f32 %v3539, %v3543
  %v3668 = vmax.f32 %v3540, %v3544
  %v3669 = vmax.f32 %v3541, %v3545
  %v3670 = vmax.f32 %v3542, %v3546
  %v3671 = vmax.f32 %v3543, %v3547
  %v3672 = vmax.f32 %v3544, %v3548
  %v3673 = vmax.f32 %v3545, %v3549
  %v3674 = vmax.f32 %v3546, %v3550
  %v3675 = vmax.f32 %v3547, %v3551
  %v3676 = vmax.f32 %v3548, %v3552
  %v3677 = vmax.f32 %v3549, %v3553
  %v3678 = vmax.f32 %v3550, %v3554
  %v3679 = vmax.f32 %v3551, %v3555
  %v3680 = vmax.f32 %v3552, %v3556
  %v3681 = vmax.f32 %v3553, %v3557
  %v3682 = vmax.f32 %v3554, %v3558
  %v3683 = vmax.f32 %v3555, %v3559
  %v3684 = vmax.f32 %v3556, %v3560
  %v3685 = vmax.f32 %v3557, %v3561
  %v3686 = vmax.f32 %v3558, %v3562
  %v3687 = vmax.f32 %v3559, %v3563
  %v3688 = vmax.f32 %v3560, %v3564
  %v3689 = vmax.f32 %v3561, %v3565
  %v3690 = vmax.f32 %v3562, %v3566
  %v3691 = vmax.f32 %v3563, %v3567
  %v3692 = vmax.f32 %v3564, %v3568
  %v3693 = vmax.f32 %v3565, %v3569
  %v3694 = vmax.f32 %v3566, %v3570
  %v3695 = vmax.f32 %v3567, %v3571
  %v3696 = vmax.f32 %v3568, %v3572
  %v3697 = vmax.f32 %v3569, %v3573
  %v3698 = vmax.f32 %v3570, %v3574
  %v3699 = vmax.f32 %v3571, %v3575
  %v3700 = vmax.f32 %v3572, %v3576
  %v3701 = vmax.f32 %v3573, %v3577
  %v3702 = vmax.f32 %v3574, %v3578
  %v3703 = vmax.f32 %v3575, %v3579
  %v3704 = vmax.f32 %v3576, %v3580
  %v3705 = vmax.f32 %v3577, %v3581
  %v3706 = vmax.f32 %v3578, %v3582
  %v3707 = vmax.f32 %v3579, %v3583
  %v3708 = vmax.f32 %v3580, %v3584
  %v3709 = vmax.f32 %v3581, %v3585
  %v3710 = vmax.f32 %v3582, %v3586
  %v3711 = vmax.f32 %v3583, %v3587
  %v3712 = vmax.f32 %v3584, %v3588
  %v3713 = vmax.f32 %v3585, %v3589
  %v3714 = vmax.f32 %v3586, %v3590
  %v3715 = vmax.f32 %v3587, %v3591
  %v3716 = vmax.f32 %v3588, %v3592
  %v3717 = vmax.f32 %v3589, %v3593
  %v3718 = vmax.f32 %v3590, %v3594
  %v3719 = vmax.f32 %v3591, %v3595
  %v3720 = vmax.f32 %v3592, %v3596
  %v3721 = vmax.f32 %v3593, %v3597
  %v3722 = vmax.f32 %v3594, %v3598
  %v3723 = vmax.f32 %v3595, %v3599
  %v3724 = vmax.f32 %v3596, %v3600
  %v3725 = vmax.f32 %v3597, %v3601
  %v3726 = vmax.f32 %v3598, %v3602
  %v3727 = vmax.f32 %v3599, %v3603
  %v3728 = vmax.f32 %v3600, %v3604
  %v3729 = vmax.f32 %v3601, %v3605
  %v3730 = vmax.f32 %v3602, %v3606
  %v3731 = vmax.f32 %v3603, %v3607
  %v3732 = vmax.f32 %v3604, %v3608
  %v3733 = vmax.f32 %v3605, %v3609
  %v3734 = vmax.f32 %v3606, %v3610
  %v3735 = vmax.f32 %v3607, %v3611
  %v3736 = vmax.f32 %v3608, %v3612
  %v3737 = vmax.f32 %v3609, %v3613
  %v3738 = vmax.f32 %v3610, %v3614
  %v3739 = vmax.f32 %v3611, %v3615
  %v3740 = vmax.f32 %v3612, %v3616
  %v3741 = vmax.f32 %v3613, %v3617
  %v3742 = vmax.f32 %v3614, %v3618
  %v3743 = vmax.f32 %v3615, %v3619
  %v3744 = vmax.f32 %v3616, %v3620
  %v3745 = vmax.f32 %v3617, %v3621
  %v3746 = vmax.f32 %v3618, %v3622
  %v3747 = vmax.f32 %v3619, %v3623
  %v3748 = vmax.f32 %v3620, %v3624
  %v3749 = vmax.f32 %v3621, %v3625
  %v3750 = vmax.f32 %v3622, %v3626
  %v3751 = vmax.f32 %v3623, %v3627
  %v3752 = vmax.f32 %v3624, %v3628
  %v3753 = vmax.f32 %v3625, %v3629
  %v3754 = vmax.f32 %v3626, %v3630
  %v3755 = vmax.f32 %v3627, %v3631
  %v3756 = vmax.f32 %v3628, %v3632
  %v3757 = vmax.f32 %v3629, %v3633
  %v3758 = vmax.f32 %v3630, %v3634
  %v3759 = vmax.f32 %v3631, %v3635
  %v3760 = vmax.f32 %v3632, %v3636
  %v3761 = vmax.f32 %v3633, %v3637
  %v3762 = vmax.f32 %v3634, %v3638
  %v3763 = vmax.f32 %v3635, %v3639
  %v3764 = vmax.f32 %v3636, %v3640
  %v3765 = vmax.f32 %v3637, %v3641
  %v3766 = vmax.f32 %v3638, %v3642
  %v3767 = vmax.f32 %v3639, %v3643
  %v3768 = vmax.f32 %v3640, %v3644
  %v3769 = vmax.f32 %v3641, %v3645
  %v3770 = vmax.f32 %v3642, %v3646
  %v3771 = vmax.f32 %v3643, %v3647
  %v3772 = vmax.f32 %v3644, %v3648
  %v3773 = vmax.f32 %v3645, %v3649
  %v3774 = vmax.f32 %v3646, %v3650
  %v3775 = vmax.f32 %v3647, %v3651
  %v3776 = vmax.f32 %v3648, %v3652
  %v3777 = vmax.f32 %v3649, %v3653
  %v3778 = vmax.f32 %v3650, %v3654
  %v3779 = vmax.f32 %v3651, %v3655
  %v3780 = vmax.f32 %v3652, %v3656
  %v3781 = vmax.f32 %v3653, %v3657
  %3782 = vst.msk [vmem:[#allocation2] sm:$0xff] %vm1362, %v3658
  %3783 = vst.msk [vmem:[#allocation2 + $0x8] sm:$0xff] %vm1362, %v3659
  %3784 = vst.msk [vmem:[#allocation2 + $0x10] sm:$0xff] %vm1362, %v3660
  %3785 = vst.msk [vmem:[#allocation2 + $0x18] sm:$0xff] %vm1362, %v3661
  %3786 = vst.msk [vmem:[#allocation2 + $0x20] sm:$0xff] %vm1362, %v3662
  %3787 = vst.msk [vmem:[#allocation2 + $0x28] sm:$0xff] %vm1362, %v3663
  %3788 = vst.msk [vmem:[#allocation2 + $0x30] sm:$0xff] %vm1362, %v3664
  %3789 = vst.msk [vmem:[#allocation2 + $0x38] sm:$0xff] %vm1362, %v3665
  %3790 = vst.msk [vmem:[#allocation2 + $0x40] sm:$0xff] %vm1362, %v3666
  %3791 = vst.msk [vmem:[#allocation2 + $0x48] sm:$0xff] %vm1362, %v3667
  %3792 = vst.msk [vmem:[#allocation2 + $0x50] sm:$0xff] %vm1362, %v3668
  %3793 = vst.msk [vmem:[#allocation2 + $0x58] sm:$0xff] %vm1362, %v3669
  %3794 = vst.msk [vmem:[#allocation2 + $0x60] sm:$0xff] %vm1362, %v3670
  %3795 = vst.msk [vmem:[#allocation2 + $0x68] sm:$0xff] %vm1362, %v3671
  %3796 = vst.msk [vmem:[#allocation2 + $0x70] sm:$0xff] %vm1362, %v3672
  %3797 = vst.msk [vmem:[#allocation2 + $0x78] sm:$0xff] %vm1362, %v3673
  %3798 = vst.msk [vmem:[#allocation2 + $0x80] sm:$0xff] %vm1362, %v3674
  %3799 = vst.msk [vmem:[#allocation2 + $0x88] sm:$0xff] %vm1362, %v3675
  %3800 = vst.msk [vmem:[#allocation2 + $0x90] sm:$0xff] %vm1362, %v3676
  %3801 = vst.msk [vmem:[#allocation2 + $0x98] sm:$0xff] %vm1362, %v3677
  %3802 = vst.msk [vmem:[#allocation2 + $0xa0] sm:$0xff] %vm1362, %v3678
  %3803 = vst.msk [vmem:[#allocation2 + $0xa8] sm:$0xff] %vm1362, %v3679
  %3804 = vst.msk [vmem:[#allocation2 + $0xb0] sm:$0xff] %vm1362, %v3680
  %3805 = vst.msk [vmem:[#allocation2 + $0xb8] sm:$0xff] %vm1362, %v3681
  %3806 = vst.msk [vmem:[#allocation2 + $0xc0] sm:$0xff] %vm1362, %v3682
  %3807 = vst.msk [vmem:[#allocation2 + $0xc8] sm:$0xff] %vm1362, %v3683
  %3808 = vst.msk [vmem:[#allocation2 + $0xd0] sm:$0xff] %vm1362, %v3684
  %3809 = vst.msk [vmem:[#allocation2 + $0xd8] sm:$0xff] %vm1362, %v3685
  %3810 = vst.msk [vmem:[#allocation2 + $0xe0] sm:$0xff] %vm1362, %v3686
  %3811 = vst.msk [vmem:[#allocation2 + $0xe8] sm:$0xff] %vm1362, %v3687
  %3812 = vst.msk [vmem:[#allocation2 + $0xf0] sm:$0xff] %vm1362, %v3688
  %3813 = vst.msk [vmem:[#allocation2 + $0xf8] sm:$0xff] %vm1362, %v3689
  %3814 = vst.msk [vmem:[#allocation2 + $0x100] sm:$0xff] %vm1362, %v3690
  %3815 = vst.msk [vmem:[#allocation2 + $0x108] sm:$0xff] %vm1362, %v3691
  %3816 = vst.msk [vmem:[#allocation2 + $0x110] sm:$0xff] %vm1362, %v3692
  %3817 = vst.msk [vmem:[#allocation2 + $0x118] sm:$0xff] %vm1362, %v3693
  %3818 = vst.msk [vmem:[#allocation2 + $0x120] sm:$0xff] %vm1362, %v3694
  %3819 = vst.msk [vmem:[#allocation2 + $0x128] sm:$0xff] %vm1362, %v3695
  %3820 = vst.msk [vmem:[#allocation2 + $0x130] sm:$0xff] %vm1362, %v3696
  %3821 = vst.msk [vmem:[#allocation2 + $0x138] sm:$0xff] %vm1362, %v3697
  %3822 = vst.msk [vmem:[#allocation2 + $0x140] sm:$0xff] %vm1362, %v3698
  %3823 = vst.msk [vmem:[#allocation2 + $0x148] sm:$0xff] %vm1362, %v3699
  %3824 = vst.msk [vmem:[#allocation2 + $0x150] sm:$0xff] %vm1362, %v3700
  %3825 = vst.msk [vmem:[#allocation2 + $0x158] sm:$0xff] %vm1362, %v3701
  %3826 = vst.msk [vmem:[#allocation2 + $0x160] sm:$0xff] %vm1362, %v3702
  %3827 = vst.msk [vmem:[#allocation2 + $0x168] sm:$0xff] %vm1362, %v3703
  %3828 = vst.msk [vmem:[#allocation2 + $0x170] sm:$0xff] %vm1362, %v3704
  %3829 = vst.msk [vmem:[#allocation2 + $0x178] sm:$0xff] %vm1362, %v3705
  %3830 = vst.msk [vmem:[#allocation2 + $0x180] sm:$0xff] %vm1362, %v3706
  %3831 = vst.msk [vmem:[#allocation2 + $0x188] sm:$0xff] %vm1362, %v3707
  %3832 = vst.msk [vmem:[#allocation2 + $0x190] sm:$0xff] %vm1362, %v3708
  %3833 = vst.msk [vmem:[#allocation2 + $0x198] sm:$0xff] %vm1362, %v3709
  %3834 = vst.msk [vmem:[#allocation2 + $0x1a0] sm:$0xff] %vm1362, %v3710
  %3835 = vst.msk [vmem:[#allocation2 + $0x1a8] sm:$0xff] %vm1362, %v3711
  %3836 = vst.msk [vmem:[#allocation2 + $0x1b0] sm:$0xff] %vm1362, %v3712
  %3837 = vst.msk [vmem:[#allocation2 + $0x1b8] sm:$0xff] %vm1362, %v3713
  %3838 = vst.msk [vmem:[#allocation2 + $0x1c0] sm:$0xff] %vm1362, %v3714
  %3839 = vst.msk [vmem:[#allocation2 + $0x1c8] sm:$0xff] %vm1362, %v3715
  %3840 = vst.msk [vmem:[#allocation2 + $0x1d0] sm:$0xff] %vm1362, %v3716
  %3841 = vst.msk [vmem:[#allocation2 + $0x1d8] sm:$0xff] %vm1362, %v3717
  %3842 = vst.msk [vmem:[#allocation2 + $0x1e0] sm:$0xff] %vm1362, %v3718
  %3843 = vst.msk [vmem:[#allocation2 + $0x1e8] sm:$0xff] %vm1362, %v3719
  %3844 = vst.msk [vmem:[#allocation2 + $0x1f0] sm:$0xff] %vm1362, %v3720
  %3845 = vst.msk [vmem:[#allocation2 + $0x1f8] sm:$0xff] %vm1362, %v3721
  %3846 = vst.msk [vmem:[#allocation2 + $0x200] sm:$0xff] %vm1362, %v3722
  %3847 = vst.msk [vmem:[#allocation2 + $0x208] sm:$0xff] %vm1362, %v3723
  %3848 = vst.msk [vmem:[#allocation2 + $0x210] sm:$0xff] %vm1362, %v3724
  %3849 = vst.msk [vmem:[#allocation2 + $0x218] sm:$0xff] %vm1362, %v3725
  %3850 = vst.msk [vmem:[#allocation2 + $0x220] sm:$0xff] %vm1362, %v3726
  %3851 = vst.msk [vmem:[#allocation2 + $0x228] sm:$0xff] %vm1362, %v3727
  %3852 = vst.msk [vmem:[#allocation2 + $0x230] sm:$0xff] %vm1362, %v3728
  %3853 = vst.msk [vmem:[#allocation2 + $0x238] sm:$0xff] %vm1362, %v3729
  %3854 = vst.msk [vmem:[#allocation2 + $0x240] sm:$0xff] %vm1362, %v3730
  %3855 = vst.msk [vmem:[#allocation2 + $0x248] sm:$0xff] %vm1362, %v3731
  %3856 = vst.msk [vmem:[#allocation2 + $0x250] sm:$0xff] %vm1362, %v3732
  %3857 = vst.msk [vmem:[#allocation2 + $0x258] sm:$0xff] %vm1362, %v3733
  %3858 = vst.msk [vmem:[#allocation2 + $0x260] sm:$0xff] %vm1362, %v3734
  %3859 = vst.msk [vmem:[#allocation2 + $0x268] sm:$0xff] %vm1362, %v3735
  %3860 = vst.msk [vmem:[#allocation2 + $0x270] sm:$0xff] %vm1362, %v3736
  %3861 = vst.msk [vmem:[#allocation2 + $0x278] sm:$0xff] %vm1362, %v3737
  %3862 = vst.msk [vmem:[#allocation2 + $0x280] sm:$0xff] %vm1362, %v3738
  %3863 = vst.msk [vmem:[#allocation2 + $0x288] sm:$0xff] %vm1362, %v3739
  %3864 = vst.msk [vmem:[#allocation2 + $0x290] sm:$0xff] %vm1362, %v3740
  %3865 = vst.msk [vmem:[#allocation2 + $0x298] sm:$0xff] %vm1362, %v3741
  %3866 = vst.msk [vmem:[#allocation2 + $0x2a0] sm:$0xff] %vm1362, %v3742
  %3867 = vst.msk [vmem:[#allocation2 + $0x2a8] sm:$0xff] %vm1362, %v3743
  %3868 = vst.msk [vmem:[#allocation2 + $0x2b0] sm:$0xff] %vm1362, %v3744
  %3869 = vst.msk [vmem:[#allocation2 + $0x2b8] sm:$0xff] %vm1362, %v3745
  %3870 = vst.msk [vmem:[#allocation2 + $0x2c0] sm:$0xff] %vm1362, %v3746
  %3871 = vst.msk [vmem:[#allocation2 + $0x2c8] sm:$0xff] %vm1362, %v3747
  %3872 = vst.msk [vmem:[#allocation2 + $0x2d0] sm:$0xff] %vm1362, %v3748
  %3873 = vst.msk [vmem:[#allocation2 + $0x2d8] sm:$0xff] %vm1362, %v3749
  %3874 = vst.msk [vmem:[#allocation2 + $0x2e0] sm:$0xff] %vm1362, %v3750
  %3875 = vst.msk [vmem:[#allocation2 + $0x2e8] sm:$0xff] %vm1362, %v3751
  %3876 = vst.msk [vmem:[#allocation2 + $0x2f0] sm:$0xff] %vm1362, %v3752
  %3877 = vst.msk [vmem:[#allocation2 + $0x2f8] sm:$0xff] %vm1362, %v3753
  %3878 = vst.msk [vmem:[#allocation2 + $0x300] sm:$0xff] %vm1362, %v3754
  %3879 = vst.msk [vmem:[#allocation2 + $0x308] sm:$0xff] %vm1362, %v3755
  %3880 = vst.msk [vmem:[#allocation2 + $0x310] sm:$0xff] %vm1362, %v3756
  %3881 = vst.msk [vmem:[#allocation2 + $0x318] sm:$0xff] %vm1362, %v3757
  %3882 = vst.msk [vmem:[#allocation2 + $0x320] sm:$0xff] %vm1362, %v3758
  %3883 = vst.msk [vmem:[#allocation2 + $0x328] sm:$0xff] %vm1362, %v3759
  %3884 = vst.msk [vmem:[#allocation2 + $0x330] sm:$0xff] %vm1362, %v3760
  %3885 = vst.msk [vmem:[#allocation2 + $0x338] sm:$0xff] %vm1362, %v3761
  %3886 = vst.msk [vmem:[#allocation2 + $0x340] sm:$0xff] %vm1362, %v3762
  %3887 = vst.msk [vmem:[#allocation2 + $0x348] sm:$0xff] %vm1362, %v3763
  %3888 = vst.msk [vmem:[#allocation2 + $0x350] sm:$0xff] %vm1362, %v3764
  %3889 = vst.msk [vmem:[#allocation2 + $0x358] sm:$0xff] %vm1362, %v3765
  %3890 = vst.msk [vmem:[#allocation2 + $0x360] sm:$0xff] %vm1362, %v3766
  %3891 = vst.msk [vmem:[#allocation2 + $0x368] sm:$0xff] %vm1362, %v3767
  %3892 = vst.msk [vmem:[#allocation2 + $0x370] sm:$0xff] %vm1362, %v3768
  %3893 = vst.msk [vmem:[#allocation2 + $0x378] sm:$0xff] %vm1362, %v3769
  %3894 = vst.msk [vmem:[#allocation2 + $0x380] sm:$0xff] %vm1362, %v3770
  %3895 = vst.msk [vmem:[#allocation2 + $0x388] sm:$0xff] %vm1362, %v3771
  %3896 = vst.msk [vmem:[#allocation2 + $0x390] sm:$0xff] %vm1362, %v3772
  %3897 = vst.msk [vmem:[#allocation2 + $0x398] sm:$0xff] %vm1362, %v3773
  %3898 = vst.msk [vmem:[#allocation2 + $0x3a0] sm:$0xff] %vm1362, %v3774
  %3899 = vst.msk [vmem:[#allocation2 + $0x3a8] sm:$0xff] %vm1362, %v3775
  %3900 = vst.msk [vmem:[#allocation2 + $0x3b0] sm:$0xff] %vm1362, %v3776
  %3901 = vst.msk [vmem:[#allocation2 + $0x3b8] sm:$0xff] %vm1362, %v3777
  %3902 = vst.msk [vmem:[#allocation2 + $0x3c0] sm:$0xff] %vm1362, %v3778
  %3903 = vst.msk [vmem:[#allocation2 + $0x3c8] sm:$0xff] %vm1362, %v3779
  %3904 = vst.msk [vmem:[#allocation2 + $0x3d0] sm:$0xff] %vm1362, %v3780
  %3905 = vst.msk [vmem:[#allocation2 + $0x3d8] sm:$0xff] %vm1362, %v3781
  %v3906 = vld [vmem:[#allocation2] ss:$2 sm:$0xff]
  %v3907 = vld [vmem:[%s1868] ss:$2 sm:$0xff]
  %v3908 = vld [vmem:[%s1870] ss:$2 sm:$0xff]
  %v3909 = vld [vmem:[%s1872] ss:$2 sm:$0xff]
  %v3910 = vmax.f32 %v3906, %v3908
  %v3911 = vmax.f32 %v3907, %v3909
  %s3912 = scalar_lea.vmem %s4, 256
  %3913 = vst.msk [vmem:[%s3912] sm:$0xff] %vm1362, %v3910
  %3914 = vst.msk [vmem:[%s3912 + $0x8] sm:$0xff] %vm1362, %v3911
  %v3915 = vld [vmem:[%s1878] ss:$2 sm:$0xff]
  %v3916 = vld [vmem:[%s1880] ss:$2 sm:$0xff]
  %v3917 = vld [vmem:[%s1882] ss:$2 sm:$0xff]
  %v3918 = vld [vmem:[%s1884] ss:$2 sm:$0xff]
  %v3919 = vmax.f32 %v3915, %v3917
  %v3920 = vmax.f32 %v3916, %v3918
  %3921 = vst.msk [vmem:[%s3912 + $0x10] sm:$0xff] %vm1362, %v3919
  %3922 = vst.msk [vmem:[%s3912 + $0x18] sm:$0xff] %vm1362, %v3920
  %v3923 = vld [vmem:[%s1890] ss:$2 sm:$0xff]
  %v3924 = vld [vmem:[%s1892] ss:$2 sm:$0xff]
  %v3925 = vld [vmem:[%s1894] ss:$2 sm:$0xff]
  %v3926 = vld [vmem:[%s1896] ss:$2 sm:$0xff]
  %v3927 = vmax.f32 %v3923, %v3925
  %v3928 = vmax.f32 %v3924, %v3926
  %3929 = vst.msk [vmem:[%s3912 + $0x20] sm:$0xff] %vm1362, %v3927
  %3930 = vst.msk [vmem:[%s3912 + $0x28] sm:$0xff] %vm1362, %v3928
  %v3931 = vld [vmem:[%s1902] ss:$2 sm:$0xff]
  %v3932 = vld [vmem:[%s1904] ss:$2 sm:$0xff]
  %v3933 = vld [vmem:[%s1906] ss:$2 sm:$0xff]
  %v3934 = vld [vmem:[%s1908] ss:$2 sm:$0xff]
  %v3935 = vmax.f32 %v3931, %v3933
  %v3936 = vmax.f32 %v3932, %v3934
  %3937 = vst.msk [vmem:[%s3912 + $0x30] sm:$0xff] %vm1362, %v3935
  %3938 = vst.msk [vmem:[%s3912 + $0x38] sm:$0xff] %vm1362, %v3936
  %v3939 = vld [vmem:[%s1914] ss:$2 sm:$0xff]
  %v3940 = vld [vmem:[%s1916] ss:$2 sm:$0xff]
  %v3941 = vld [vmem:[%s1918] ss:$2 sm:$0xff]
  %v3942 = vld [vmem:[%s1920] ss:$2 sm:$0xff]
  %v3943 = vmax.f32 %v3939, %v3941
  %v3944 = vmax.f32 %v3940, %v3942
  %3945 = vst.msk [vmem:[%s3912 + $0x40] sm:$0xff] %vm1362, %v3943
  %3946 = vst.msk [vmem:[%s3912 + $0x48] sm:$0xff] %vm1362, %v3944
  %v3947 = vld [vmem:[%s1926] ss:$2 sm:$0xff]
  %v3948 = vld [vmem:[%s1928] ss:$2 sm:$0xff]
  %v3949 = vld [vmem:[%s1930] ss:$2 sm:$0xff]
  %v3950 = vld [vmem:[%s1932] ss:$2 sm:$0xff]
  %v3951 = vmax.f32 %v3947, %v3949
  %v3952 = vmax.f32 %v3948, %v3950
  %3953 = vst.msk [vmem:[%s3912 + $0x50] sm:$0xff] %vm1362, %v3951
  %3954 = vst.msk [vmem:[%s3912 + $0x58] sm:$0xff] %vm1362, %v3952
  %v3955 = vld [vmem:[%s1938] ss:$2 sm:$0xff]
  %v3956 = vld [vmem:[%s1940] ss:$2 sm:$0xff]
  %v3957 = vld [vmem:[%s1942] ss:$2 sm:$0xff]
  %v3958 = vld [vmem:[%s1944] ss:$2 sm:$0xff]
  %v3959 = vmax.f32 %v3955, %v3957
  %v3960 = vmax.f32 %v3956, %v3958
  %3961 = vst.msk [vmem:[%s3912 + $0x60] sm:$0xff] %vm1362, %v3959
  %3962 = vst.msk [vmem:[%s3912 + $0x68] sm:$0xff] %vm1362, %v3960
  %v3963 = vld [vmem:[%s1950] ss:$2 sm:$0xff]
  %v3964 = vld [vmem:[%s1952] ss:$2 sm:$0xff]
  %v3965 = vld [vmem:[%s1954] ss:$2 sm:$0xff]
  %v3966 = vld [vmem:[%s1956] ss:$2 sm:$0xff]
  %v3967 = vmax.f32 %v3963, %v3965
  %v3968 = vmax.f32 %v3964, %v3966
  %3969 = vst.msk [vmem:[%s3912 + $0x70] sm:$0xff] %vm1362, %v3967
  %3970 = vst.msk [vmem:[%s3912 + $0x78] sm:$0xff] %vm1362, %v3968
  %v3971 = vld [vmem:[%s1962] ss:$2 sm:$0xff]
  %v3972 = vld [vmem:[%s1964] ss:$2 sm:$0xff]
  %v3973 = vld [vmem:[%s1966] ss:$2 sm:$0xff]
  %v3974 = vld [vmem:[%s1968] ss:$2 sm:$0xff]
  %v3975 = vmax.f32 %v3971, %v3973
  %v3976 = vmax.f32 %v3972, %v3974
  %3977 = vst.msk [vmem:[%s3912 + $0x80] sm:$0xff] %vm1362, %v3975
  %3978 = vst.msk [vmem:[%s3912 + $0x88] sm:$0xff] %vm1362, %v3976
  %v3979 = vld [vmem:[%s1974] ss:$2 sm:$0xff]
  %v3980 = vld [vmem:[%s1976] ss:$2 sm:$0xff]
  %v3981 = vld [vmem:[%s1978] ss:$2 sm:$0xff]
  %v3982 = vld [vmem:[%s1980] ss:$2 sm:$0xff]
  %v3983 = vmax.f32 %v3979, %v3981
  %v3984 = vmax.f32 %v3980, %v3982
  %3985 = vst.msk [vmem:[%s3912 + $0x90] sm:$0xff] %vm1362, %v3983
  %3986 = vst.msk [vmem:[%s3912 + $0x98] sm:$0xff] %vm1362, %v3984
  %v3987 = vld [vmem:[%s1986] ss:$2 sm:$0xff]
  %v3988 = vld [vmem:[%s1988] ss:$2 sm:$0xff]
  %v3989 = vld [vmem:[%s1990] ss:$2 sm:$0xff]
  %v3990 = vld [vmem:[%s1992] ss:$2 sm:$0xff]
  %v3991 = vmax.f32 %v3987, %v3989
  %v3992 = vmax.f32 %v3988, %v3990
  %3993 = vst.msk [vmem:[%s3912 + $0xa0] sm:$0xff] %vm1362, %v3991
  %3994 = vst.msk [vmem:[%s3912 + $0xa8] sm:$0xff] %vm1362, %v3992
  %v3995 = vld [vmem:[%s1998] ss:$2 sm:$0xff]
  %v3996 = vld [vmem:[%s2000] ss:$2 sm:$0xff]
  %v3997 = vld [vmem:[%s2002] ss:$2 sm:$0xff]
  %v3998 = vld [vmem:[%s2004] ss:$2 sm:$0xff]
  %v3999 = vmax.f32 %v3995, %v3997
  %v4000 = vmax.f32 %v3996, %v3998
  %4001 = vst.msk [vmem:[%s3912 + $0xb0] sm:$0xff] %vm1362, %v3999
  %4002 = vst.msk [vmem:[%s3912 + $0xb8] sm:$0xff] %vm1362, %v4000
  %v4003 = vld [vmem:[%s2010] ss:$2 sm:$0xff]
  %v4004 = vld [vmem:[%s2012] ss:$2 sm:$0xff]
  %v4005 = vld [vmem:[%s2014] ss:$2 sm:$0xff]
  %v4006 = vld [vmem:[%s2016] ss:$2 sm:$0xff]
  %v4007 = vmax.f32 %v4003, %v4005
  %v4008 = vmax.f32 %v4004, %v4006
  %4009 = vst.msk [vmem:[%s3912 + $0xc0] sm:$0xff] %vm1362, %v4007
  %4010 = vst.msk [vmem:[%s3912 + $0xc8] sm:$0xff] %vm1362, %v4008
  %v4011 = vld [vmem:[%s2022] ss:$2 sm:$0xff]
  %v4012 = vld [vmem:[%s2024] ss:$2 sm:$0xff]
  %v4013 = vld [vmem:[%s2026] ss:$2 sm:$0xff]
  %v4014 = vld [vmem:[%s2028] ss:$2 sm:$0xff]
  %v4015 = vmax.f32 %v4011, %v4013
  %v4016 = vmax.f32 %v4012, %v4014
  %4017 = vst.msk [vmem:[%s3912 + $0xd0] sm:$0xff] %vm1362, %v4015
  %4018 = vst.msk [vmem:[%s3912 + $0xd8] sm:$0xff] %vm1362, %v4016
  %v4019 = vld [vmem:[%s2034] ss:$2 sm:$0xff]
  %v4020 = vld [vmem:[%s2036] ss:$2 sm:$0xff]
  %v4021 = vld [vmem:[%s2038] ss:$2 sm:$0xff]
  %v4022 = vld [vmem:[%s2040] ss:$2 sm:$0xff]
  %v4023 = vmax.f32 %v4019, %v4021
  %v4024 = vmax.f32 %v4020, %v4022
  %4025 = vst.msk [vmem:[%s3912 + $0xe0] sm:$0xff] %vm1362, %v4023
  %4026 = vst.msk [vmem:[%s3912 + $0xe8] sm:$0xff] %vm1362, %v4024
  %v4027 = vld [vmem:[%s2046] ss:$2 sm:$0xff]
  %v4028 = vld [vmem:[%s2048] ss:$2 sm:$0xff]
  %v4029 = vld [vmem:[%s2050] ss:$2 sm:$0xff]
  %v4030 = vld [vmem:[%s2052] ss:$2 sm:$0xff]
  %v4031 = vmax.f32 %v4027, %v4029
  %v4032 = vmax.f32 %v4028, %v4030
  %4033 = vst.msk [vmem:[%s3912 + $0xf0] sm:$0xff] %vm1362, %v4031
  %4034 = vst.msk [vmem:[%s3912 + $0xf8] sm:$0xff] %vm1362, %v4032
  // Predicated region
  $region18: #{tpu_custom_call.1} parent=0 // pred_check
    _
  $region19: #{tpu_custom_call.1} parent=0 // pred_check_branch
    %4036 = sbr.rel (0) target = $region21
  $region20: #{tpu_custom_call.1} parent=0 // pred_region
    _
  $region21: #{tpu_custom_call.1} parent=0 // pred_fallthru
    _
  // Predicated region
  $region22: #{tpu_custom_call.1} parent=0 // pred_check
    _
  $region23: #{tpu_custom_call.1} parent=0 // pred_check_branch
    %4038 = sbr.rel (0) target = $region25
  $region24: #{tpu_custom_call.1} parent=0 // pred_region
    _
  $region25: #{tpu_custom_call.1} parent=0 // pred_fallthru
    _

</llo_original>
